<compile_context>
chip_gen: v7x
topology: tpu7x:2x2x1
jax: 0.10.0
libtpu: 0.0.40
codegen_flags: <defaults>
</compile_context>

<pallas_src>
import functools

import numpy as np
import jax
import jax.numpy as jnp
from jax import lax
from jax.experimental import pallas as pl
from jax.experimental.pallas import tpu as pltpu

BN_EPS = 1e-5
NORM_EPS = 1e-24      # only guards all-zero (padded) channels; exact for real data
C_REAL = 10           # real conv output channels
CPAD = 128            # lane-dense padded channel count for all conv outputs
PADROWS = 8           # zero rows added above/below the rows tile (needs >= W+1)

_VMEM = pl.BlockSpec(memory_space=pltpu.MemorySpace.VMEM)


# ----------------------------------------------------------------------------
# In-kernel helpers
# ----------------------------------------------------------------------------
def _bn_rows(acc, aux_ref):
    """Bias + BatchNorm2d (training-mode batch stats) over the rows axis.

    acc     : (rows, CPAD) f32 conv accumulator
    aux_ref : (3, 1, CPAD) f32 = [bias, gamma, beta] (zero-padded past C_REAL)
    """
    acc = acc + aux_ref[0]
    mean = jnp.mean(acc, axis=0, keepdims=True)
    var = jnp.maximum(jnp.mean(acc * acc, axis=0, keepdims=True) - mean * mean, 0.0)
    return (acc - mean) * lax.rsqrt(var + BN_EPS) * aux_ref[1] + aux_ref[2]


def _conv3x3_bn(x_ref, m_ref, w_ref, aux_ref, n_rows, w_dim):
    """3x3 pad-1 conv + BN on a rows-layout tile, taps as shifted sublane reads.

    x_ref : (PADROWS + N + PADROWS, Cin) f32, rows = (b, h, w), zero row padding
    m_ref : (9, N, 1) f32 per-tap boundary-validity masks
    w_ref : (9*Cin, CPAD) bf16, taps packed along K
    """
    taps = []
    t = 0
    for dy in (-1, 0, 1):
        for dx in (-1, 0, 1):
            shift = dy * w_dim + dx
            v = x_ref[pl.ds(PADROWS + shift, n_rows), :]     # shifted rows read
            taps.append((v * m_ref[t]).astype(jnp.bfloat16)) # mask OOB taps, cast for MXU
            t += 1
    stack = jnp.concatenate(taps, axis=1)                    # (N, 9*Cin) bf16
    acc = jnp.dot(stack, w_ref[...], preferred_element_type=jnp.float32)
    return _bn_rows(acc, aux_ref)                            # (N, CPAD) f32


def _conv2x2s2_bn(src_ref, w_ref, aux_ref, B, H, W):
    """2x2 stride-2 conv + BN; taps gathered with strided sublane reads.

    src_ref : (B*H*W, CPAD) f32 rows-layout ref (previous stage, already in VMEM)
    w_ref   : (4*CPAD, CPAD) bf16, taps packed along K
    """
    Ho, Wo = H // 2, W // 2
    taps = []
    for ky in range(2):
        for kx in range(2):
            rows = []
            for b in range(B):
                for ho in range(Ho):
                    start = b * H * W + (2 * ho + ky) * W + kx
                    if Wo > 1:
                        rows.append(src_ref[pl.ds(start, Wo, stride=2), :])
                    else:
                        rows.append(src_ref[pl.ds(start, 1), :])
            tap = rows[0] if len(rows) == 1 else jnp.concatenate(rows, axis=0)
            taps.append(tap.astype(jnp.bfloat16))
    stack = jnp.concatenate(taps, axis=1)                    # (B*Ho*Wo, 4*CPAD) bf16
    acc = jnp.dot(stack, w_ref[...], preferred_element_type=jnp.float32)
    return _bn_rows(acc, aux_ref)                            # (B*Ho*Wo, CPAD) f32


def _cim(tb):
    """CIM Gram pair for one batch element; tb = (spatial, CPAD) rows tile.

    l2norm is over the spatial (rows/sublane) axis per channel; both Grams are
    MXU dot_generals contracting the rows axis.  Padded channels stay exact for
    the real 10x10 block (garbage only lands in padded rows/cols, sliced away
    outside).
    """
    tn = tb * lax.rsqrt(jnp.maximum(jnp.sum(tb * tb, axis=0, keepdims=True), NORM_EPS))
    xg = lax.dot_general(tn, tn, (((0,), (0,)), ((), ())),
                         preferred_element_type=jnp.float32)          # (CPAD, CPAD)
    wl = 1.0 - xg
    lt = jnp.dot(tn, wl, preferred_element_type=jnp.float32)          # (spatial, CPAD)
    ln = lt * lax.rsqrt(jnp.maximum(jnp.sum(lt * lt, axis=0, keepdims=True), NORM_EPS))
    xl = lax.dot_general(ln, ln, (((0,), (0,)), ((), ())),
                         preferred_element_type=jnp.float32)          # (CPAD, CPAD)
    return xg, xl


# ----------------------------------------------------------------------------
# Fused core kernel: conv(3x3)+BN -> [conv_1(2x2,s2)+BN -> conv_2(2x2,s2)+BN]
#                    and conv2(3x3)+BN -> CIM, all VMEM-resident, one call.
# ----------------------------------------------------------------------------
def _fused_core_kernel(B, H, W,
                       x1_ref, x2_ref, m_ref,
                       wc_ref, aux0_ref, w1_ref, aux1_ref, w2_ref, aux2_ref,
                       wc2_ref, aux3_ref,
                       x1_out_ref, copy_out_ref, xg_ref, xl_ref, z_ref):
    N = B * H * W
    S = H * W

    # branch 1: x1 = conv(x1f)+BN; copy_x = conv_2(conv_1(x1)) with BN each stage
    y1 = _conv3x3_bn(x1_ref, m_ref, wc_ref, aux0_ref, N, W)           # (N, CPAD)
    x1_out_ref[...] = y1
    z_ref[...] = _conv2x2s2_bn(x1_out_ref, w1_ref, aux1_ref, B, H, W)
    copy_out_ref[...] = _conv2x2s2_bn(z_ref, w2_ref, aux2_ref, B, H // 2, W // 2)

    # branch 2: x2 = conv2(x2f)+BN, then per-batch CIM Grams on the MXU
    y2 = _conv3x3_bn(x2_ref, m_ref, wc2_ref, aux3_ref, N, W)          # (N, CPAD)
    for b in range(B):   # B is tiny; at scale this becomes a "parallel" grid axis
        xg, xl = _cim(y2[b * S:(b + 1) * S, :])
        xg_ref[b] = xg
        xl_ref[b] = xl


def fused_core(x1p, x2p, masks, p, B, H, W):
    N = B * H * W
    kernel = functools.partial(_fused_core_kernel, B, H, W)
    out_shape = (
        jax.ShapeDtypeStruct((N, CPAD), jnp.float32),          # x1 rows (padded ch)
        jax.ShapeDtypeStruct((B, CPAD), jnp.float32),          # copy_x (padded ch)
        jax.ShapeDtypeStruct((B, CPAD, CPAD), jnp.float32),    # x_global (lane-dense)
        jax.ShapeDtypeStruct((B, CPAD, CPAD), jnp.float32),    # x_local  (lane-dense)
    )
    # Total VMEM footprint here is < 2 MiB, far under default scoped limits; at
    # real N set pltpu.CompilerParams(vmem_limit_bytes=...) and block the rows dim.
    return pl.pallas_call(
        kernel,
        out_shape=out_shape,
        in_specs=[_VMEM] * 11,
        out_specs=(_VMEM,) * 4,
        scratch_shapes=[pltpu.VMEM((B * (H // 2) * (W // 2), CPAD), jnp.float32)],
    )(x1p, x2p, masks,
      p["wc"], p["aux0"], p["w1"], p["aux1"], p["w2"], p["aux2"],
      p["wc2"], p["aux3"])


# ----------------------------------------------------------------------------
# Head kernel: l2norm1 -> fc1 (128pad->128) -> fc2 (128->5) -> softmax(dim=1)
# ----------------------------------------------------------------------------
def _head_kernel(fea_ref, w1_ref, b1_ref, w2_ref, b2_ref, out_ref):
    fea = fea_ref[...]
    fea = fea * lax.rsqrt(jnp.maximum(jnp.sum(fea * fea, axis=1, keepdims=True),
                                      NORM_EPS))
    h = jnp.dot(fea.astype(jnp.bfloat16), w1_ref[...],
                preferred_element_type=jnp.float32) + b1_ref[...]
    o = jnp.dot(h.astype(jnp.bfloat16), w2_ref[...],
                preferred_element_type=jnp.float32) + b2_ref[...]
    o = o - jnp.max(o, axis=1, keepdims=True)
    e = jnp.exp(o)
    out_ref[...] = e * pl.reciprocal(jnp.sum(e, axis=1, keepdims=True), approx=True)


def head(fea, w1, b1, w2, b2):
    b = fea.shape[0]
    nout = w2.shape[1]
    return pl.pallas_call(
        _head_kernel,
        out_shape=jax.ShapeDtypeStruct((b, nout), jnp.float32),
        in_specs=[_VMEM] * 5,
        out_specs=_VMEM,
    )(fea, w1, b1, w2, b2)


# ----------------------------------------------------------------------------
# Trace-time constants: O(N) per-tap boundary masks (NOT O(N^2) selectors).
# ----------------------------------------------------------------------------
def _tap_masks(B, H, W):
    N = B * H * W
    m = np.zeros((9, N, 1), np.float32)
    t = 0
    for dy in (-1, 0, 1):
        for dx in (-1, 0, 1):
            for r in range(N):
                h = (r // W) % H
                w = r % W
                if 0 <= h + dy < H and 0 <= w + dx < W:
                    m[t, r, 0] = 1.0
            t += 1
    return jnp.asarray(m)


# ----------------------------------------------------------------------------
# Full forward pass (mirrors Net.forward)
# ----------------------------------------------------------------------------
@jax.jit
def net_forward(x, p):
    B, _, H, W = x.shape
    assert H == 4 and W == 4, "copy_x.view(B, C) in the reference implies 4x4 maps"
    assert W + 1 <= PADROWS
    N = B * H * W
    masks = _tap_masks(B, H, W)

    # TODO(synk): `self.features` is an external backbone passed to __init__;
    # stubbed as two deterministic 1x1 channel projections to 64-ch maps (plain JAX).
    x1_rows = jnp.einsum("bchw,oc->bhwo", x, p["feat_w1"]).reshape(N, -1)
    x2_rows = jnp.einsum("bchw,oc->bhwo", x, p["feat_w2"]).reshape(N, -1)
    pad = ((PADROWS, PADROWS), (0, 0))
    x1p = jnp.pad(x1_rows, pad)
    x2p = jnp.pad(x2_rows, pad)

    x1_pad, copy_pad, xg_pad, xl_pad = fused_core(x1p, x2p, masks, p, B, H, W)

    x1 = jnp.transpose(x1_pad[:, :C_REAL].reshape(B, H, W, C_REAL), (0, 3, 1, 2))
    copy_x = copy_pad[:, :C_REAL]
    x_global = xg_pad[:, :C_REAL, :C_REAL]
    x_local = xl_pad[:, :C_REAL, :C_REAL]

    # TODO(synk): torch.symeig has no clean Pallas equivalent (iterative eigensolver);
    # done with jnp.linalg.eigh in plain JAX (ascending eigenvalues, column vectors).
    fea1, v1 = jnp.linalg.eigh(x_global)
    fea2, v2 = jnp.linalg.eigh(x_local)        # computed but unused, as in the reference
    del fea2, v2

    t1 = jnp.concatenate([fea1[:, None, :], v1], axis=1).reshape(B, -1)   # (B, 110)
    t1 = jnp.pad(t1, ((0, 0), (0, CPAD - t1.shape[1])))                   # K -> 128
    res = head(t1, p["fc1_w"], p["fc1_b"], p["fc2_w"], p["fc2_b"])
    return x1, res, copy_x


# ----------------------------------------------------------------------------
# Deterministic parameter construction: PyTorch-shaped weights, pre-packed once
# into kernel-ready layouts (taps stacked along K, bf16, channels padded to 128).
# ----------------------------------------------------------------------------
def make_params(key, in_ch=4):
    ks = jax.random.split(key, 14)
    n = jax.random.normal
    C = C_REAL
    gamma = jnp.ones((C,), jnp.float32)
    beta = jnp.zeros((C,), jnp.float32)

    def pad_last(v):
        return jnp.pad(v, [(0, 0)] * (v.ndim - 1) + [(0, CPAD - v.shape[-1])])

    def pack3x3(w):
        # torch (Cout, Cin, 3, 3) -> (9*Cin, CPAD) bf16, taps packed along K
        cout, cin = w.shape[0], w.shape[1]
        wk = jnp.transpose(w, (2, 3, 1, 0)).reshape(9 * cin, cout)
        return jnp.pad(wk, ((0, 0), (0, CPAD - cout))).astype(jnp.bfloat16)

    def pack2x2(w):
        # torch (Cout, Cin, 2, 2) -> (4*CPAD, CPAD) bf16 (Cin/Cout zero-padded per tap)
        cout, cin = w.shape[0], w.shape[1]
        wk = jnp.transpose(w, (2, 3, 1, 0))
        wk = jnp.pad(wk, ((0, 0), (0, 0), (0, CPAD - cin), (0, CPAD - cout)))
        return wk.reshape(4 * CPAD, CPAD).astype(jnp.bfloat16)

    def aux(bias):   # [bias, gamma, beta] -> (3, 1, CPAD) f32
        return jnp.stack([pad_last(bias), pad_last(gamma), pad_last(beta)])[:, None, :]

    conv_w = n(ks[2], (C, 64, 3, 3), jnp.float32) * 0.05
    conv_b = n(ks[3], (C,), jnp.float32) * 0.05
    conv1_w = n(ks[4], (C, C, 2, 2), jnp.float32) * 0.1
    conv1_b = n(ks[5], (C,), jnp.float32) * 0.1
    conv2s_w = n(ks[6], (C, C, 2, 2), jnp.float32) * 0.1
    conv2s_b = n(ks[7], (C,), jnp.float32) * 0.1
    conv2_w = n(ks[8], (C, 64, 3, 3), jnp.float32) * 0.05
    conv2_b = n(ks[9], (C,), jnp.float32) * 0.05
    fc1_w = n(ks[10], (128, 110), jnp.float32) * 0.05
    fc1_b = n(ks[11], (128,), jnp.float32) * 0.05
    fc2_w = n(ks[12], (5, 128), jnp.float32) * 0.05
    fc2_b = n(ks[13], (5,), jnp.float32) * 0.05

    return {
        "feat_w1": n(ks[0], (64, in_ch), jnp.float32) * 0.2,
        "feat_w2": n(ks[1], (64, in_ch), jnp.float32) * 0.2,
        # conv taps packed along K, bf16, Cout padded to 128
        "wc": pack3x3(conv_w),   "aux0": aux(conv_b),
        "w1": pack2x2(conv1_w),  "aux1": aux(conv1_b),
        "w2": pack2x2(conv2s_w), "aux2": aux(conv2s_b),
        "wc2": pack3x3(conv2_w), "aux3": aux(conv2_b),
        # head: fc1 pre-transposed with K padded 110->128, fc2 pre-transposed; bf16
        "fc1_w": jnp.pad(fc1_w.T, ((0, CPAD - 110), (0, 0))).astype(jnp.bfloat16),
        "fc1_b": fc1_b[None, :],
        "fc2_w": fc2_w.T.astype(jnp.bfloat16),
        "fc2_b": fc2_b[None, :],
    }


if __name__ == "__main__":
    root = jax.random.PRNGKey(0)
    k_in, k_par = jax.random.split(root)
    # Input (NCHW).  Spatial must be 4x4 so conv_1/conv_2 (2x2 stride-2, twice)
    # reduce it to 1x1 for copy_x.view(B, C), as the reference forward implies.
    x = jax.random.normal(k_in, (2, 4, 4, 4), jnp.float32)
    params = make_params(k_par, in_ch=4)

    x1, res, copy_x = net_forward(x, params)
    jax.block_until_ready((x1, res, copy_x))

    assert x1.shape == (2, 10, 4, 4)
    assert res.shape == (2, 5)
    assert copy_x.shape == (2, 10)
    assert bool(jnp.all(jnp.isfinite(x1)))
    assert bool(jnp.all(jnp.isfinite(res)))
    assert bool(jnp.all(jnp.isfinite(copy_x)))
    print("KERNEL_OK")
</pallas_src>

<mosaic_0001>
module attributes {stable_mosaic.version = 11 : i64} {
  func.func @_fused_core_kernel(%arg0: memref<48x64xf32, #tpu.memory_space<vmem>>, %arg1: memref<48x64xf32, #tpu.memory_space<vmem>>, %arg2: memref<9x32x1xf32, #tpu.memory_space<vmem>>, %arg3: memref<576x128xbf16, #tpu.memory_space<vmem>>, %arg4: memref<3x1x128xf32, #tpu.memory_space<vmem>>, %arg5: memref<512x128xbf16, #tpu.memory_space<vmem>>, %arg6: memref<3x1x128xf32, #tpu.memory_space<vmem>>, %arg7: memref<512x128xbf16, #tpu.memory_space<vmem>>, %arg8: memref<3x1x128xf32, #tpu.memory_space<vmem>>, %arg9: memref<576x128xbf16, #tpu.memory_space<vmem>>, %arg10: memref<3x1x128xf32, #tpu.memory_space<vmem>>, %arg11: memref<32x128xf32, #tpu.memory_space<vmem>>, %arg12: memref<2x128xf32, #tpu.memory_space<vmem>>, %arg13: memref<2x128x128xf32, #tpu.memory_space<vmem>>, %arg14: memref<2x128x128xf32, #tpu.memory_space<vmem>>, %arg15: memref<8x128xf32, #tpu.memory_space<vmem>>) attributes {dimension_semantics = [], scalar_prefetch = 0 : i64, scratch_operands = 1 : i64, tpu.core_type = #tpu.core_type<tc>} {
    %c3 = arith.constant 3 : index
    %c0 = arith.constant 0 : index
    %0 = vector.load %arg0[%c3, %c0] : memref<48x64xf32, #tpu.memory_space<vmem>>, vector<32x64xf32>
    %c0_0 = arith.constant 0 : index
    %c0_1 = arith.constant 0 : index
    %c0_2 = arith.constant 0 : index
    %1 = vector.load %arg2[%c0_0, %c0_1, %c0_2] : memref<9x32x1xf32, #tpu.memory_space<vmem>>, vector<1x32x1xf32>
    %2 = vector.shape_cast %1 : vector<1x32x1xf32> to vector<32x1xf32>
    %3 = vector.broadcast %2 : vector<32x1xf32> to vector<32x64xf32>
    %4 = arith.mulf %0, %3 : vector<32x64xf32>
    %5 = arith.truncf %4 : vector<32x64xf32> to vector<32x64xbf16>
    %c4 = arith.constant 4 : index
    %c0_3 = arith.constant 0 : index
    %6 = vector.load %arg0[%c4, %c0_3] : memref<48x64xf32, #tpu.memory_space<vmem>>, vector<32x64xf32>
    %c1 = arith.constant 1 : index
    %c0_4 = arith.constant 0 : index
    %c0_5 = arith.constant 0 : index
    %7 = vector.load %arg2[%c1, %c0_4, %c0_5] : memref<9x32x1xf32, #tpu.memory_space<vmem>>, vector<1x32x1xf32>
    %8 = vector.shape_cast %7 : vector<1x32x1xf32> to vector<32x1xf32>
    %9 = vector.broadcast %8 : vector<32x1xf32> to vector<32x64xf32>
    %10 = arith.mulf %6, %9 : vector<32x64xf32>
    %11 = arith.truncf %10 : vector<32x64xf32> to vector<32x64xbf16>
    %c5 = arith.constant 5 : index
    %c0_6 = arith.constant 0 : index
    %12 = vector.load %arg0[%c5, %c0_6] : memref<48x64xf32, #tpu.memory_space<vmem>>, vector<32x64xf32>
    %c2 = arith.constant 2 : index
    %c0_7 = arith.constant 0 : index
    %c0_8 = arith.constant 0 : index
    %13 = vector.load %arg2[%c2, %c0_7, %c0_8] : memref<9x32x1xf32, #tpu.memory_space<vmem>>, vector<1x32x1xf32>
    %14 = vector.shape_cast %13 : vector<1x32x1xf32> to vector<32x1xf32>
    %15 = vector.broadcast %14 : vector<32x1xf32> to vector<32x64xf32>
    %16 = arith.mulf %12, %15 : vector<32x64xf32>
    %17 = arith.truncf %16 : vector<32x64xf32> to vector<32x64xbf16>
    %c7 = arith.constant 7 : index
    %c0_9 = arith.constant 0 : index
    %18 = vector.load %arg0[%c7, %c0_9] : memref<48x64xf32, #tpu.memory_space<vmem>>, vector<32x64xf32>
    %c3_10 = arith.constant 3 : index
    %c0_11 = arith.constant 0 : index
    %c0_12 = arith.constant 0 : index
    %19 = vector.load %arg2[%c3_10, %c0_11, %c0_12] : memref<9x32x1xf32, #tpu.memory_space<vmem>>, vector<1x32x1xf32>
    %20 = vector.shape_cast %19 : vector<1x32x1xf32> to vector<32x1xf32>
    %21 = vector.broadcast %20 : vector<32x1xf32> to vector<32x64xf32>
    %22 = arith.mulf %18, %21 : vector<32x64xf32>
    %23 = arith.truncf %22 : vector<32x64xf32> to vector<32x64xbf16>
    %c8 = arith.constant 8 : index
    %c0_13 = arith.constant 0 : index
    %24 = vector.load %arg0[%c8, %c0_13] : memref<48x64xf32, #tpu.memory_space<vmem>>, vector<32x64xf32>
    %c4_14 = arith.constant 4 : index
    %c0_15 = arith.constant 0 : index
    %c0_16 = arith.constant 0 : index
    %25 = vector.load %arg2[%c4_14, %c0_15, %c0_16] : memref<9x32x1xf32, #tpu.memory_space<vmem>>, vector<1x32x1xf32>
    %26 = vector.shape_cast %25 : vector<1x32x1xf32> to vector<32x1xf32>
    %27 = vector.broadcast %26 : vector<32x1xf32> to vector<32x64xf32>
    %28 = arith.mulf %24, %27 : vector<32x64xf32>
    %29 = arith.truncf %28 : vector<32x64xf32> to vector<32x64xbf16>
    %c9 = arith.constant 9 : index
    %c0_17 = arith.constant 0 : index
    %30 = vector.load %arg0[%c9, %c0_17] : memref<48x64xf32, #tpu.memory_space<vmem>>, vector<32x64xf32>
    %c5_18 = arith.constant 5 : index
    %c0_19 = arith.constant 0 : index
    %c0_20 = arith.constant 0 : index
    %31 = vector.load %arg2[%c5_18, %c0_19, %c0_20] : memref<9x32x1xf32, #tpu.memory_space<vmem>>, vector<1x32x1xf32>
    %32 = vector.shape_cast %31 : vector<1x32x1xf32> to vector<32x1xf32>
    %33 = vector.broadcast %32 : vector<32x1xf32> to vector<32x64xf32>
    %34 = arith.mulf %30, %33 : vector<32x64xf32>
    %35 = arith.truncf %34 : vector<32x64xf32> to vector<32x64xbf16>
    %c11 = arith.constant 11 : index
    %c0_21 = arith.constant 0 : index
    %36 = vector.load %arg0[%c11, %c0_21] : memref<48x64xf32, #tpu.memory_space<vmem>>, vector<32x64xf32>
    %c6 = arith.constant 6 : index
    %c0_22 = arith.constant 0 : index
    %c0_23 = arith.constant 0 : index
    %37 = vector.load %arg2[%c6, %c0_22, %c0_23] : memref<9x32x1xf32, #tpu.memory_space<vmem>>, vector<1x32x1xf32>
    %38 = vector.shape_cast %37 : vector<1x32x1xf32> to vector<32x1xf32>
    %39 = vector.broadcast %38 : vector<32x1xf32> to vector<32x64xf32>
    %40 = arith.mulf %36, %39 : vector<32x64xf32>
    %41 = arith.truncf %40 : vector<32x64xf32> to vector<32x64xbf16>
    %c12 = arith.constant 12 : index
    %c0_24 = arith.constant 0 : index
    %42 = vector.load %arg0[%c12, %c0_24] : memref<48x64xf32, #tpu.memory_space<vmem>>, vector<32x64xf32>
    %c7_25 = arith.constant 7 : index
    %c0_26 = arith.constant 0 : index
    %c0_27 = arith.constant 0 : index
    %43 = vector.load %arg2[%c7_25, %c0_26, %c0_27] : memref<9x32x1xf32, #tpu.memory_space<vmem>>, vector<1x32x1xf32>
    %44 = vector.shape_cast %43 : vector<1x32x1xf32> to vector<32x1xf32>
    %45 = vector.broadcast %44 : vector<32x1xf32> to vector<32x64xf32>
    %46 = arith.mulf %42, %45 : vector<32x64xf32>
    %47 = arith.truncf %46 : vector<32x64xf32> to vector<32x64xbf16>
    %c13 = arith.constant 13 : index
    %c0_28 = arith.constant 0 : index
    %48 = vector.load %arg0[%c13, %c0_28] : memref<48x64xf32, #tpu.memory_space<vmem>>, vector<32x64xf32>
    %c8_29 = arith.constant 8 : index
    %c0_30 = arith.constant 0 : index
    %c0_31 = arith.constant 0 : index
    %49 = vector.load %arg2[%c8_29, %c0_30, %c0_31] : memref<9x32x1xf32, #tpu.memory_space<vmem>>, vector<1x32x1xf32>
    %50 = vector.shape_cast %49 : vector<1x32x1xf32> to vector<32x1xf32>
    %51 = vector.broadcast %50 : vector<32x1xf32> to vector<32x64xf32>
    %52 = arith.mulf %48, %51 : vector<32x64xf32>
    %53 = arith.truncf %52 : vector<32x64xf32> to vector<32x64xbf16>
    %54 = tpu.concatenate %5, %11, %17, %23, %29, %35, %41, %47, %53 in 1 : vector<32x64xbf16>, vector<32x64xbf16>, vector<32x64xbf16>, vector<32x64xbf16>, vector<32x64xbf16>, vector<32x64xbf16>, vector<32x64xbf16>, vector<32x64xbf16>, vector<32x64xbf16> -> vector<32x576xbf16>
    %c0_32 = arith.constant 0 : index
    %c0_33 = arith.constant 0 : index
    %55 = vector.load %arg3[%c0_32, %c0_33] : memref<576x128xbf16, #tpu.memory_space<vmem>>, vector<576x128xbf16>
    %cst = arith.constant dense<0.000000e+00> : vector<32x128xf32>
    %56 = tpu.matmul %54, %55, %cst {dimension_numbers = #tpu.dot_dimension_numbers<[1], [0], [0], [1], [0, 0, 1, 1], [], []>} : vector<32x576xbf16>, vector<576x128xbf16>, vector<32x128xf32> -> vector<32x128xf32>
    %c0_34 = arith.constant 0 : index
    %c0_35 = arith.constant 0 : index
    %c0_36 = arith.constant 0 : index
    %57 = vector.load %arg4[%c0_34, %c0_35, %c0_36] : memref<3x1x128xf32, #tpu.memory_space<vmem>>, vector<1x1x128xf32>
    %58 = vector.shape_cast %57 : vector<1x1x128xf32> to vector<1x128xf32>
    %59 = vector.broadcast %58 : vector<1x128xf32> to vector<32x128xf32>
    %60 = arith.addf %56, %59 : vector<32x128xf32>
    %cst_37 = arith.constant dense<0.000000e+00> : vector<128xf32>
    %61 = vector.multi_reduction <add>, %60, %cst_37 [0] : vector<32x128xf32> to vector<128xf32>
    %62 = vector.shape_cast %61 : vector<128xf32> to vector<1x128xf32>
    %cst_38 = arith.constant 3.200000e+01 : f32
    %63 = vector.broadcast %cst_38 : f32 to vector<1x128xf32>
    %64 = arith.divf %62, %63 : vector<1x128xf32>
    %65 = arith.mulf %60, %60 : vector<32x128xf32>
    %cst_39 = arith.constant dense<0.000000e+00> : vector<128xf32>
    %66 = vector.multi_reduction <add>, %65, %cst_39 [0] : vector<32x128xf32> to vector<128xf32>
    %67 = vector.shape_cast %66 : vector<128xf32> to vector<1x128xf32>
    %cst_40 = arith.constant 3.200000e+01 : f32
    %68 = vector.broadcast %cst_40 : f32 to vector<1x128xf32>
    %69 = arith.divf %67, %68 : vector<1x128xf32>
    %70 = arith.mulf %64, %64 : vector<1x128xf32>
    %71 = arith.subf %69, %70 : vector<1x128xf32>
    %cst_41 = arith.constant 0.000000e+00 : f32
    %72 = vector.broadcast %cst_41 : f32 to vector<1x128xf32>
    %73 = arith.maximumf %71, %72 : vector<1x128xf32>
    %74 = vector.broadcast %64 : vector<1x128xf32> to vector<32x128xf32>
    %75 = arith.subf %60, %74 : vector<32x128xf32>
    %cst_42 = arith.constant 9.99999974E-6 : f32
    %76 = vector.broadcast %cst_42 : f32 to vector<1x128xf32>
    %77 = arith.addf %73, %76 : vector<1x128xf32>
    %78 = math.rsqrt %77 : vector<1x128xf32>
    %79 = vector.broadcast %78 : vector<1x128xf32> to vector<32x128xf32>
    %80 = arith.mulf %75, %79 : vector<32x128xf32>
    %c1_43 = arith.constant 1 : index
    %c0_44 = arith.constant 0 : index
    %c0_45 = arith.constant 0 : index
    %81 = vector.load %arg4[%c1_43, %c0_44, %c0_45] : memref<3x1x128xf32, #tpu.memory_space<vmem>>, vector<1x1x128xf32>
    %82 = vector.shape_cast %81 : vector<1x1x128xf32> to vector<1x128xf32>
    %83 = vector.broadcast %82 : vector<1x128xf32> to vector<32x128xf32>
    %84 = arith.mulf %80, %83 : vector<32x128xf32>
    %c2_46 = arith.constant 2 : index
    %c0_47 = arith.constant 0 : index
    %c0_48 = arith.constant 0 : index
    %85 = vector.load %arg4[%c2_46, %c0_47, %c0_48] : memref<3x1x128xf32, #tpu.memory_space<vmem>>, vector<1x1x128xf32>
    %86 = vector.shape_cast %85 : vector<1x1x128xf32> to vector<1x128xf32>
    %87 = vector.broadcast %86 : vector<1x128xf32> to vector<32x128xf32>
    %88 = arith.addf %84, %87 : vector<32x128xf32>
    %c0_49 = arith.constant 0 : index
    %c0_50 = arith.constant 0 : index
    %89 = vector.load %arg11[%c0_49, %c0_50] : memref<32x128xf32, #tpu.memory_space<vmem>>, vector<32x128xf32>
    tpu.vector_store %arg11[%c0_49, %c0_50], %88 {strides = array<i32>} : memref<32x128xf32, #tpu.memory_space<vmem>>, vector<32x128xf32>,
    %c0_51 = arith.constant 0 : index
    %c0_52 = arith.constant 0 : index
    %90 = tpu.strided_load %arg11[%c0_51, %c0_52] {strides = array<i32: 2, 1>} : memref<32x128xf32, #tpu.memory_space<vmem>>, vector<2x128xf32>
    %c8_53 = arith.constant 8 : index
    %c0_54 = arith.constant 0 : index
    %91 = tpu.strided_load %arg11[%c8_53, %c0_54] {strides = array<i32: 2, 1>} : memref<32x128xf32, #tpu.memory_space<vmem>>, vector<2x128xf32>
    %c16 = arith.constant 16 : index
    %c0_55 = arith.constant 0 : index
    %92 = tpu.strided_load %arg11[%c16, %c0_55] {strides = array<i32: 2, 1>} : memref<32x128xf32, #tpu.memory_space<vmem>>, vector<2x128xf32>
    %c24 = arith.constant 24 : index
    %c0_56 = arith.constant 0 : index
    %93 = tpu.strided_load %arg11[%c24, %c0_56] {strides = array<i32: 2, 1>} : memref<32x128xf32, #tpu.memory_space<vmem>>, vector<2x128xf32>
    %94 = tpu.concatenate %90, %91, %92, %93 in 0 : vector<2x128xf32>, vector<2x128xf32>, vector<2x128xf32>, vector<2x128xf32> -> vector<8x128xf32>
    %95 = arith.truncf %94 : vector<8x128xf32> to vector<8x128xbf16>
    %c1_57 = arith.constant 1 : index
    %c0_58 = arith.constant 0 : index
    %96 = tpu.strided_load %arg11[%c1_57, %c0_58] {strides = array<i32: 2, 1>} : memref<32x128xf32, #tpu.memory_space<vmem>>, vector<2x128xf32>
    %c9_59 = arith.constant 9 : index
    %c0_60 = arith.constant 0 : index
    %97 = tpu.strided_load %arg11[%c9_59, %c0_60] {strides = array<i32: 2, 1>} : memref<32x128xf32, #tpu.memory_space<vmem>>, vector<2x128xf32>
    %c17 = arith.constant 17 : index
    %c0_61 = arith.constant 0 : index
    %98 = tpu.strided_load %arg11[%c17, %c0_61] {strides = array<i32: 2, 1>} : memref<32x128xf32, #tpu.memory_space<vmem>>, vector<2x128xf32>
    %c25 = arith.constant 25 : index
    %c0_62 = arith.constant 0 : index
    %99 = tpu.strided_load %arg11[%c25, %c0_62] {strides = array<i32: 2, 1>} : memref<32x128xf32, #tpu.memory_space<vmem>>, vector<2x128xf32>
    %100 = tpu.concatenate %96, %97, %98, %99 in 0 : vector<2x128xf32>, vector<2x128xf32>, vector<2x128xf32>, vector<2x128xf32> -> vector<8x128xf32>
    %101 = arith.truncf %100 : vector<8x128xf32> to vector<8x128xbf16>
    %c4_63 = arith.constant 4 : index
    %c0_64 = arith.constant 0 : index
    %102 = tpu.strided_load %arg11[%c4_63, %c0_64] {strides = array<i32: 2, 1>} : memref<32x128xf32, #tpu.memory_space<vmem>>, vector<2x128xf32>
    %c12_65 = arith.constant 12 : index
    %c0_66 = arith.constant 0 : index
    %103 = tpu.strided_load %arg11[%c12_65, %c0_66] {strides = array<i32: 2, 1>} : memref<32x128xf32, #tpu.memory_space<vmem>>, vector<2x128xf32>
    %c20 = arith.constant 20 : index
    %c0_67 = arith.constant 0 : index
    %104 = tpu.strided_load %arg11[%c20, %c0_67] {strides = array<i32: 2, 1>} : memref<32x128xf32, #tpu.memory_space<vmem>>, vector<2x128xf32>
    %c28 = arith.constant 28 : index
    %c0_68 = arith.constant 0 : index
    %105 = tpu.strided_load %arg11[%c28, %c0_68] {strides = array<i32: 2, 1>} : memref<32x128xf32, #tpu.memory_space<vmem>>, vector<2x128xf32>
    %106 = tpu.concatenate %102, %103, %104, %105 in 0 : vector<2x128xf32>, vector<2x128xf32>, vector<2x128xf32>, vector<2x128xf32> -> vector<8x128xf32>
    %107 = arith.truncf %106 : vector<8x128xf32> to vector<8x128xbf16>
    %c5_69 = arith.constant 5 : index
    %c0_70 = arith.constant 0 : index
    %108 = tpu.strided_load %arg11[%c5_69, %c0_70] {strides = array<i32: 2, 1>} : memref<32x128xf32, #tpu.memory_space<vmem>>, vector<2x128xf32>
    %c13_71 = arith.constant 13 : index
    %c0_72 = arith.constant 0 : index
    %109 = tpu.strided_load %arg11[%c13_71, %c0_72] {strides = array<i32: 2, 1>} : memref<32x128xf32, #tpu.memory_space<vmem>>, vector<2x128xf32>
    %c21 = arith.constant 21 : index
    %c0_73 = arith.constant 0 : index
    %110 = tpu.strided_load %arg11[%c21, %c0_73] {strides = array<i32: 2, 1>} : memref<32x128xf32, #tpu.memory_space<vmem>>, vector<2x128xf32>
    %c29 = arith.constant 29 : index
    %c0_74 = arith.constant 0 : index
    %111 = tpu.strided_load %arg11[%c29, %c0_74] {strides = array<i32: 2, 1>} : memref<32x128xf32, #tpu.memory_space<vmem>>, vector<2x128xf32>
    %112 = tpu.concatenate %108, %109, %110, %111 in 0 : vector<2x128xf32>, vector<2x128xf32>, vector<2x128xf32>, vector<2x128xf32> -> vector<8x128xf32>
    %113 = arith.truncf %112 : vector<8x128xf32> to vector<8x128xbf16>
    %114 = tpu.concatenate %95, %101, %107, %113 in 1 : vector<8x128xbf16>, vector<8x128xbf16>, vector<8x128xbf16>, vector<8x128xbf16> -> vector<8x512xbf16>
    %c0_75 = arith.constant 0 : index
    %c0_76 = arith.constant 0 : index
    %115 = vector.load %arg5[%c0_75, %c0_76] : memref<512x128xbf16, #tpu.memory_space<vmem>>, vector<512x128xbf16>
    %cst_77 = arith.constant dense<0.000000e+00> : vector<8x128xf32>
    %116 = tpu.matmul %114, %115, %cst_77 {dimension_numbers = #tpu.dot_dimension_numbers<[1], [0], [0], [1], [0, 0, 1, 1], [], []>} : vector<8x512xbf16>, vector<512x128xbf16>, vector<8x128xf32> -> vector<8x128xf32>
    %c0_78 = arith.constant 0 : index
    %c0_79 = arith.constant 0 : index
    %c0_80 = arith.constant 0 : index
    %117 = vector.load %arg6[%c0_78, %c0_79, %c0_80] : memref<3x1x128xf32, #tpu.memory_space<vmem>>, vector<1x1x128xf32>
    %118 = vector.shape_cast %117 : vector<1x1x128xf32> to vector<1x128xf32>
    %119 = vector.broadcast %118 : vector<1x128xf32> to vector<8x128xf32>
    %120 = arith.addf %116, %119 : vector<8x128xf32>
    %cst_81 = arith.constant dense<0.000000e+00> : vector<128xf32>
    %121 = vector.multi_reduction <add>, %120, %cst_81 [0] : vector<8x128xf32> to vector<128xf32>
    %122 = vector.shape_cast %121 : vector<128xf32> to vector<1x128xf32>
    %cst_82 = arith.constant 8.000000e+00 : f32
    %123 = vector.broadcast %cst_82 : f32 to vector<1x128xf32>
    %124 = arith.divf %122, %123 : vector<1x128xf32>
    %125 = arith.mulf %120, %120 : vector<8x128xf32>
    %cst_83 = arith.constant dense<0.000000e+00> : vector<128xf32>
    %126 = vector.multi_reduction <add>, %125, %cst_83 [0] : vector<8x128xf32> to vector<128xf32>
    %127 = vector.shape_cast %126 : vector<128xf32> to vector<1x128xf32>
    %cst_84 = arith.constant 8.000000e+00 : f32
    %128 = vector.broadcast %cst_84 : f32 to vector<1x128xf32>
    %129 = arith.divf %127, %128 : vector<1x128xf32>
    %130 = arith.mulf %124, %124 : vector<1x128xf32>
    %131 = arith.subf %129, %130 : vector<1x128xf32>
    %cst_85 = arith.constant 0.000000e+00 : f32
    %132 = vector.broadcast %cst_85 : f32 to vector<1x128xf32>
    %133 = arith.maximumf %131, %132 : vector<1x128xf32>
    %134 = vector.broadcast %124 : vector<1x128xf32> to vector<8x128xf32>
    %135 = arith.subf %120, %134 : vector<8x128xf32>
    %cst_86 = arith.constant 9.99999974E-6 : f32
    %136 = vector.broadcast %cst_86 : f32 to vector<1x128xf32>
    %137 = arith.addf %133, %136 : vector<1x128xf32>
    %138 = math.rsqrt %137 : vector<1x128xf32>
    %139 = vector.broadcast %138 : vector<1x128xf32> to vector<8x128xf32>
    %140 = arith.mulf %135, %139 : vector<8x128xf32>
    %c1_87 = arith.constant 1 : index
    %c0_88 = arith.constant 0 : index
    %c0_89 = arith.constant 0 : index
    %141 = vector.load %arg6[%c1_87, %c0_88, %c0_89] : memref<3x1x128xf32, #tpu.memory_space<vmem>>, vector<1x1x128xf32>
    %142 = vector.shape_cast %141 : vector<1x1x128xf32> to vector<1x128xf32>
    %143 = vector.broadcast %142 : vector<1x128xf32> to vector<8x128xf32>
    %144 = arith.mulf %140, %143 : vector<8x128xf32>
    %c2_90 = arith.constant 2 : index
    %c0_91 = arith.constant 0 : index
    %c0_92 = arith.constant 0 : index
    %145 = vector.load %arg6[%c2_90, %c0_91, %c0_92] : memref<3x1x128xf32, #tpu.memory_space<vmem>>, vector<1x1x128xf32>
    %146 = vector.shape_cast %145 : vector<1x1x128xf32> to vector<1x128xf32>
    %147 = vector.broadcast %146 : vector<1x128xf32> to vector<8x128xf32>
    %148 = arith.addf %144, %147 : vector<8x128xf32>
    %c0_93 = arith.constant 0 : index
    %c0_94 = arith.constant 0 : index
    %149 = vector.load %arg15[%c0_93, %c0_94] : memref<8x128xf32, #tpu.memory_space<vmem>>, vector<8x128xf32>
    tpu.vector_store %arg15[%c0_93, %c0_94], %148 {strides = array<i32>} : memref<8x128xf32, #tpu.memory_space<vmem>>, vector<8x128xf32>,
    %c0_95 = arith.constant 0 : index
    %c0_96 = arith.constant 0 : index
    %150 = vector.load %arg15[%c0_95, %c0_96] : memref<8x128xf32, #tpu.memory_space<vmem>>, vector<1x128xf32>
    %c4_97 = arith.constant 4 : index
    %c0_98 = arith.constant 0 : index
    %151 = vector.load %arg15[%c4_97, %c0_98] : memref<8x128xf32, #tpu.memory_space<vmem>>, vector<1x128xf32>
    %152 = tpu.concatenate %150, %151 in 0 : vector<1x128xf32>, vector<1x128xf32> -> vector<2x128xf32>
    %153 = arith.truncf %152 : vector<2x128xf32> to vector<2x128xbf16>
    %c1_99 = arith.constant 1 : index
    %c0_100 = arith.constant 0 : index
    %154 = vector.load %arg15[%c1_99, %c0_100] : memref<8x128xf32, #tpu.memory_space<vmem>>, vector<1x128xf32>
    %c5_101 = arith.constant 5 : index
    %c0_102 = arith.constant 0 : index
    %155 = vector.load %arg15[%c5_101, %c0_102] : memref<8x128xf32, #tpu.memory_space<vmem>>, vector<1x128xf32>
    %156 = tpu.concatenate %154, %155 in 0 : vector<1x128xf32>, vector<1x128xf32> -> vector<2x128xf32>
    %157 = arith.truncf %156 : vector<2x128xf32> to vector<2x128xbf16>
    %c2_103 = arith.constant 2 : index
    %c0_104 = arith.constant 0 : index
    %158 = vector.load %arg15[%c2_103, %c0_104] : memref<8x128xf32, #tpu.memory_space<vmem>>, vector<1x128xf32>
    %c6_105 = arith.constant 6 : index
    %c0_106 = arith.constant 0 : index
    %159 = vector.load %arg15[%c6_105, %c0_106] : memref<8x128xf32, #tpu.memory_space<vmem>>, vector<1x128xf32>
    %160 = tpu.concatenate %158, %159 in 0 : vector<1x128xf32>, vector<1x128xf32> -> vector<2x128xf32>
    %161 = arith.truncf %160 : vector<2x128xf32> to vector<2x128xbf16>
    %c3_107 = arith.constant 3 : index
    %c0_108 = arith.constant 0 : index
    %162 = vector.load %arg15[%c3_107, %c0_108] : memref<8x128xf32, #tpu.memory_space<vmem>>, vector<1x128xf32>
    %c7_109 = arith.constant 7 : index
    %c0_110 = arith.constant 0 : index
    %163 = vector.load %arg15[%c7_109, %c0_110] : memref<8x128xf32, #tpu.memory_space<vmem>>, vector<1x128xf32>
    %164 = tpu.concatenate %162, %163 in 0 : vector<1x128xf32>, vector<1x128xf32> -> vector<2x128xf32>
    %165 = arith.truncf %164 : vector<2x128xf32> to vector<2x128xbf16>
    %166 = tpu.concatenate %153, %157, %161, %165 in 1 : vector<2x128xbf16>, vector<2x128xbf16>, vector<2x128xbf16>, vector<2x128xbf16> -> vector<2x512xbf16>
    %c0_111 = arith.constant 0 : index
    %c0_112 = arith.constant 0 : index
    %167 = vector.load %arg7[%c0_111, %c0_112] : memref<512x128xbf16, #tpu.memory_space<vmem>>, vector<512x128xbf16>
    %cst_113 = arith.constant dense<0.000000e+00> : vector<2x128xf32>
    %168 = tpu.matmul %166, %167, %cst_113 {dimension_numbers = #tpu.dot_dimension_numbers<[1], [0], [0], [1], [0, 0, 1, 1], [], []>} : vector<2x512xbf16>, vector<512x128xbf16>, vector<2x128xf32> -> vector<2x128xf32>
    %c0_114 = arith.constant 0 : index
    %c0_115 = arith.constant 0 : index
    %c0_116 = arith.constant 0 : index
    %169 = vector.load %arg8[%c0_114, %c0_115, %c0_116] : memref<3x1x128xf32, #tpu.memory_space<vmem>>, vector<1x1x128xf32>
    %170 = vector.shape_cast %169 : vector<1x1x128xf32> to vector<1x128xf32>
    %171 = vector.broadcast %170 : vector<1x128xf32> to vector<2x128xf32>
    %172 = arith.addf %168, %171 : vector<2x128xf32>
    %cst_117 = arith.constant dense<0.000000e+00> : vector<128xf32>
    %173 = vector.multi_reduction <add>, %172, %cst_117 [0] : vector<2x128xf32> to vector<128xf32>
    %174 = vector.shape_cast %173 : vector<128xf32> to vector<1x128xf32>
    %cst_118 = arith.constant 2.000000e+00 : f32
    %175 = vector.broadcast %cst_118 : f32 to vector<1x128xf32>
    %176 = arith.divf %174, %175 : vector<1x128xf32>
    %177 = arith.mulf %172, %172 : vector<2x128xf32>
    %cst_119 = arith.constant dense<0.000000e+00> : vector<128xf32>
    %178 = vector.multi_reduction <add>, %177, %cst_119 [0] : vector<2x128xf32> to vector<128xf32>
    %179 = vector.shape_cast %178 : vector<128xf32> to vector<1x128xf32>
    %cst_120 = arith.constant 2.000000e+00 : f32
    %180 = vector.broadcast %cst_120 : f32 to vector<1x128xf32>
    %181 = arith.divf %179, %180 : vector<1x128xf32>
    %182 = arith.mulf %176, %176 : vector<1x128xf32>
    %183 = arith.subf %181, %182 : vector<1x128xf32>
    %cst_121 = arith.constant 0.000000e+00 : f32
    %184 = vector.broadcast %cst_121 : f32 to vector<1x128xf32>
    %185 = arith.maximumf %183, %184 : vector<1x128xf32>
    %186 = vector.broadcast %176 : vector<1x128xf32> to vector<2x128xf32>
    %187 = arith.subf %172, %186 : vector<2x128xf32>
    %cst_122 = arith.constant 9.99999974E-6 : f32
    %188 = vector.broadcast %cst_122 : f32 to vector<1x128xf32>
    %189 = arith.addf %185, %188 : vector<1x128xf32>
    %190 = math.rsqrt %189 : vector<1x128xf32>
    %191 = vector.broadcast %190 : vector<1x128xf32> to vector<2x128xf32>
    %192 = arith.mulf %187, %191 : vector<2x128xf32>
    %c1_123 = arith.constant 1 : index
    %c0_124 = arith.constant 0 : index
    %c0_125 = arith.constant 0 : index
    %193 = vector.load %arg8[%c1_123, %c0_124, %c0_125] : memref<3x1x128xf32, #tpu.memory_space<vmem>>, vector<1x1x128xf32>
    %194 = vector.shape_cast %193 : vector<1x1x128xf32> to vector<1x128xf32>
    %195 = vector.broadcast %194 : vector<1x128xf32> to vector<2x128xf32>
    %196 = arith.mulf %192, %195 : vector<2x128xf32>
    %c2_126 = arith.constant 2 : index
    %c0_127 = arith.constant 0 : index
    %c0_128 = arith.constant 0 : index
    %197 = vector.load %arg8[%c2_126, %c0_127, %c0_128] : memref<3x1x128xf32, #tpu.memory_space<vmem>>, vector<1x1x128xf32>
    %198 = vector.shape_cast %197 : vector<1x1x128xf32> to vector<1x128xf32>
    %199 = vector.broadcast %198 : vector<1x128xf32> to vector<2x128xf32>
    %200 = arith.addf %196, %199 : vector<2x128xf32>
    %c0_129 = arith.constant 0 : index
    %c0_130 = arith.constant 0 : index
    %201 = vector.load %arg12[%c0_129, %c0_130] : memref<2x128xf32, #tpu.memory_space<vmem>>, vector<2x128xf32>
    tpu.vector_store %arg12[%c0_129, %c0_130], %200 {strides = array<i32>} : memref<2x128xf32, #tpu.memory_space<vmem>>, vector<2x128xf32>,
    %c3_131 = arith.constant 3 : index
    %c0_132 = arith.constant 0 : index
    %202 = vector.load %arg1[%c3_131, %c0_132] : memref<48x64xf32, #tpu.memory_space<vmem>>, vector<32x64xf32>
    %c0_133 = arith.constant 0 : index
    %c0_134 = arith.constant 0 : index
    %c0_135 = arith.constant 0 : index
    %203 = vector.load %arg2[%c0_133, %c0_134, %c0_135] : memref<9x32x1xf32, #tpu.memory_space<vmem>>, vector<1x32x1xf32>
    %204 = vector.shape_cast %203 : vector<1x32x1xf32> to vector<32x1xf32>
    %205 = vector.broadcast %204 : vector<32x1xf32> to vector<32x64xf32>
    %206 = arith.mulf %202, %205 : vector<32x64xf32>
    %207 = arith.truncf %206 : vector<32x64xf32> to vector<32x64xbf16>
    %c4_136 = arith.constant 4 : index
    %c0_137 = arith.constant 0 : index
    %208 = vector.load %arg1[%c4_136, %c0_137] : memref<48x64xf32, #tpu.memory_space<vmem>>, vector<32x64xf32>
    %c1_138 = arith.constant 1 : index
    %c0_139 = arith.constant 0 : index
    %c0_140 = arith.constant 0 : index
    %209 = vector.load %arg2[%c1_138, %c0_139, %c0_140] : memref<9x32x1xf32, #tpu.memory_space<vmem>>, vector<1x32x1xf32>
    %210 = vector.shape_cast %209 : vector<1x32x1xf32> to vector<32x1xf32>
    %211 = vector.broadcast %210 : vector<32x1xf32> to vector<32x64xf32>
    %212 = arith.mulf %208, %211 : vector<32x64xf32>
    %213 = arith.truncf %212 : vector<32x64xf32> to vector<32x64xbf16>
    %c5_141 = arith.constant 5 : index
    %c0_142 = arith.constant 0 : index
    %214 = vector.load %arg1[%c5_141, %c0_142] : memref<48x64xf32, #tpu.memory_space<vmem>>, vector<32x64xf32>
    %c2_143 = arith.constant 2 : index
    %c0_144 = arith.constant 0 : index
    %c0_145 = arith.constant 0 : index
    %215 = vector.load %arg2[%c2_143, %c0_144, %c0_145] : memref<9x32x1xf32, #tpu.memory_space<vmem>>, vector<1x32x1xf32>
    %216 = vector.shape_cast %215 : vector<1x32x1xf32> to vector<32x1xf32>
    %217 = vector.broadcast %216 : vector<32x1xf32> to vector<32x64xf32>
    %218 = arith.mulf %214, %217 : vector<32x64xf32>
    %219 = arith.truncf %218 : vector<32x64xf32> to vector<32x64xbf16>
    %c7_146 = arith.constant 7 : index
    %c0_147 = arith.constant 0 : index
    %220 = vector.load %arg1[%c7_146, %c0_147] : memref<48x64xf32, #tpu.memory_space<vmem>>, vector<32x64xf32>
    %c3_148 = arith.constant 3 : index
    %c0_149 = arith.constant 0 : index
    %c0_150 = arith.constant 0 : index
    %221 = vector.load %arg2[%c3_148, %c0_149, %c0_150] : memref<9x32x1xf32, #tpu.memory_space<vmem>>, vector<1x32x1xf32>
    %222 = vector.shape_cast %221 : vector<1x32x1xf32> to vector<32x1xf32>
    %223 = vector.broadcast %222 : vector<32x1xf32> to vector<32x64xf32>
    %224 = arith.mulf %220, %223 : vector<32x64xf32>
    %225 = arith.truncf %224 : vector<32x64xf32> to vector<32x64xbf16>
    %c8_151 = arith.constant 8 : index
    %c0_152 = arith.constant 0 : index
    %226 = vector.load %arg1[%c8_151, %c0_152] : memref<48x64xf32, #tpu.memory_space<vmem>>, vector<32x64xf32>
    %c4_153 = arith.constant 4 : index
    %c0_154 = arith.constant 0 : index
    %c0_155 = arith.constant 0 : index
    %227 = vector.load %arg2[%c4_153, %c0_154, %c0_155] : memref<9x32x1xf32, #tpu.memory_space<vmem>>, vector<1x32x1xf32>
    %228 = vector.shape_cast %227 : vector<1x32x1xf32> to vector<32x1xf32>
    %229 = vector.broadcast %228 : vector<32x1xf32> to vector<32x64xf32>
    %230 = arith.mulf %226, %229 : vector<32x64xf32>
    %231 = arith.truncf %230 : vector<32x64xf32> to vector<32x64xbf16>
    %c9_156 = arith.constant 9 : index
    %c0_157 = arith.constant 0 : index
    %232 = vector.load %arg1[%c9_156, %c0_157] : memref<48x64xf32, #tpu.memory_space<vmem>>, vector<32x64xf32>
    %c5_158 = arith.constant 5 : index
    %c0_159 = arith.constant 0 : index
    %c0_160 = arith.constant 0 : index
    %233 = vector.load %arg2[%c5_158, %c0_159, %c0_160] : memref<9x32x1xf32, #tpu.memory_space<vmem>>, vector<1x32x1xf32>
    %234 = vector.shape_cast %233 : vector<1x32x1xf32> to vector<32x1xf32>
    %235 = vector.broadcast %234 : vector<32x1xf32> to vector<32x64xf32>
    %236 = arith.mulf %232, %235 : vector<32x64xf32>
    %237 = arith.truncf %236 : vector<32x64xf32> to vector<32x64xbf16>
    %c11_161 = arith.constant 11 : index
    %c0_162 = arith.constant 0 : index
    %238 = vector.load %arg1[%c11_161, %c0_162] : memref<48x64xf32, #tpu.memory_space<vmem>>, vector<32x64xf32>
    %c6_163 = arith.constant 6 : index
    %c0_164 = arith.constant 0 : index
    %c0_165 = arith.constant 0 : index
    %239 = vector.load %arg2[%c6_163, %c0_164, %c0_165] : memref<9x32x1xf32, #tpu.memory_space<vmem>>, vector<1x32x1xf32>
    %240 = vector.shape_cast %239 : vector<1x32x1xf32> to vector<32x1xf32>
    %241 = vector.broadcast %240 : vector<32x1xf32> to vector<32x64xf32>
    %242 = arith.mulf %238, %241 : vector<32x64xf32>
    %243 = arith.truncf %242 : vector<32x64xf32> to vector<32x64xbf16>
    %c12_166 = arith.constant 12 : index
    %c0_167 = arith.constant 0 : index
    %244 = vector.load %arg1[%c12_166, %c0_167] : memref<48x64xf32, #tpu.memory_space<vmem>>, vector<32x64xf32>
    %c7_168 = arith.constant 7 : index
    %c0_169 = arith.constant 0 : index
    %c0_170 = arith.constant 0 : index
    %245 = vector.load %arg2[%c7_168, %c0_169, %c0_170] : memref<9x32x1xf32, #tpu.memory_space<vmem>>, vector<1x32x1xf32>
    %246 = vector.shape_cast %245 : vector<1x32x1xf32> to vector<32x1xf32>
    %247 = vector.broadcast %246 : vector<32x1xf32> to vector<32x64xf32>
    %248 = arith.mulf %244, %247 : vector<32x64xf32>
    %249 = arith.truncf %248 : vector<32x64xf32> to vector<32x64xbf16>
    %c13_171 = arith.constant 13 : index
    %c0_172 = arith.constant 0 : index
    %250 = vector.load %arg1[%c13_171, %c0_172] : memref<48x64xf32, #tpu.memory_space<vmem>>, vector<32x64xf32>
    %c8_173 = arith.constant 8 : index
    %c0_174 = arith.constant 0 : index
    %c0_175 = arith.constant 0 : index
    %251 = vector.load %arg2[%c8_173, %c0_174, %c0_175] : memref<9x32x1xf32, #tpu.memory_space<vmem>>, vector<1x32x1xf32>
    %252 = vector.shape_cast %251 : vector<1x32x1xf32> to vector<32x1xf32>
    %253 = vector.broadcast %252 : vector<32x1xf32> to vector<32x64xf32>
    %254 = arith.mulf %250, %253 : vector<32x64xf32>
    %255 = arith.truncf %254 : vector<32x64xf32> to vector<32x64xbf16>
    %256 = tpu.concatenate %207, %213, %219, %225, %231, %237, %243, %249, %255 in 1 : vector<32x64xbf16>, vector<32x64xbf16>, vector<32x64xbf16>, vector<32x64xbf16>, vector<32x64xbf16>, vector<32x64xbf16>, vector<32x64xbf16>, vector<32x64xbf16>, vector<32x64xbf16> -> vector<32x576xbf16>
    %c0_176 = arith.constant 0 : index
    %c0_177 = arith.constant 0 : index
    %257 = vector.load %arg9[%c0_176, %c0_177] : memref<576x128xbf16, #tpu.memory_space<vmem>>, vector<576x128xbf16>
    %cst_178 = arith.constant dense<0.000000e+00> : vector<32x128xf32>
    %258 = tpu.matmul %256, %257, %cst_178 {dimension_numbers = #tpu.dot_dimension_numbers<[1], [0], [0], [1], [0, 0, 1, 1], [], []>} : vector<32x576xbf16>, vector<576x128xbf16>, vector<32x128xf32> -> vector<32x128xf32>
    %c0_179 = arith.constant 0 : index
    %c0_180 = arith.constant 0 : index
    %c0_181 = arith.constant 0 : index
    %259 = vector.load %arg10[%c0_179, %c0_180, %c0_181] : memref<3x1x128xf32, #tpu.memory_space<vmem>>, vector<1x1x128xf32>
    %260 = vector.shape_cast %259 : vector<1x1x128xf32> to vector<1x128xf32>
    %261 = vector.broadcast %260 : vector<1x128xf32> to vector<32x128xf32>
    %262 = arith.addf %258, %261 : vector<32x128xf32>
    %cst_182 = arith.constant dense<0.000000e+00> : vector<128xf32>
    %263 = vector.multi_reduction <add>, %262, %cst_182 [0] : vector<32x128xf32> to vector<128xf32>
    %264 = vector.shape_cast %263 : vector<128xf32> to vector<1x128xf32>
    %cst_183 = arith.constant 3.200000e+01 : f32
    %265 = vector.broadcast %cst_183 : f32 to vector<1x128xf32>
    %266 = arith.divf %264, %265 : vector<1x128xf32>
    %267 = arith.mulf %262, %262 : vector<32x128xf32>
    %cst_184 = arith.constant dense<0.000000e+00> : vector<128xf32>
    %268 = vector.multi_reduction <add>, %267, %cst_184 [0] : vector<32x128xf32> to vector<128xf32>
    %269 = vector.shape_cast %268 : vector<128xf32> to vector<1x128xf32>
    %cst_185 = arith.constant 3.200000e+01 : f32
    %270 = vector.broadcast %cst_185 : f32 to vector<1x128xf32>
    %271 = arith.divf %269, %270 : vector<1x128xf32>
    %272 = arith.mulf %266, %266 : vector<1x128xf32>
    %273 = arith.subf %271, %272 : vector<1x128xf32>
    %cst_186 = arith.constant 0.000000e+00 : f32
    %274 = vector.broadcast %cst_186 : f32 to vector<1x128xf32>
    %275 = arith.maximumf %273, %274 : vector<1x128xf32>
    %276 = vector.broadcast %266 : vector<1x128xf32> to vector<32x128xf32>
    %277 = arith.subf %262, %276 : vector<32x128xf32>
    %cst_187 = arith.constant 9.99999974E-6 : f32
    %278 = vector.broadcast %cst_187 : f32 to vector<1x128xf32>
    %279 = arith.addf %275, %278 : vector<1x128xf32>
    %280 = math.rsqrt %279 : vector<1x128xf32>
    %281 = vector.broadcast %280 : vector<1x128xf32> to vector<32x128xf32>
    %282 = arith.mulf %277, %281 : vector<32x128xf32>
    %c1_188 = arith.constant 1 : index
    %c0_189 = arith.constant 0 : index
    %c0_190 = arith.constant 0 : index
    %283 = vector.load %arg10[%c1_188, %c0_189, %c0_190] : memref<3x1x128xf32, #tpu.memory_space<vmem>>, vector<1x1x128xf32>
    %284 = vector.shape_cast %283 : vector<1x1x128xf32> to vector<1x128xf32>
    %285 = vector.broadcast %284 : vector<1x128xf32> to vector<32x128xf32>
    %286 = arith.mulf %282, %285 : vector<32x128xf32>
    %c2_191 = arith.constant 2 : index
    %c0_192 = arith.constant 0 : index
    %c0_193 = arith.constant 0 : index
    %287 = vector.load %arg10[%c2_191, %c0_192, %c0_193] : memref<3x1x128xf32, #tpu.memory_space<vmem>>, vector<1x1x128xf32>
    %288 = vector.shape_cast %287 : vector<1x1x128xf32> to vector<1x128xf32>
    %289 = vector.broadcast %288 : vector<1x128xf32> to vector<32x128xf32>
    %290 = arith.addf %286, %289 : vector<32x128xf32>
    %291 = vector.extract_strided_slice %290 {offsets = [0, 0], sizes = [16, 128], strides = [1, 1]} : vector<32x128xf32> to vector<16x128xf32>
    %292 = arith.mulf %291, %291 : vector<16x128xf32>
    %cst_194 = arith.constant dense<0.000000e+00> : vector<128xf32>
    %293 = vector.multi_reduction <add>, %292, %cst_194 [0] : vector<16x128xf32> to vector<128xf32>
    %294 = vector.shape_cast %293 : vector<128xf32> to vector<1x128xf32>
    %cst_195 = arith.constant 1.000000e-24 : f32
    %295 = vector.broadcast %cst_195 : f32 to vector<1x128xf32>
    %296 = arith.maximumf %294, %295 : vector<1x128xf32>
    %297 = math.rsqrt %296 : vector<1x128xf32>
    %298 = vector.broadcast %297 : vector<1x128xf32> to vector<16x128xf32>
    %299 = arith.mulf %291, %298 : vector<16x128xf32>
    %cst_196 = arith.constant dense<0.000000e+00> : vector<128x128xf32>
    %300 = tpu.matmul %299, %299, %cst_196 {dimension_numbers = #tpu.dot_dimension_numbers<[0], [0], [1], [1], [0, 1, 1, 1], [], []>} : vector<16x128xf32>, vector<16x128xf32>, vector<128x128xf32> -> vector<128x128xf32>
    %cst_197 = arith.constant 1.000000e+00 : f32
    %301 = vector.broadcast %cst_197 : f32 to vector<128x128xf32>
    %302 = arith.subf %301, %300 : vector<128x128xf32>
    %cst_198 = arith.constant dense<0.000000e+00> : vector<16x128xf32>
    %303 = tpu.matmul %299, %302, %cst_198 {dimension_numbers = #tpu.dot_dimension_numbers<[1], [0], [0], [1], [0, 0, 1, 1], [], []>} : vector<16x128xf32>, vector<128x128xf32>, vector<16x128xf32> -> vector<16x128xf32>
    %304 = arith.mulf %303, %303 : vector<16x128xf32>
    %cst_199 = arith.constant dense<0.000000e+00> : vector<128xf32>
    %305 = vector.multi_reduction <add>, %304, %cst_199 [0] : vector<16x128xf32> to vector<128xf32>
    %306 = vector.shape_cast %305 : vector<128xf32> to vector<1x128xf32>
    %cst_200 = arith.constant 1.000000e-24 : f32
    %307 = vector.broadcast %cst_200 : f32 to vector<1x128xf32>
    %308 = arith.maximumf %306, %307 : vector<1x128xf32>
    %309 = math.rsqrt %308 : vector<1x128xf32>
    %310 = vector.broadcast %309 : vector<1x128xf32> to vector<16x128xf32>
    %311 = arith.mulf %303, %310 : vector<16x128xf32>
    %cst_201 = arith.constant dense<0.000000e+00> : vector<128x128xf32>
    %312 = tpu.matmul %311, %311, %cst_201 {dimension_numbers = #tpu.dot_dimension_numbers<[0], [0], [1], [1], [0, 1, 1, 1], [], []>} : vector<16x128xf32>, vector<16x128xf32>, vector<128x128xf32> -> vector<128x128xf32>
    %c0_202 = arith.constant 0 : index
    %c0_203 = arith.constant 0 : index
    %c0_204 = arith.constant 0 : index
    %313 = vector.load %arg13[%c0_202, %c0_203, %c0_204] : memref<2x128x128xf32, #tpu.memory_space<vmem>>, vector<1x128x128xf32>
    %314 = vector.shape_cast %313 : vector<1x128x128xf32> to vector<128x128xf32>
    %315 = vector.shape_cast %300 : vector<128x128xf32> to vector<1x128x128xf32>
    tpu.vector_store %arg13[%c0_202, %c0_203, %c0_204], %315 {strides = array<i32>} : memref<2x128x128xf32, #tpu.memory_space<vmem>>, vector<1x128x128xf32>,
    %c0_205 = arith.constant 0 : index
    %c0_206 = arith.constant 0 : index
    %c0_207 = arith.constant 0 : index
    %316 = vector.load %arg14[%c0_205, %c0_206, %c0_207] : memref<2x128x128xf32, #tpu.memory_space<vmem>>, vector<1x128x128xf32>
    %317 = vector.shape_cast %316 : vector<1x128x128xf32> to vector<128x128xf32>
    %318 = vector.shape_cast %312 : vector<128x128xf32> to vector<1x128x128xf32>
    tpu.vector_store %arg14[%c0_205, %c0_206, %c0_207], %318 {strides = array<i32>} : memref<2x128x128xf32, #tpu.memory_space<vmem>>, vector<1x128x128xf32>,
    %319 = vector.extract_strided_slice %290 {offsets = [16, 0], sizes = [16, 128], strides = [1, 1]} : vector<32x128xf32> to vector<16x128xf32>
    %320 = arith.mulf %319, %319 : vector<16x128xf32>
    %cst_208 = arith.constant dense<0.000000e+00> : vector<128xf32>
    %321 = vector.multi_reduction <add>, %320, %cst_208 [0] : vector<16x128xf32> to vector<128xf32>
    %322 = vector.shape_cast %321 : vector<128xf32> to vector<1x128xf32>
    %cst_209 = arith.constant 1.000000e-24 : f32
    %323 = vector.broadcast %cst_209 : f32 to vector<1x128xf32>
    %324 = arith.maximumf %322, %323 : vector<1x128xf32>
    %325 = math.rsqrt %324 : vector<1x128xf32>
    %326 = vector.broadcast %325 : vector<1x128xf32> to vector<16x128xf32>
    %327 = arith.mulf %319, %326 : vector<16x128xf32>
    %cst_210 = arith.constant dense<0.000000e+00> : vector<128x128xf32>
    %328 = tpu.matmul %327, %327, %cst_210 {dimension_numbers = #tpu.dot_dimension_numbers<[0], [0], [1], [1], [0, 1, 1, 1], [], []>} : vector<16x128xf32>, vector<16x128xf32>, vector<128x128xf32> -> vector<128x128xf32>
    %cst_211 = arith.constant 1.000000e+00 : f32
    %329 = vector.broadcast %cst_211 : f32 to vector<128x128xf32>
    %330 = arith.subf %329, %328 : vector<128x128xf32>
    %cst_212 = arith.constant dense<0.000000e+00> : vector<16x128xf32>
    %331 = tpu.matmul %327, %330, %cst_212 {dimension_numbers = #tpu.dot_dimension_numbers<[1], [0], [0], [1], [0, 0, 1, 1], [], []>} : vector<16x128xf32>, vector<128x128xf32>, vector<16x128xf32> -> vector<16x128xf32>
    %332 = arith.mulf %331, %331 : vector<16x128xf32>
    %cst_213 = arith.constant dense<0.000000e+00> : vector<128xf32>
    %333 = vector.multi_reduction <add>, %332, %cst_213 [0] : vector<16x128xf32> to vector<128xf32>
    %334 = vector.shape_cast %333 : vector<128xf32> to vector<1x128xf32>
    %cst_214 = arith.constant 1.000000e-24 : f32
    %335 = vector.broadcast %cst_214 : f32 to vector<1x128xf32>
    %336 = arith.maximumf %334, %335 : vector<1x128xf32>
    %337 = math.rsqrt %336 : vector<1x128xf32>
    %338 = vector.broadcast %337 : vector<1x128xf32> to vector<16x128xf32>
    %339 = arith.mulf %331, %338 : vector<16x128xf32>
    %cst_215 = arith.constant dense<0.000000e+00> : vector<128x128xf32>
    %340 = tpu.matmul %339, %339, %cst_215 {dimension_numbers = #tpu.dot_dimension_numbers<[0], [0], [1], [1], [0, 1, 1, 1], [], []>} : vector<16x128xf32>, vector<16x128xf32>, vector<128x128xf32> -> vector<128x128xf32>
    %c1_216 = arith.constant 1 : index
    %c0_217 = arith.constant 0 : index
    %c0_218 = arith.constant 0 : index
    %341 = vector.load %arg13[%c1_216, %c0_217, %c0_218] : memref<2x128x128xf32, #tpu.memory_space<vmem>>, vector<1x128x128xf32>
    %342 = vector.shape_cast %341 : vector<1x128x128xf32> to vector<128x128xf32>
    %343 = vector.shape_cast %328 : vector<128x128xf32> to vector<1x128x128xf32>
    tpu.vector_store %arg13[%c1_216, %c0_217, %c0_218], %343 {strides = array<i32>} : memref<2x128x128xf32, #tpu.memory_space<vmem>>, vector<1x128x128xf32>,
    %c1_219 = arith.constant 1 : index
    %c0_220 = arith.constant 0 : index
    %c0_221 = arith.constant 0 : index
    %344 = vector.load %arg14[%c1_219, %c0_220, %c0_221] : memref<2x128x128xf32, #tpu.memory_space<vmem>>, vector<1x128x128xf32>
    %345 = vector.shape_cast %344 : vector<1x128x128xf32> to vector<128x128xf32>
    %346 = vector.shape_cast %340 : vector<128x128xf32> to vector<1x128x128xf32>
    tpu.vector_store %arg14[%c1_219, %c0_220, %c0_221], %346 {strides = array<i32>} : memref<2x128x128xf32, #tpu.memory_space<vmem>>, vector<1x128x128xf32>,
    return
  }
}

module attributes {stable_mosaic.version = 11 : i64} {
  func.func @_head_kernel(%arg0: memref<2x128xf32, #tpu.memory_space<vmem>>, %arg1: memref<128x128xbf16, #tpu.memory_space<vmem>>, %arg2: memref<1x128xf32, #tpu.memory_space<vmem>>, %arg3: memref<128x5xbf16, #tpu.memory_space<vmem>>, %arg4: memref<1x5xf32, #tpu.memory_space<vmem>>, %arg5: memref<2x5xf32, #tpu.memory_space<vmem>>) attributes {dimension_semantics = [], scalar_prefetch = 0 : i64, scratch_operands = 0 : i64, tpu.core_type = #tpu.core_type<tc>} {
    %c0 = arith.constant 0 : index
    %c0_0 = arith.constant 0 : index
    %0 = vector.load %arg0[%c0, %c0_0] : memref<2x128xf32, #tpu.memory_space<vmem>>, vector<2x128xf32>
    %1 = arith.mulf %0, %0 : vector<2x128xf32>
    %cst = arith.constant dense<0.000000e+00> : vector<2xf32>
    %2 = vector.multi_reduction <add>, %1, %cst [1] : vector<2x128xf32> to vector<2xf32>
    %3 = vector.shape_cast %2 : vector<2xf32> to vector<2x1xf32>
    %cst_1 = arith.constant 1.000000e-24 : f32
    %4 = vector.broadcast %cst_1 : f32 to vector<2x1xf32>
    %5 = arith.maximumf %3, %4 : vector<2x1xf32>
    %6 = math.rsqrt %5 : vector<2x1xf32>
    %7 = vector.broadcast %6 : vector<2x1xf32> to vector<2x128xf32>
    %8 = arith.mulf %0, %7 : vector<2x128xf32>
    %9 = arith.truncf %8 : vector<2x128xf32> to vector<2x128xbf16>
    %c0_2 = arith.constant 0 : index
    %c0_3 = arith.constant 0 : index
    %10 = vector.load %arg1[%c0_2, %c0_3] : memref<128x128xbf16, #tpu.memory_space<vmem>>, vector<128x128xbf16>
    %cst_4 = arith.constant dense<0.000000e+00> : vector<2x128xf32>
    %11 = tpu.matmul %9, %10, %cst_4 {dimension_numbers = #tpu.dot_dimension_numbers<[1], [0], [0], [1], [0, 0, 1, 1], [], []>} : vector<2x128xbf16>, vector<128x128xbf16>, vector<2x128xf32> -> vector<2x128xf32>
    %c0_5 = arith.constant 0 : index
    %c0_6 = arith.constant 0 : index
    %12 = vector.load %arg2[%c0_5, %c0_6] : memref<1x128xf32, #tpu.memory_space<vmem>>, vector<1x128xf32>
    %13 = vector.broadcast %12 : vector<1x128xf32> to vector<2x128xf32>
    %14 = arith.addf %11, %13 : vector<2x128xf32>
    %15 = arith.truncf %14 : vector<2x128xf32> to vector<2x128xbf16>
    %c0_7 = arith.constant 0 : index
    %c0_8 = arith.constant 0 : index
    %16 = vector.load %arg3[%c0_7, %c0_8] : memref<128x5xbf16, #tpu.memory_space<vmem>>, vector<128x5xbf16>
    %cst_9 = arith.constant dense<0.000000e+00> : vector<2x5xf32>
    %17 = tpu.matmul %15, %16, %cst_9 {dimension_numbers = #tpu.dot_dimension_numbers<[1], [0], [0], [1], [0, 0, 1, 1], [], []>} : vector<2x128xbf16>, vector<128x5xbf16>, vector<2x5xf32> -> vector<2x5xf32>
    %c0_10 = arith.constant 0 : index
    %c0_11 = arith.constant 0 : index
    %18 = vector.load %arg4[%c0_10, %c0_11] : memref<1x5xf32, #tpu.memory_space<vmem>>, vector<1x5xf32>
    %19 = vector.broadcast %18 : vector<1x5xf32> to vector<2x5xf32>
    %20 = arith.addf %17, %19 : vector<2x5xf32>
    %cst_12 = arith.constant dense<0xFF800000> : vector<2xf32>
    %21 = vector.multi_reduction <maximumf>, %20, %cst_12 [1] : vector<2x5xf32> to vector<2xf32>
    %22 = vector.shape_cast %21 : vector<2xf32> to vector<2x1xf32>
    %23 = vector.broadcast %22 : vector<2x1xf32> to vector<2x5xf32>
    %24 = arith.subf %20, %23 : vector<2x5xf32>
    %25 = math.exp %24 : vector<2x5xf32>
    %cst_13 = arith.constant dense<0.000000e+00> : vector<2xf32>
    %26 = vector.multi_reduction <add>, %25, %cst_13 [1] : vector<2x5xf32> to vector<2xf32>
    %27 = vector.shape_cast %26 : vector<2xf32> to vector<2x1xf32>
    %28 = tpu.reciprocal %27 {approx = true} : vector<2x1xf32> -> vector<2x1xf32>
    %29 = vector.broadcast %28 : vector<2x1xf32> to vector<2x5xf32>
    %30 = arith.mulf %25, %29 : vector<2x5xf32>
    %c0_14 = arith.constant 0 : index
    %c0_15 = arith.constant 0 : index
    %31 = vector.load %arg5[%c0_14, %c0_15] : memref<2x5xf32, #tpu.memory_space<vmem>>, vector<2x5xf32>
    tpu.vector_store %arg5[%c0_14, %c0_15], %30 {strides = array<i32>} : memref<2x5xf32, #tpu.memory_space<vmem>>, vector<2x5xf32>,
    return
  }
}

</mosaic_0001>

<llo_original>
// kernel: custom-call.2
$region0: #{custom-call.2}
  %s0 = inlined_call_operand.vmem [shape: f32[2,5,5], index: 0, kind: input, shape index: {}]
  %s1 = inlined_call_operand.vmem [shape: f32[2,5,5], index: 1, kind: input, shape index: {}]
  %s2 = inlined_call_operand.vmem [shape: f32[2,5,5], index: 2, kind: input, shape index: {}]
  %s3 = inlined_call_operand.vmem [shape: f32[2,5,5], index: 3, kind: input, shape index: {}]
  %s4 = inlined_call_operand.vmem [shape: f32[2,5], index: 4, kind: output, shape index: {0}]
  %s5 = inlined_call_operand.vmem [shape: f32[2,5], index: 5, kind: output, shape index: {1}]
  %s6 = inlined_call_operand.vmem [shape: f32[2,5,5], index: 6, kind: output, shape index: {2}]
  %s7 = inlined_call_operand.vmem [shape: f32[2,5,5], index: 7, kind: output, shape index: {3}]
  %s8 = inlined_call_operand.vmem [shape: f32[2,5,5], index: 8, kind: output, shape index: {4}]
  %s9 = inlined_call_operand.vmem [shape: f32[2,5,5], index: 9, kind: output, shape index: {5}]
  %10 = xla_tuple %s4, %s5, %s6, %s7, %s8, %s9
  $region1: #{custom-call.2} parent=0
    #allocation0 [shape = 'u8[8192]{0}', space=vmem, size = 0x2000, scoped, tag = 'operand span for operand 0']
    #allocation1 [shape = 'u8[8192]{0}', space=vmem, size = 0x2000, scoped, tag = 'operand span for operand 1']
    #allocation2 [shape = 'u8[8192]{0}', space=vmem, size = 0x2000, scoped, tag = 'operand span for operand 2']
    #allocation3 [shape = 'u8[8192]{0}', space=vmem, size = 0x2000, scoped, tag = 'operand span for operand 3']
    #allocation4 [shape = 'u8[4096]{0}', space=vmem, size = 0x1000, scoped, tag = 'operand span for operand 4']
    #allocation5 [shape = 'u8[2048]{0}', space=vmem, size = 0x800, scoped, tag = 'packed  for operand 4']
    #allocation6 [shape = 'u8[4096]{0}', space=vmem, size = 0x1000, scoped, tag = 'operand span for operand 5']
    #allocation7 [shape = 'u8[2048]{0}', space=vmem, size = 0x800, scoped, tag = 'packed  for operand 5']
    #allocation8 [shape = 'u8[8192]{0}', space=vmem, size = 0x2000, scoped, tag = 'operand span for operand 6']
    #allocation9 [shape = 'u8[8192]{0}', space=vmem, size = 0x2000, scoped, tag = 'operand span for operand 7']
    #allocation10 [shape = 'u8[8192]{0}', space=vmem, size = 0x2000, scoped, tag = 'operand span for operand 8']
    #allocation11 [shape = 'u8[8192]{0}', space=vmem, size = 0x2000, scoped, tag = 'operand span for operand 9']
    loop: start=0, step=1, limit=4
    $region2: #{custom-call.2} parent=1 // loop_pre_header
      _
    $region3: #{custom-call.2} parent=1 // loop_header
      %s12 = sphi 0, %s16
      %p13 = scmp.ge.s32.totalorder %s12, 4
      %s24 = sphi 0, %s26
      %s27 = sphi 0, %s24
      %s28 = sphi 0, %s27
      %s44 = sphi 0, %s28
      %s52 = sphi 0, %s54
      %s55 = sphi 0, %s52
      %s56 = sphi 0, %s55
      %s72 = sphi 0, %s56
    $region4: #{custom-call.2} parent=1 // loop_header_branch
      %15 = sbr.rel (%p13) target = $region8
    $region5: #{custom-call.2} parent=1 // loop_body
      %s17 = ssub.s32 %s12, 1
      %s18 = ssub.s32 %s12, 2
      %s19 = sadd.s32 %s12, 1
      %s20 = sshrl.u32 %s12, 3
      %s21 = sshrl.u32 %s19, 3
      %s22 = ssub.s32 %s20, %s21
      %p23 = scmp.eq.s32.totalorder %s22, 0
      %s25 = sadd.s32 %s24, 1
      %s26 = scalar_select %p23, %s24, %s25
      %p29 = pneg %p23
      %p30 = scmp.eq.s32.totalorder %s12, 1
      %p31 = por %p29, %p30
      %p32 = scmp.ne.s32.totalorder %s24, %s27
      %p33 = scmp.eq.s32.totalorder %s12, 0
      %p34 = por %p32, %p33
      %p35 = scmp.ne.s32.totalorder %s24, %s27
      %p36 = scmp.eq.s32.totalorder %s17, 1
      %p37 = por %p35, %p36
      %p38 = scmp.ne.s32.totalorder %s27, %s28
      %p39 = scmp.eq.s32.totalorder %s17, 0
      %p40 = por %p38, %p39
      %p41 = scmp.ne.s32.totalorder %s27, %s28
      %p42 = scmp.eq.s32.totalorder %s18, 1
      %p43 = por %p41, %p42
      %p45 = scmp.ne.s32.totalorder %s28, %s44
      %p46 = scmp.eq.s32.totalorder %s18, 0
      %p47 = por %p45, %p46
      %s48 = sshrl.u32 %s12, 3
      %s49 = sshrl.u32 %s19, 3
      %s50 = ssub.s32 %s48, %s49
      %p51 = scmp.eq.s32.totalorder %s50, 0
      %s53 = sadd.s32 %s52, 1
      %s54 = scalar_select %p51, %s52, %s53
      %p57 = pneg %p51
      %p58 = scmp.eq.s32.totalorder %s12, 1
      %p59 = por %p57, %p58
      %p60 = scmp.ne.s32.totalorder %s52, %s55
      %p61 = scmp.eq.s32.totalorder %s12, 0
      %p62 = por %p60, %p61
      %p63 = scmp.ne.s32.totalorder %s52, %s55
      %p64 = scmp.eq.s32.totalorder %s17, 1
      %p65 = por %p63, %p64
      %p66 = scmp.ne.s32.totalorder %s55, %s56
      %p67 = scmp.eq.s32.totalorder %s17, 0
      %p68 = por %p66, %p67
      %p69 = scmp.ne.s32.totalorder %s55, %s56
      %p70 = scmp.eq.s32.totalorder %s18, 1
      %p71 = por %p69, %p70
      %p73 = scmp.ne.s32.totalorder %s56, %s72
      %p74 = scmp.eq.s32.totalorder %s18, 0
      %p75 = por %p73, %p74
      %p76 = scmp.le.s32.totalorder 1, %s12
      %p77 = scmp.lt.s32.totalorder %s12, 3
      %p78 = pnand %p76, %p77
      %p79 = pneg %p78
      // Predicated region
      $region9: #{custom-call.2} parent=5 // pred_check
        _
      $region10: #{custom-call.2} parent=5 // pred_check_branch
        %81 = sbr.rel (%p78) target = $region12
      $region11: #{custom-call.2} parent=5 // pred_region
        %s82 = ssub.s32 %s12, 1
      $region12: #{custom-call.2} parent=5 // pred_fallthru
        _
      %p83 = scmp.lt.s32.totalorder %s12, 2
      // Predicated region
      $region13: #{custom-call.2} parent=5 // pred_check
        %p84 = pneg %p83
      $region14: #{custom-call.2} parent=5 // pred_check_branch
        %86 = sbr.rel (%p84) target = $region16
      $region15: #{custom-call.2} parent=5 // pred_region
        %s87 = sand.u32 %s12, 1
        %s88 = sand.u32 %s12, 1
        %s89 = smul.addr %s88, 8
        %s90 = scalar_lea.vmem [#allocation0], %s89
        %s91 = smul.addr %s12, 8
        %s92 = scalar_lea.vmem %s0, %s91
        // Predicated region
        $region17: #{custom-call.2} parent=15 // pred_check
          _
        $region18: #{custom-call.2} parent=15 // pred_check_branch
          %94 = sbr.rel (0) target = $region20
        $region19: #{custom-call.2} parent=15 // pred_region
          // Predicated region
          $region21: #{custom-call.2} parent=19 // pred_check
            _
          $region22: #{custom-call.2} parent=19 // pred_check_branch
            %96 = sbr.rel (0) target = $region24
          $region23: #{custom-call.2} parent=19 // pred_region
            // Predicated region
            $region36: #{custom-call.2} parent=23 // pred_check
              _
            $region37: #{custom-call.2} parent=23 // pred_check_branch
              %111 = sbr.rel (0) target = $region39
            $region38: #{custom-call.2} parent=23 // pred_region
              loop: start=0, step=1, limit=1
              $region40: #{custom-call.2} parent=38 // loop_pre_header
                _
              $region41: #{custom-call.2} parent=38 // loop_header
                %s113 = sphi 0, %s117
                %p114 = scmp.ge.s32.totalorder %s113, 1
                %s118 = sphi %s92, %s92
                %s119 = sphi %s90, %s90
              $region42: #{custom-call.2} parent=38 // loop_header_branch
                %116 = sbr.rel (%p114) target = $region46
              $region43: #{custom-call.2} parent=38 // loop_body
                %v120 = vld [vmem:[%s118] sm:$0xff]
                %121 = vst [vmem:[%s119] sm:$0xff] %v120
              $region44: #{custom-call.2} parent=38 // loop_footer
                %s117 = sadd.s32 1, %s113
              $region45: #{custom-call.2} parent=38 // loop_footer_branch
                %112 = sbr.rel target = $region41
              $region46: #{custom-call.2} parent=38 // loop_exit
                _
            $region39: #{custom-call.2} parent=23 // pred_fallthru
              _
            // Predicated region
            $region47: #{custom-call.2} parent=23 // pred_check
              _
            $region48: #{custom-call.2} parent=23 // pred_check_branch
              %123 = sbr.rel target = $region50
            $region49: #{custom-call.2} parent=23 // pred_region
              _
            $region50: #{custom-call.2} parent=23 // pred_fallthru
              _
          $region24: #{custom-call.2} parent=19 // pred_fallthru
            _
          // Predicated region
          $region25: #{custom-call.2} parent=19 // pred_check
            _
          $region26: #{custom-call.2} parent=19 // pred_check_branch
            %98 = sbr.rel target = $region28
          $region27: #{custom-call.2} parent=19 // pred_region
            loop: start=0, step=1, limit=1
            $region29: #{custom-call.2} parent=27 // loop_pre_header
              _
            $region30: #{custom-call.2} parent=27 // loop_header
              %s101 = sphi 0, %s105
              %p102 = scmp.ge.s32.totalorder %s101, 1
              %s106 = sphi %s92, %s92
              %s107 = sphi %s90, %s90
            $region31: #{custom-call.2} parent=27 // loop_header_branch
              %104 = sbr.rel (%p102) target = $region35
            $region32: #{custom-call.2} parent=27 // loop_body
              %v108 = vld [vmem:[%s106] sm:$0xff]
              %109 = vst [vmem:[%s107] sm:$0xff] %v108
            $region33: #{custom-call.2} parent=27 // loop_footer
              %s105 = sadd.s32 1, %s101
            $region34: #{custom-call.2} parent=27 // loop_footer_branch
              %100 = sbr.rel target = $region30
            $region35: #{custom-call.2} parent=27 // loop_exit
              _
          $region28: #{custom-call.2} parent=19 // pred_fallthru
            _
        $region20: #{custom-call.2} parent=15 // pred_fallthru
          _
        %124 = vnop
        %s125 = sand.u32 %s12, 1
        %s126 = sand.u32 %s12, 1
        %s127 = smul.addr %s126, 8
        %s128 = scalar_lea.vmem [#allocation1], %s127
        %s129 = smul.addr %s12, 8
        %s130 = scalar_lea.vmem %s1, %s129
        // Predicated region
        $region51: #{custom-call.2} parent=15 // pred_check
          _
        $region52: #{custom-call.2} parent=15 // pred_check_branch
          %132 = sbr.rel (0) target = $region54
        $region53: #{custom-call.2} parent=15 // pred_region
          // Predicated region
          $region55: #{custom-call.2} parent=53 // pred_check
            _
          $region56: #{custom-call.2} parent=53 // pred_check_branch
            %134 = sbr.rel (0) target = $region58
          $region57: #{custom-call.2} parent=53 // pred_region
            // Predicated region
            $region70: #{custom-call.2} parent=57 // pred_check
              _
            $region71: #{custom-call.2} parent=57 // pred_check_branch
              %149 = sbr.rel (0) target = $region73
            $region72: #{custom-call.2} parent=57 // pred_region
              loop: start=0, step=1, limit=1
              $region74: #{custom-call.2} parent=72 // loop_pre_header
                _
              $region75: #{custom-call.2} parent=72 // loop_header
                %s151 = sphi 0, %s155
                %p152 = scmp.ge.s32.totalorder %s151, 1
                %s156 = sphi %s130, %s130
                %s157 = sphi %s128, %s128
              $region76: #{custom-call.2} parent=72 // loop_header_branch
                %154 = sbr.rel (%p152) target = $region80
              $region77: #{custom-call.2} parent=72 // loop_body
                %v158 = vld [vmem:[%s156] sm:$0xff]
                %159 = vst [vmem:[%s157] sm:$0xff] %v158
              $region78: #{custom-call.2} parent=72 // loop_footer
                %s155 = sadd.s32 1, %s151
              $region79: #{custom-call.2} parent=72 // loop_footer_branch
                %150 = sbr.rel target = $region75
              $region80: #{custom-call.2} parent=72 // loop_exit
                _
            $region73: #{custom-call.2} parent=57 // pred_fallthru
              _
            // Predicated region
            $region81: #{custom-call.2} parent=57 // pred_check
              _
            $region82: #{custom-call.2} parent=57 // pred_check_branch
              %161 = sbr.rel target = $region84
            $region83: #{custom-call.2} parent=57 // pred_region
              _
            $region84: #{custom-call.2} parent=57 // pred_fallthru
              _
          $region58: #{custom-call.2} parent=53 // pred_fallthru
            _
          // Predicated region
          $region59: #{custom-call.2} parent=53 // pred_check
            _
          $region60: #{custom-call.2} parent=53 // pred_check_branch
            %136 = sbr.rel target = $region62
          $region61: #{custom-call.2} parent=53 // pred_region
            loop: start=0, step=1, limit=1
            $region63: #{custom-call.2} parent=61 // loop_pre_header
              _
            $region64: #{custom-call.2} parent=61 // loop_header
              %s139 = sphi 0, %s143
              %p140 = scmp.ge.s32.totalorder %s139, 1
              %s144 = sphi %s130, %s130
              %s145 = sphi %s128, %s128
            $region65: #{custom-call.2} parent=61 // loop_header_branch
              %142 = sbr.rel (%p140) target = $region69
            $region66: #{custom-call.2} parent=61 // loop_body
              %v146 = vld [vmem:[%s144] sm:$0xff]
              %147 = vst [vmem:[%s145] sm:$0xff] %v146
            $region67: #{custom-call.2} parent=61 // loop_footer
              %s143 = sadd.s32 1, %s139
            $region68: #{custom-call.2} parent=61 // loop_footer_branch
              %138 = sbr.rel target = $region64
            $region69: #{custom-call.2} parent=61 // loop_exit
              _
          $region62: #{custom-call.2} parent=53 // pred_fallthru
            _
        $region54: #{custom-call.2} parent=15 // pred_fallthru
          _
        %162 = vnop
        %s163 = sand.u32 %s12, 1
        %s164 = sand.u32 %s12, 1
        %s165 = smul.addr %s164, 8
        %s166 = scalar_lea.vmem [#allocation2], %s165
        %s167 = smul.addr %s12, 8
        %s168 = scalar_lea.vmem %s2, %s167
        // Predicated region
        $region85: #{custom-call.2} parent=15 // pred_check
          _
        $region86: #{custom-call.2} parent=15 // pred_check_branch
          %170 = sbr.rel (0) target = $region88
        $region87: #{custom-call.2} parent=15 // pred_region
          // Predicated region
          $region89: #{custom-call.2} parent=87 // pred_check
            _
          $region90: #{custom-call.2} parent=87 // pred_check_branch
            %172 = sbr.rel (0) target = $region92
          $region91: #{custom-call.2} parent=87 // pred_region
            // Predicated region
            $region104: #{custom-call.2} parent=91 // pred_check
              _
            $region105: #{custom-call.2} parent=91 // pred_check_branch
              %187 = sbr.rel (0) target = $region107
            $region106: #{custom-call.2} parent=91 // pred_region
              loop: start=0, step=1, limit=1
              $region108: #{custom-call.2} parent=106 // loop_pre_header
                _
              $region109: #{custom-call.2} parent=106 // loop_header
                %s189 = sphi 0, %s193
                %p190 = scmp.ge.s32.totalorder %s189, 1
                %s194 = sphi %s168, %s168
                %s195 = sphi %s166, %s166
              $region110: #{custom-call.2} parent=106 // loop_header_branch
                %192 = sbr.rel (%p190) target = $region114
              $region111: #{custom-call.2} parent=106 // loop_body
                %v196 = vld [vmem:[%s194] sm:$0xff]
                %197 = vst [vmem:[%s195] sm:$0xff] %v196
              $region112: #{custom-call.2} parent=106 // loop_footer
                %s193 = sadd.s32 1, %s189
              $region113: #{custom-call.2} parent=106 // loop_footer_branch
                %188 = sbr.rel target = $region109
              $region114: #{custom-call.2} parent=106 // loop_exit
                _
            $region107: #{custom-call.2} parent=91 // pred_fallthru
              _
            // Predicated region
            $region115: #{custom-call.2} parent=91 // pred_check
              _
            $region116: #{custom-call.2} parent=91 // pred_check_branch
              %199 = sbr.rel target = $region118
            $region117: #{custom-call.2} parent=91 // pred_region
              _
            $region118: #{custom-call.2} parent=91 // pred_fallthru
              _
          $region92: #{custom-call.2} parent=87 // pred_fallthru
            _
          // Predicated region
          $region93: #{custom-call.2} parent=87 // pred_check
            _
          $region94: #{custom-call.2} parent=87 // pred_check_branch
            %174 = sbr.rel target = $region96
          $region95: #{custom-call.2} parent=87 // pred_region
            loop: start=0, step=1, limit=1
            $region97: #{custom-call.2} parent=95 // loop_pre_header
              _
            $region98: #{custom-call.2} parent=95 // loop_header
              %s177 = sphi 0, %s181
              %p178 = scmp.ge.s32.totalorder %s177, 1
              %s182 = sphi %s168, %s168
              %s183 = sphi %s166, %s166
            $region99: #{custom-call.2} parent=95 // loop_header_branch
              %180 = sbr.rel (%p178) target = $region103
            $region100: #{custom-call.2} parent=95 // loop_body
              %v184 = vld [vmem:[%s182] sm:$0xff]
              %185 = vst [vmem:[%s183] sm:$0xff] %v184
            $region101: #{custom-call.2} parent=95 // loop_footer
              %s181 = sadd.s32 1, %s177
            $region102: #{custom-call.2} parent=95 // loop_footer_branch
              %176 = sbr.rel target = $region98
            $region103: #{custom-call.2} parent=95 // loop_exit
              _
          $region96: #{custom-call.2} parent=87 // pred_fallthru
            _
        $region88: #{custom-call.2} parent=15 // pred_fallthru
          _
        %200 = vnop
        %s201 = sand.u32 %s12, 1
        %s202 = sand.u32 %s12, 1
        %s203 = smul.addr %s202, 8
        %s204 = scalar_lea.vmem [#allocation3], %s203
        %s205 = smul.addr %s12, 8
        %s206 = scalar_lea.vmem %s3, %s205
        // Predicated region
        $region119: #{custom-call.2} parent=15 // pred_check
          _
        $region120: #{custom-call.2} parent=15 // pred_check_branch
          %208 = sbr.rel (0) target = $region122
        $region121: #{custom-call.2} parent=15 // pred_region
          // Predicated region
          $region123: #{custom-call.2} parent=121 // pred_check
            _
          $region124: #{custom-call.2} parent=121 // pred_check_branch
            %210 = sbr.rel (0) target = $region126
          $region125: #{custom-call.2} parent=121 // pred_region
            // Predicated region
            $region138: #{custom-call.2} parent=125 // pred_check
              _
            $region139: #{custom-call.2} parent=125 // pred_check_branch
              %225 = sbr.rel (0) target = $region141
            $region140: #{custom-call.2} parent=125 // pred_region
              loop: start=0, step=1, limit=1
              $region142: #{custom-call.2} parent=140 // loop_pre_header
                _
              $region143: #{custom-call.2} parent=140 // loop_header
                %s227 = sphi 0, %s231
                %p228 = scmp.ge.s32.totalorder %s227, 1
                %s232 = sphi %s206, %s206
                %s233 = sphi %s204, %s204
              $region144: #{custom-call.2} parent=140 // loop_header_branch
                %230 = sbr.rel (%p228) target = $region148
              $region145: #{custom-call.2} parent=140 // loop_body
                %v234 = vld [vmem:[%s232] sm:$0xff]
                %235 = vst [vmem:[%s233] sm:$0xff] %v234
              $region146: #{custom-call.2} parent=140 // loop_footer
                %s231 = sadd.s32 1, %s227
              $region147: #{custom-call.2} parent=140 // loop_footer_branch
                %226 = sbr.rel target = $region143
              $region148: #{custom-call.2} parent=140 // loop_exit
                _
            $region141: #{custom-call.2} parent=125 // pred_fallthru
              _
            // Predicated region
            $region149: #{custom-call.2} parent=125 // pred_check
              _
            $region150: #{custom-call.2} parent=125 // pred_check_branch
              %237 = sbr.rel target = $region152
            $region151: #{custom-call.2} parent=125 // pred_region
              _
            $region152: #{custom-call.2} parent=125 // pred_fallthru
              _
          $region126: #{custom-call.2} parent=121 // pred_fallthru
            _
          // Predicated region
          $region127: #{custom-call.2} parent=121 // pred_check
            _
          $region128: #{custom-call.2} parent=121 // pred_check_branch
            %212 = sbr.rel target = $region130
          $region129: #{custom-call.2} parent=121 // pred_region
            loop: start=0, step=1, limit=1
            $region131: #{custom-call.2} parent=129 // loop_pre_header
              _
            $region132: #{custom-call.2} parent=129 // loop_header
              %s215 = sphi 0, %s219
              %p216 = scmp.ge.s32.totalorder %s215, 1
              %s220 = sphi %s206, %s206
              %s221 = sphi %s204, %s204
            $region133: #{custom-call.2} parent=129 // loop_header_branch
              %218 = sbr.rel (%p216) target = $region137
            $region134: #{custom-call.2} parent=129 // loop_body
              %v222 = vld [vmem:[%s220] sm:$0xff]
              %223 = vst [vmem:[%s221] sm:$0xff] %v222
            $region135: #{custom-call.2} parent=129 // loop_footer
              %s219 = sadd.s32 1, %s215
            $region136: #{custom-call.2} parent=129 // loop_footer_branch
              %214 = sbr.rel target = $region132
            $region137: #{custom-call.2} parent=129 // loop_exit
              _
          $region130: #{custom-call.2} parent=121 // pred_fallthru
            _
        $region122: #{custom-call.2} parent=15 // pred_fallthru
          _
        %238 = vnop
      $region16: #{custom-call.2} parent=5 // pred_fallthru
        _
      %p239 = scmp.le.s32.totalorder 1, %s12
      %p240 = scmp.lt.s32.totalorder %s12, 3
      %p241 = pnand %p239, %p240
      %p242 = pneg %p241
      // Predicated region
      $region153: #{custom-call.2} parent=5 // pred_check
        _
      $region154: #{custom-call.2} parent=5 // pred_check_branch
        %244 = sbr.rel (%p241) target = $region156
      $region155: #{custom-call.2} parent=5 // pred_region
        #allocation12 [shape = 'f32[5,5]{1,0}', space=vmem, size = 0x1000, scoped, tag = 'a top-left matrix']
        #allocation13 [shape = 'f32[5,5]{1,0}', space=vmem, size = 0x1000, scoped, tag = 'a top-right matrix']
        #allocation14 [shape = 'f32[5,5]{1,0}', space=vmem, size = 0x1000, scoped, tag = 'a bottom-left matrix']
        #allocation15 [shape = 'f32[5,5]{1,0}', space=vmem, size = 0x1000, scoped, tag = 'a bottom-right matrix']
        %s245 = ssub.s32 %s12, 1
        %s246 = sand.u32 %s17, 1
        %s247 = sand.u32 %s17, 1
        %s248 = smul.addr %s247, 8
        %s249 = scalar_lea.vmem [#allocation0], %s248
        %s250 = sand.u32 %s17, 1
        %s251 = sand.u32 %s17, 1
        %s252 = smul.addr %s251, 8
        %s253 = scalar_lea.vmem [#allocation1], %s252
        %s254 = sand.u32 %s17, 1
        %s255 = sand.u32 %s17, 1
        %s256 = smul.addr %s255, 8
        %s257 = scalar_lea.vmem [#allocation2], %s256
        %s258 = sand.u32 %s17, 1
        %s259 = sand.u32 %s17, 1
        %s260 = smul.addr %s259, 8
        %s261 = scalar_lea.vmem [#allocation3], %s260
        %s262 = sand.u32 %s17, 1
        %s263 = sand.u32 %s17, 1
        %s264 = smul.addr %s263, 8
        %s265 = scalar_lea.vmem [#allocation0], %s264
        %s266 = sand.u32 %s17, 1
        %s267 = sand.u32 %s17, 1
        %s268 = smul.addr %s267, 8
        %s269 = scalar_lea.vmem [#allocation1], %s268
        %s270 = sand.u32 %s17, 1
        %s271 = sand.u32 %s17, 1
        %s272 = smul.addr %s271, 8
        %s273 = scalar_lea.vmem [#allocation2], %s272
        %s274 = sand.u32 %s17, 1
        %s275 = sand.u32 %s17, 1
        %s276 = smul.addr %s275, 8
        %s277 = scalar_lea.vmem [#allocation3], %s276
        %p278 = pneg %p40
        %p279 = pneg %p37
        %s280 = sand.u32 %s27, 1
        %s281 = sand.u32 %s27, 1
        %s282 = smul.addr %s281, 2
        %s283 = scalar_lea.vmem [#allocation5], %s282
        %p284 = pneg %p68
        %p285 = pneg %p65
        %s286 = sand.u32 %s55, 1
        %s287 = sand.u32 %s55, 1
        %s288 = smul.addr %s287, 2
        %s289 = scalar_lea.vmem [#allocation7], %s288
        %s290 = sand.u32 %s17, 1
        %s291 = sand.u32 %s17, 1
        %s292 = smul.addr %s291, 8
        %s293 = scalar_lea.vmem [#allocation8], %s292
        %s294 = sand.u32 %s17, 1
        %s295 = sand.u32 %s17, 1
        %s296 = smul.addr %s295, 8
        %s297 = scalar_lea.vmem [#allocation9], %s296
        %s298 = sand.u32 %s17, 1
        %s299 = sand.u32 %s17, 1
        %s300 = smul.addr %s299, 8
        %s301 = scalar_lea.vmem [#allocation10], %s300
        %s302 = sand.u32 %s17, 1
        %s303 = sand.u32 %s17, 1
        %s304 = smul.addr %s303, 8
        %s305 = scalar_lea.vmem [#allocation11], %s304
        %s306 = sshrl.u32 %s17, 3
        %s307 = sshrl.u32 %s17, 3
        %s308 = smov [#allocation12]
        %v309 = vld [vmem:[%s249] sm:$0xff]
        %310 = vst [vmem:[%s308] sm:$0xff] %v309
        %s311 = smov [#allocation13]
        %v312 = vld [vmem:[%s253] sm:$0xff]
        %313 = vst [vmem:[%s311] sm:$0xff] %v312
        %s314 = smov [#allocation14]
        %v315 = vld [vmem:[%s257] sm:$0xff]
        %316 = vst [vmem:[%s314] sm:$0xff] %v315
        %s317 = smov [#allocation15]
        %v318 = vld [vmem:[%s261] sm:$0xff]
        %319 = vst [vmem:[%s317] sm:$0xff] %v318
        %320 = vst [vmem:[%s293] sm:$0xff] 0.0
        %321 = vst [vmem:[%s297] sm:$0xff] 0.0
        %322 = vst [vmem:[%s301] sm:$0xff] 0.0
        %323 = vst [vmem:[%s305] sm:$0xff] 0.0
        %s324 = smov %s293
        %v325 = vlaneseq
        %v326 = vand.u32 %v325, 127
        %v327 = vmov %v326
        %v328 = vlaneseq
        %v329 = vshrl.u32 %v328, 7
        %v330 = vmov %v329
        %v331 = vld [vmem:[%s324] sm:$0x1f]
        %vm334 = vcmp.eq.s32.totalorder %v330, %v327
        %v335 = vsel %vm334, 1.0, %v331
        %336 = vst [vmem:[%s324] sm:$0x1f] %v335
        %s337 = smov %s305
        %v338 = vlaneseq
        %v339 = vand.u32 %v338, 127
        %v340 = vmov %v339
        %v341 = vlaneseq
        %v342 = vshrl.u32 %v341, 7
        %v343 = vmov %v342
        %v344 = vld [vmem:[%s337] sm:$0x1f]
        %vm347 = vcmp.eq.s32.totalorder %v343, %v340
        %v348 = vsel %vm347, 1.0, %v344
        %349 = vst [vmem:[%s337] sm:$0x1f] %v348
        // While loop
        $region157: #{custom-call.2} parent=155 // loop_pre_header
          _
        $region158: #{custom-call.2} parent=155 // loop_header
          %s351 = sphi 0, %s893
          %v352 = vlaneseq
          %v353 = vand.u32 %v352, 127
          %v354 = vmov %v353
          %v355 = vlaneseq
          %v356 = vshrl.u32 %v355, 7
          %v357 = vmov %v356
          %s358 = smov [#allocation12]
          %v359 = vlaneseq
          %v360 = vand.u32 %v359, 127
          %vm361 = vcmp.ge.s32.totalorder %v360, 0
          %vm362 = vcmp.lt.s32.totalorder %v360, 5
          %vm363 = vmand %vm361, %vm362
          %v364 = vld [vmem:[%s358] sm:$0x1f]
          %v365 = vsel %vm363, %v364, 0.0
          %v366 = vmul.f32 %v365, %v365
          %vm369 = vcmp.eq.s32.totalorder %v357, %v354
          %v370 = vsel %vm369, 0.0, %v366
          %v371 = vlaneseq
          %v372 = vand.u32 %v371, 127
          %v373 = vmov %v372
          %v374 = vlaneseq
          %v375 = vshrl.u32 %v374, 7
          %v376 = vmov %v375
          %s377 = smov [#allocation13]
          %v378 = vlaneseq
          %v379 = vand.u32 %v378, 127
          %vm380 = vcmp.ge.s32.totalorder %v379, 0
          %vm381 = vcmp.lt.s32.totalorder %v379, 5
          %vm382 = vmand %vm380, %vm381
          %v383 = vld [vmem:[%s377] sm:$0x1f]
          %v384 = vsel %vm382, %v383, 0.0
          %v385 = vmul.f32 %v384, %v384
          %v386 = vadd.f32 %v370, %v385
          %v387 = vadd.f32 %v366, %v385
          %v388 = vlaneseq
          %v389 = vand.u32 %v388, 127
          %v390 = vmov %v389
          %v391 = vlaneseq
          %v392 = vshrl.u32 %v391, 7
          %v393 = vmov %v392
          %s394 = smov [#allocation14]
          %v395 = vlaneseq
          %v396 = vand.u32 %v395, 127
          %vm397 = vcmp.ge.s32.totalorder %v396, 0
          %vm398 = vcmp.lt.s32.totalorder %v396, 5
          %vm399 = vmand %vm397, %vm398
          %v400 = vld [vmem:[%s394] sm:$0x1f]
          %v401 = vsel %vm399, %v400, 0.0
          %v402 = vmul.f32 %v401, %v401
          %v403 = vadd.f32 %v386, %v402
          %v404 = vadd.f32 %v387, %v402
          %v405 = vlaneseq
          %v406 = vand.u32 %v405, 127
          %v407 = vmov %v406
          %v408 = vlaneseq
          %v409 = vshrl.u32 %v408, 7
          %v410 = vmov %v409
          %s411 = smov [#allocation15]
          %v412 = vlaneseq
          %v413 = vand.u32 %v412, 127
          %vm414 = vcmp.ge.s32.totalorder %v413, 0
          %vm415 = vcmp.lt.s32.totalorder %v413, 5
          %vm416 = vmand %vm414, %vm415
          %v417 = vld [vmem:[%s411] sm:$0x1f]
          %v418 = vsel %vm416, %v417, 0.0
          %v419 = vmul.f32 %v418, %v418
          %vm422 = vcmp.eq.s32.totalorder %v410, %v407
          %v423 = vsel %vm422, 0.0, %v419
          %v424 = vadd.f32 %v403, %v423
          %v425 = vadd.f32 %v404, %v419
          %426 = vadd.xlane.f32.xlu0 %v425
          %v427 = vpop.xlane.xlu0 %426
          %v428 = vrot.slane %v427, 4
          %v429 = vadd.f32 %v427, %v428
          %v430 = vrot.slane %v429, 2
          %v431 = vadd.f32 %v429, %v430
          %v432 = vrot.slane %v431, 1
          %v433 = vadd.f32 %v431, %v432
          %434 = vadd.xlane.f32.xlu0 %v424
          %v435 = vpop.xlane.xlu0 %434
          %v436 = vrot.slane %v435, 4
          %v437 = vadd.f32 %v435, %v436
          %v438 = vrot.slane %v437, 2
          %v439 = vadd.f32 %v437, %v438
          %v440 = vrot.slane %v439, 1
          %v441 = vadd.f32 %v439, %v440
          %s442 = vtos %v441
          %s443 = vtos %v433
          %s444 = smul.f32 1e-10, %s443
          %p445 = scmp.le.f32.partialorder %s442, %s444
          %p446 = scmp.ge.s32.totalorder %s351, 15
          %p447 = por %p445, %p446
        $region159: #{custom-call.2} parent=155 // loop_header_branch
          %895 = sbr.rel (%p447) target = $region163
        $region160: #{custom-call.2} parent=155 // loop_body
          loop: start=0, step=1, limit=9
          $region164: #{custom-call.2} parent=160 // loop_pre_header
            _
          $region165: #{custom-call.2} parent=160 // loop_header
            %s449 = sphi 0, %s453
            %p450 = scmp.ge.s32.totalorder %s449, 9
          $region166: #{custom-call.2} parent=160 // loop_header_branch
            %452 = sbr.rel (%p450) target = $region170
          $region167: #{custom-call.2} parent=160 // loop_body
            #allocation16 [shape = 'f32[1024]{0}', space=vmem, size = 0x1000, scoped, tag = 'a_tl_diag vmem']
            #allocation17 [shape = 'f32[1024]{0}', space=vmem, size = 0x1000, scoped, tag = 'a_tr_diag vmem']
            #allocation18 [shape = 'f32[1024]{0}', space=vmem, size = 0x1000, scoped, tag = 'a_br_diag vmem']
            #allocation19 [shape = 'f32[1024]{0}', space=vmem, size = 0x1000, scoped, tag = 'rt1 vmem']
            #allocation20 [shape = 'f32[1024]{0}', space=vmem, size = 0x1000, scoped, tag = 'rt2 vmem']
            #allocation21 [shape = 'f32[1024]{0}', space=vmem, size = 0x1000, scoped, tag = 'c vmem']
            #allocation22 [shape = 'f32[1024]{0}', space=vmem, size = 0x1000, scoped, tag = 's vmem']
            #allocation23 [shape = 'f32[4096]{0}', space=vmem, size = 0x4000, scoped, tag = 'c broadcast']
            #allocation24 [shape = 'f32[4096]{0}', space=vmem, size = 0x4000, scoped, tag = 's broadcast']
            %s454 = smov [#allocation12]
            %s455 = smov [#allocation16]
            %v456 = vlaneseq
            %v457 = vand.u32 %v456, 127
            %v458 = vmov %v457
            %v459 = vlaneseq
            %v460 = vshrl.u32 %v459, 7
            %v461 = vmov %v460
            %v462 = vld [vmem:[%s454] sm:$0x1f]
            %vm465 = vcmp.eq.s32.totalorder %v461, %v458
            %v466 = vsel %vm465, %v462, 0.0
            %v467 = vrot.slane %v466, 4
            %v468 = vadd.f32 %v466, %v467
            %v469 = vrot.slane %v468, 2
            %v470 = vadd.f32 %v468, %v469
            %v471 = vrot.slane %v470, 1
            %v472 = vadd.f32 %v470, %v471
            %473 = vst [vmem:[%s455] sm:$0x1] %v472
            %s474 = smov [#allocation13]
            %s475 = smov [#allocation17]
            %v476 = vlaneseq
            %v477 = vand.u32 %v476, 127
            %v478 = vmov %v477
            %v479 = vlaneseq
            %v480 = vshrl.u32 %v479, 7
            %v481 = vmov %v480
            %v482 = vld [vmem:[%s474] sm:$0x1f]
            %vm485 = vcmp.eq.s32.totalorder %v481, %v478
            %v486 = vsel %vm485, %v482, 0.0
            %v487 = vrot.slane %v486, 4
            %v488 = vadd.f32 %v486, %v487
            %v489 = vrot.slane %v488, 2
            %v490 = vadd.f32 %v488, %v489
            %v491 = vrot.slane %v490, 1
            %v492 = vadd.f32 %v490, %v491
            %493 = vst [vmem:[%s475] sm:$0x1] %v492
            %s494 = smov [#allocation15]
            %s495 = smov [#allocation18]
            %v496 = vlaneseq
            %v497 = vand.u32 %v496, 127
            %v498 = vmov %v497
            %v499 = vlaneseq
            %v500 = vshrl.u32 %v499, 7
            %v501 = vmov %v500
            %v502 = vld [vmem:[%s494] sm:$0x1f]
            %vm505 = vcmp.eq.s32.totalorder %v501, %v498
            %v506 = vsel %vm505, %v502, 0.0
            %v507 = vrot.slane %v506, 4
            %v508 = vadd.f32 %v506, %v507
            %v509 = vrot.slane %v508, 2
            %v510 = vadd.f32 %v508, %v509
            %v511 = vrot.slane %v510, 1
            %v512 = vadd.f32 %v510, %v511
            %513 = vst [vmem:[%s495] sm:$0x1] %v512
            %s514 = smov [#allocation21]
            %s515 = smov [#allocation22]
            %s516 = smov [#allocation16]
            %v517 = vld [vmem:[%s516] sm:$0xff]
            %s518 = smov [#allocation17]
            %v519 = vld [vmem:[%s518] sm:$0xff]
            %s520 = smov [#allocation18]
            %v521 = vld [vmem:[%s520] sm:$0xff]
            %v522 = vsub.f32 %v521, %v517
            %v523 = vmul.f32 2.0, %v519
            %v524 = vrcp.pop %v523
            %v525 = vmul.f32 %v522, %v524
            %vm526 = vcmp.ge.f32.partialorder %v525, 0.0
            %v527 = vmul.f32 %v525, %v525
            %v528 = vadd.f32 1.0, %v527
            %v529 = vrsqrt.pop %v528
            %v530 = vmul.f32 %v528, %v529
            %vm531 = vcmp.eq.f32.partialorder %v528, inf
            %v532 = vsel %vm531, %v528, %v530
            %vm533 = vcmp.eq.f32.partialorder %v528, 0.0
            %v534 = vand.u32 %v528, 2147483648
            %v535 = vsel %vm533, %v534, %v532
            %v536 = vxor.u32 %v535, 2147483648
            %v537 = vsel %vm526, %v535, %v536
            %v538 = vadd.f32 %v525, %v537
            %v539 = vrcp.pop %v538
            %v540 = vand.u32 2147483647, %v517
            %v541 = vand.u32 2147483647, %v519
            %v542 = vand.u32 2147483647, %v521
            %v543 = vmin.f32 %v540, %v542
            %v544 = vmul.f32 1.1920929e-08, %v543
            %vm545 = vcmp.le.f32.partialorder %v541, %v544
            %v546 = vsel %vm545, 0.0, %v539
            %v547 = vmul.f32 %v546, %v546
            %v548 = vadd.f32 1.0, %v547
            %v549 = vrsqrt.pop %v548
            %v550 = vmul.f32 %v546, %v549
            %v551 = vmul.f32 %v546, %v519
            %v552 = vsub.f32 %v517, %v551
            %v553 = vmul.f32 %v546, %v519
            %v554 = vadd.f32 %v521, %v553
            %s555 = smov [#allocation19]
            %556 = vst [vmem:[%s555] sm:$0xff] %v552
            %s557 = smov [#allocation20]
            %558 = vst [vmem:[%s557] sm:$0xff] %v554
            %s559 = smov %s514
            %560 = vst [vmem:[%s559] sm:$0xff] %v549
            %s561 = smov %s515
            %562 = vst [vmem:[%s561] sm:$0xff] %v550
            %s563 = smov [#allocation21]
            %v564 = vld [vmem:[%s563] ss:$0 sm:$0xff]
            %v565 = vlaneseq
            %v566 = vand.u32 %v565, 127
            %v567 = vmov %v566
            %v568 = vlaneseq
            %v569 = vshrl.u32 %v568, 7
            %v570 = vmov %v569
            %vm572 = vcmp.eq.s32.totalorder %v570, %v567
            %v573 = vsel %vm572, %v564, 0.0
            %574 = vadd.xlane.f32.xlu0 %v573
            %v575 = vpop.xlane.xlu0 %574
            %s576 = smov [#allocation23]
            %577 = vst [vmem:[%s576] sm:$0xff] %v575
            %s578 = smov [#allocation22]
            %v579 = vld [vmem:[%s578] ss:$0 sm:$0xff]
            %v580 = vlaneseq
            %v581 = vand.u32 %v580, 127
            %v582 = vmov %v581
            %v583 = vlaneseq
            %v584 = vshrl.u32 %v583, 7
            %v585 = vmov %v584
            %vm587 = vcmp.eq.s32.totalorder %v585, %v582
            %v588 = vsel %vm587, %v579, 0.0
            %589 = vadd.xlane.f32.xlu0 %v588
            %v590 = vpop.xlane.xlu0 %589
            %s591 = smov [#allocation24]
            %592 = vst [vmem:[%s591] sm:$0xff] %v590
            %s593 = smov [#allocation23]
            %v594 = vld [vmem:[%s593] sm:$0xff]
            %s595 = smov [#allocation24]
            %v596 = vld [vmem:[%s595] sm:$0xff]
            %s597 = smov [#allocation12]
            %s598 = smov [#allocation13]
            %s599 = smov [#allocation14]
            %s600 = smov [#allocation15]
            %v601 = vld [vmem:[%s597] sm:$0x1f]
            %v602 = vld [vmem:[%s598] sm:$0x1f]
            %v603 = vld [vmem:[%s599] sm:$0x1f]
            %v604 = vld [vmem:[%s600] sm:$0x1f]
            %v605 = vmul.f32 %v594, %v601
            %v606 = vmul.f32 %v596, %v603
            %v607 = vsub.f32 %v605, %v606
            %v608 = vmul.f32 %v594, %v602
            %v609 = vmul.f32 %v596, %v604
            %v610 = vsub.f32 %v608, %v609
            %v611 = vmul.f32 %v596, %v601
            %v612 = vmul.f32 %v594, %v603
            %v613 = vadd.f32 %v611, %v612
            %v614 = vmul.f32 %v596, %v602
            %v615 = vmul.f32 %v594, %v604
            %v616 = vadd.f32 %v614, %v615
            %617 = vst [vmem:[%s597] sm:$0x1f] %v607
            %618 = vst [vmem:[%s598] sm:$0x1f] %v610
            %619 = vst [vmem:[%s599] sm:$0x1f] %v613
            %620 = vst [vmem:[%s600] sm:$0x1f] %v616
            %s621 = smov [#allocation21]
            %v622 = vld [vmem:[%s621] ss:$0 sm:$0xff]
            %s623 = smov [#allocation22]
            %v624 = vld [vmem:[%s623] ss:$0 sm:$0xff]
            %s625 = smov [#allocation12]
            %s626 = smov [#allocation13]
            %s627 = smov [#allocation14]
            %s628 = smov [#allocation15]
            %v629 = vld [vmem:[%s625] sm:$0x1f]
            %v630 = vld [vmem:[%s626] sm:$0x1f]
            %v631 = vld [vmem:[%s627] sm:$0x1f]
            %v632 = vld [vmem:[%s628] sm:$0x1f]
            %v633 = vmul.f32 %v622, %v629
            %v634 = vmul.f32 %v624, %v630
            %v635 = vsub.f32 %v633, %v634
            %v636 = vmul.f32 %v624, %v629
            %v637 = vmul.f32 %v622, %v630
            %v638 = vadd.f32 %v636, %v637
            %v639 = vmul.f32 %v622, %v631
            %v640 = vmul.f32 %v624, %v632
            %v641 = vsub.f32 %v639, %v640
            %v642 = vmul.f32 %v624, %v631
            %v643 = vmul.f32 %v622, %v632
            %v644 = vadd.f32 %v642, %v643
            %645 = vst [vmem:[%s625] sm:$0x1f] %v635
            %646 = vst [vmem:[%s626] sm:$0x1f] %v638
            %647 = vst [vmem:[%s627] sm:$0x1f] %v641
            %648 = vst [vmem:[%s628] sm:$0x1f] %v644
            %s649 = smov [#allocation12]
            %s650 = smov [#allocation19]
            %v651 = vlaneseq
            %v652 = vand.u32 %v651, 127
            %v653 = vmov %v652
            %v654 = vlaneseq
            %v655 = vshrl.u32 %v654, 7
            %v656 = vmov %v655
            %v657 = vld [vmem:[%s650] ss:$0 sm:$0xff]
            %v658 = vld [vmem:[%s649] sm:$0x1f]
            %vm661 = vcmp.eq.s32.totalorder %v656, %v653
            %v662 = vsel %vm661, %v657, %v658
            %663 = vst [vmem:[%s649] sm:$0x1f] %v662
            %s664 = smov [#allocation13]
            %v665 = vlaneseq
            %v666 = vand.u32 %v665, 127
            %v667 = vmov %v666
            %v668 = vlaneseq
            %v669 = vshrl.u32 %v668, 7
            %v670 = vmov %v669
            %v671 = vld [vmem:[%s664] sm:$0x1f]
            %vm674 = vcmp.eq.s32.totalorder %v670, %v667
            %v675 = vsel %vm674, 0.0, %v671
            %676 = vst [vmem:[%s664] sm:$0x1f] %v675
            %s677 = smov [#allocation14]
            %v678 = vlaneseq
            %v679 = vand.u32 %v678, 127
            %v680 = vmov %v679
            %v681 = vlaneseq
            %v682 = vshrl.u32 %v681, 7
            %v683 = vmov %v682
            %v684 = vld [vmem:[%s677] sm:$0x1f]
            %vm687 = vcmp.eq.s32.totalorder %v683, %v680
            %v688 = vsel %vm687, 0.0, %v684
            %689 = vst [vmem:[%s677] sm:$0x1f] %v688
            %s690 = smov [#allocation15]
            %s691 = smov [#allocation20]
            %v692 = vlaneseq
            %v693 = vand.u32 %v692, 127
            %v694 = vmov %v693
            %v695 = vlaneseq
            %v696 = vshrl.u32 %v695, 7
            %v697 = vmov %v696
            %v698 = vld [vmem:[%s691] ss:$0 sm:$0xff]
            %v699 = vld [vmem:[%s690] sm:$0x1f]
            %vm702 = vcmp.eq.s32.totalorder %v697, %v694
            %v703 = vsel %vm702, %v698, %v699
            %704 = vst [vmem:[%s690] sm:$0x1f] %v703
            %s705 = smov [#allocation12]
            %s706 = smov [#allocation13]
            %v707 = vld [vmem:[%s706] sm:$0x1f]
            %708 = vrot.lane.b32.xlu0 %v707, 1
            %v709 = vpop.permute.xlu0 %708
            %v710 = vld [vmem:[%s705] sm:$0x1f]
            %v711 = vld [vmem:[%s705] sm:$0x1f]
            %712 = vrot.lane.b32.xlu0 %v711, 1
            %v713 = vpop.permute.xlu0 %712
            %v714 = vlaneseq
            %v715 = vand.u32 %v714, 127
            %vm716 = vcmp.eq.s32.totalorder %v715, 0
            %v717 = vsel %vm716, %v711, %v713
            %v718 = vlaneseq
            %v719 = vand.u32 %v718, 127
            %vm720 = vcmp.eq.s32.totalorder %v719, 1
            %v721 = vsel %vm720, %v709, %v717
            %v722 = vlaneseq
            %v723 = vand.u32 %v722, 127
            %vm724 = vcmp.ge.s32.totalorder %v723, 0
            %vm725 = vcmp.lt.s32.totalorder %v723, 5
            %vm726 = vmand %vm724, %vm725
            %v727 = vsel %vm726, %v721, 0.0
            %v728 = vld [vmem:[%s706] sm:$0x1f]
            %729 = vrot.lane.b32.xlu0 %v728, 127
            %v730 = vpop.permute.xlu0 %729
            %v731 = vlaneseq
            %v732 = vand.u32 %v731, 127
            %vm733 = vcmp.eq.s32.totalorder %v732, 4
            %v734 = vsel %vm733, %v710, %v730
            %735 = vst [vmem:[%s705] sm:$0x1f] %v727
            %736 = vst [vmem:[%s706] sm:$0x1f] %v734
            %s737 = smov [#allocation14]
            %s738 = smov [#allocation15]
            %v739 = vld [vmem:[%s738] sm:$0x1f]
            %740 = vrot.lane.b32.xlu0 %v739, 1
            %v741 = vpop.permute.xlu0 %740
            %v742 = vld [vmem:[%s737] sm:$0x1f]
            %v743 = vld [vmem:[%s737] sm:$0x1f]
            %744 = vrot.lane.b32.xlu0 %v743, 1
            %v745 = vpop.permute.xlu0 %744
            %v746 = vlaneseq
            %v747 = vand.u32 %v746, 127
            %vm748 = vcmp.eq.s32.totalorder %v747, 0
            %v749 = vsel %vm748, %v743, %v745
            %v750 = vlaneseq
            %v751 = vand.u32 %v750, 127
            %vm752 = vcmp.eq.s32.totalorder %v751, 1
            %v753 = vsel %vm752, %v741, %v749
            %v754 = vlaneseq
            %v755 = vand.u32 %v754, 127
            %vm756 = vcmp.ge.s32.totalorder %v755, 0
            %vm757 = vcmp.lt.s32.totalorder %v755, 5
            %vm758 = vmand %vm756, %vm757
            %v759 = vsel %vm758, %v753, 0.0
            %v760 = vld [vmem:[%s738] sm:$0x1f]
            %761 = vrot.lane.b32.xlu0 %v760, 127
            %v762 = vpop.permute.xlu0 %761
            %v763 = vlaneseq
            %v764 = vand.u32 %v763, 127
            %vm765 = vcmp.eq.s32.totalorder %v764, 4
            %v766 = vsel %vm765, %v742, %v762
            %767 = vst [vmem:[%s737] sm:$0x1f] %v759
            %768 = vst [vmem:[%s738] sm:$0x1f] %v766
            %s769 = smov [#allocation12]
            %s770 = smov [#allocation14]
            %v771 = vld [vmem:[%s769] ss:$0 sm:$0xff]
            %s773 = scalar_lea.vmem %s769, 4294967295
            %v774 = vld [vmem:[%s773] sm:$0x1e]
            %v775 = vlaneseq
            %v776 = vshrl.u32 %v775, 7
            %vm777 = vcmp.eq.s32.totalorder %v776, 0
            %v778 = vsel %vm777, %v771, %v774
            %s779 = scalar_lea.vmem %s769, 4
            %v780 = vld [vmem:[%s779] ss:$0 sm:$0xff]
            %781 = vst [vmem:[%s769] sm:$0x1f] %v778
            %v782 = vld [vmem:[%s770] ss:$0 sm:$0xff]
            %s783 = scalar_lea.vmem %s769, 1
            %784 = vst [vmem:[%s783] sm:$0x1] %v782
            %s785 = scalar_lea.vmem %s770, 1
            %v786 = vld [vmem:[%s785] sm:$0xf]
            %v787 = vlaneseq
            %v788 = vshrl.u32 %v787, 7
            %vm789 = vcmp.eq.s32.totalorder %v788, 4
            %v790 = vsel %vm789, %v780, %v786
            %v791 = vld [vmem:[%s770] ss:$0 sm:$0xff]
            %792 = vst [vmem:[%s770] sm:$0x1f] %v790
            %s793 = smov [#allocation13]
            %s794 = smov [#allocation15]
            %v795 = vld [vmem:[%s793] ss:$0 sm:$0xff]
            %s797 = scalar_lea.vmem %s793, 4294967295
            %v798 = vld [vmem:[%s797] sm:$0x1e]
            %v799 = vlaneseq
            %v800 = vshrl.u32 %v799, 7
            %vm801 = vcmp.eq.s32.totalorder %v800, 0
            %v802 = vsel %vm801, %v795, %v798
            %s803 = scalar_lea.vmem %s793, 4
            %v804 = vld [vmem:[%s803] ss:$0 sm:$0xff]
            %805 = vst [vmem:[%s793] sm:$0x1f] %v802
            %v806 = vld [vmem:[%s794] ss:$0 sm:$0xff]
            %s807 = scalar_lea.vmem %s793, 1
            %808 = vst [vmem:[%s807] sm:$0x1] %v806
            %s809 = scalar_lea.vmem %s794, 1
            %v810 = vld [vmem:[%s809] sm:$0xf]
            %v811 = vlaneseq
            %v812 = vshrl.u32 %v811, 7
            %vm813 = vcmp.eq.s32.totalorder %v812, 4
            %v814 = vsel %vm813, %v804, %v810
            %v815 = vld [vmem:[%s794] ss:$0 sm:$0xff]
            %816 = vst [vmem:[%s794] sm:$0x1f] %v814
            %s817 = smov [#allocation23]
            %v818 = vld [vmem:[%s817] sm:$0xff]
            %s819 = smov [#allocation24]
            %v820 = vld [vmem:[%s819] sm:$0xff]
            %s821 = smov %s293
            %s822 = smov %s297
            %s823 = smov %s301
            %s824 = smov %s305
            %v825 = vld [vmem:[%s821] sm:$0x1f]
            %v826 = vld [vmem:[%s822] sm:$0x1f]
            %v827 = vld [vmem:[%s823] sm:$0x1f]
            %v828 = vld [vmem:[%s824] sm:$0x1f]
            %v829 = vmul.f32 %v818, %v825
            %v830 = vmul.f32 %v820, %v827
            %v831 = vsub.f32 %v829, %v830
            %v832 = vmul.f32 %v818, %v826
            %v833 = vmul.f32 %v820, %v828
            %v834 = vsub.f32 %v832, %v833
            %v835 = vmul.f32 %v820, %v825
            %v836 = vmul.f32 %v818, %v827
            %v837 = vadd.f32 %v835, %v836
            %v838 = vmul.f32 %v820, %v826
            %v839 = vmul.f32 %v818, %v828
            %v840 = vadd.f32 %v838, %v839
            %841 = vst [vmem:[%s821] sm:$0x1f] %v831
            %842 = vst [vmem:[%s822] sm:$0x1f] %v834
            %843 = vst [vmem:[%s823] sm:$0x1f] %v837
            %844 = vst [vmem:[%s824] sm:$0x1f] %v840
            %s845 = smov %s293
            %s846 = smov %s301
            %v847 = vld [vmem:[%s845] ss:$0 sm:$0xff]
            %s849 = scalar_lea.vmem %s845, 4294967295
            %v850 = vld [vmem:[%s849] sm:$0x1e]
            %v851 = vlaneseq
            %v852 = vshrl.u32 %v851, 7
            %vm853 = vcmp.eq.s32.totalorder %v852, 0
            %v854 = vsel %vm853, %v847, %v850
            %s855 = scalar_lea.vmem %s845, 4
            %v856 = vld [vmem:[%s855] ss:$0 sm:$0xff]
            %857 = vst [vmem:[%s845] sm:$0x1f] %v854
            %v858 = vld [vmem:[%s846] ss:$0 sm:$0xff]
            %s859 = scalar_lea.vmem %s845, 1
            %860 = vst [vmem:[%s859] sm:$0x1] %v858
            %s861 = scalar_lea.vmem %s846, 1
            %v862 = vld [vmem:[%s861] sm:$0xf]
            %v863 = vlaneseq
            %v864 = vshrl.u32 %v863, 7
            %vm865 = vcmp.eq.s32.totalorder %v864, 4
            %v866 = vsel %vm865, %v856, %v862
            %v867 = vld [vmem:[%s846] ss:$0 sm:$0xff]
            %868 = vst [vmem:[%s846] sm:$0x1f] %v866
            %s869 = smov %s297
            %s870 = smov %s305
            %v871 = vld [vmem:[%s869] ss:$0 sm:$0xff]
            %s873 = scalar_lea.vmem %s869, 4294967295
            %v874 = vld [vmem:[%s873] sm:$0x1e]
            %v875 = vlaneseq
            %v876 = vshrl.u32 %v875, 7
            %vm877 = vcmp.eq.s32.totalorder %v876, 0
            %v878 = vsel %vm877, %v871, %v874
            %s879 = scalar_lea.vmem %s869, 4
            %v880 = vld [vmem:[%s879] ss:$0 sm:$0xff]
            %881 = vst [vmem:[%s869] sm:$0x1f] %v878
            %v882 = vld [vmem:[%s870] ss:$0 sm:$0xff]
            %s883 = scalar_lea.vmem %s869, 1
            %884 = vst [vmem:[%s883] sm:$0x1] %v882
            %s885 = scalar_lea.vmem %s870, 1
            %v886 = vld [vmem:[%s885] sm:$0xf]
            %v887 = vlaneseq
            %v888 = vshrl.u32 %v887, 7
            %vm889 = vcmp.eq.s32.totalorder %v888, 4
            %v890 = vsel %vm889, %v880, %v886
            %v891 = vld [vmem:[%s870] ss:$0 sm:$0xff]
            %892 = vst [vmem:[%s870] sm:$0x1f] %v890
          $region168: #{custom-call.2} parent=160 // loop_footer
            %s453 = sadd.s32 1, %s449
          $region169: #{custom-call.2} parent=160 // loop_footer_branch
            %448 = sbr.rel target = $region165
          $region170: #{custom-call.2} parent=160 // loop_exit
            _
          %s893 = sadd.s32 %s351, 1
        $region161: #{custom-call.2} parent=155 // loop_footer
          _
        $region162: #{custom-call.2} parent=155 // loop_footer_branch
          %350 = sbr.rel target = $region158
        $region163: #{custom-call.2} parent=155 // loop_exit
          _
        %s896 = sand.u32 %s17, 7
        %s897 = scalar_lea.vmem [#allocation4], %s896
        %s898 = sand.u32 %s17, 7
        %s899 = scalar_lea.vmem [#allocation6], %s898
        %s900 = smov [#allocation12]
        %s901 = smov %s897
        %v902 = vlaneseq
        %v903 = vand.u32 %v902, 127
        %v904 = vmov %v903
        %v905 = vlaneseq
        %v906 = vshrl.u32 %v905, 7
        %v907 = vmov %v906
        %v908 = vld [vmem:[%s900] sm:$0x1f]
        %vm911 = vcmp.eq.s32.totalorder %v907, %v904
        %v912 = vsel %vm911, %v908, 0.0
        %v913 = vrot.slane %v912, 4
        %v914 = vadd.f32 %v912, %v913
        %v915 = vrot.slane %v914, 2
        %v916 = vadd.f32 %v914, %v915
        %v917 = vrot.slane %v916, 1
        %v918 = vadd.f32 %v916, %v917
        %919 = vst [vmem:[%s901] sm:$0x1] %v918
        %s920 = smov [#allocation15]
        %s921 = smov %s899
        %v922 = vlaneseq
        %v923 = vand.u32 %v922, 127
        %v924 = vmov %v923
        %v925 = vlaneseq
        %v926 = vshrl.u32 %v925, 7
        %v927 = vmov %v926
        %v928 = vld [vmem:[%s920] sm:$0x1f]
        %vm931 = vcmp.eq.s32.totalorder %v927, %v924
        %v932 = vsel %vm931, %v928, 0.0
        %v933 = vrot.slane %v932, 4
        %v934 = vadd.f32 %v932, %v933
        %v935 = vrot.slane %v934, 2
        %v936 = vadd.f32 %v934, %v935
        %v937 = vrot.slane %v936, 1
        %v938 = vadd.f32 %v936, %v937
        %939 = vst [vmem:[%s921] sm:$0x1] %v938
        %s941 = sshllo.u32 0, 2
        %v943 = vld [vmem:[#allocation4] sm:%s941]
        %s944 = sshllo.u32 0, 2
        %945 = vst [vmem:[%s283] sm:%s944] %v943
        %s947 = sshllo.u32 0, 2
        %v949 = vld [vmem:[#allocation6] sm:%s947]
        %s950 = sshllo.u32 0, 2
        %951 = vst [vmem:[%s289] sm:%s950] %v949
        %s952 = sand.u32 %s27, 1
        %s953 = sand.u32 %s27, 1
        %s954 = smul.addr %s953, 2
        %s955 = scalar_lea.vmem [#allocation5], %s954
        %s956 = sand.u32 %s55, 1
        %s957 = sand.u32 %s55, 1
        %s958 = smul.addr %s957, 2
        %s959 = scalar_lea.vmem [#allocation7], %s958
        %s960 = sand.u32 %s17, 1
        %s961 = sand.u32 %s17, 1
        %s962 = smul.addr %s961, 8
        %s963 = scalar_lea.vmem [#allocation8], %s962
        %s964 = sand.u32 %s17, 1
        %s965 = sand.u32 %s17, 1
        %s966 = smul.addr %s965, 8
        %s967 = scalar_lea.vmem [#allocation9], %s966
        %s968 = sand.u32 %s17, 1
        %s969 = sand.u32 %s17, 1
        %s970 = smul.addr %s969, 8
        %s971 = scalar_lea.vmem [#allocation10], %s970
        %s972 = sand.u32 %s17, 1
        %s973 = sand.u32 %s17, 1
        %s974 = smul.addr %s973, 8
        %s975 = scalar_lea.vmem [#allocation11], %s974
        // Predicated region
        $region171: #{custom-call.2} parent=155 // pred_check
          %p976 = pneg %p37
        $region172: #{custom-call.2} parent=155 // pred_check_branch
          %978 = sbr.rel (%p976) target = $region174
        $region173: #{custom-call.2} parent=155 // pred_region
          %s979 = sshrl.u32 %s17, 3
          %s980 = smul.addr %s979, 2
          %s981 = scalar_lea.vmem %s4, %s980
          // Predicated region
          $region175: #{custom-call.2} parent=173 // pred_check
            _
          $region176: #{custom-call.2} parent=173 // pred_check_branch
            %983 = sbr.rel (0) target = $region178
          $region177: #{custom-call.2} parent=173 // pred_region
            // Predicated region
            $region179: #{custom-call.2} parent=177 // pred_check
              _
            $region180: #{custom-call.2} parent=177 // pred_check_branch
              %985 = sbr.rel target = $region182
            $region181: #{custom-call.2} parent=177 // pred_region
              // Predicated region
              $region194: #{custom-call.2} parent=181 // pred_check
                _
              $region195: #{custom-call.2} parent=181 // pred_check_branch
                %1000 = sbr.rel (0) target = $region197
              $region196: #{custom-call.2} parent=181 // pred_region
                loop: start=0, step=1, limit=1
                $region198: #{custom-call.2} parent=196 // loop_pre_header
                  _
                $region199: #{custom-call.2} parent=196 // loop_header
                  %s1003 = sphi 0, %s1007
                  %p1004 = scmp.ge.s32.totalorder %s1003, 1
                  %s1008 = sphi %s955, %s955
                  %s1009 = sphi %s981, %s981
                $region200: #{custom-call.2} parent=196 // loop_header_branch
                  %1006 = sbr.rel (%p1004) target = $region204
                $region201: #{custom-call.2} parent=196 // loop_body
                  %v1010 = vld [vmem:[%s1008] sm:$0x3]
                  %1011 = vst [vmem:[%s1009] sm:$0x3] %v1010
                $region202: #{custom-call.2} parent=196 // loop_footer
                  %s1007 = sadd.s32 1, %s1003
                $region203: #{custom-call.2} parent=196 // loop_footer_branch
                  %1002 = sbr.rel target = $region199
                $region204: #{custom-call.2} parent=196 // loop_exit
                  _
              $region197: #{custom-call.2} parent=181 // pred_fallthru
                _
            $region182: #{custom-call.2} parent=177 // pred_fallthru
              _
            // Predicated region
            $region183: #{custom-call.2} parent=177 // pred_check
              _
            $region184: #{custom-call.2} parent=177 // pred_check_branch
              %987 = sbr.rel (0) target = $region186
            $region185: #{custom-call.2} parent=177 // pred_region
              loop: start=0, step=1, limit=1
              $region187: #{custom-call.2} parent=185 // loop_pre_header
                _
              $region188: #{custom-call.2} parent=185 // loop_header
                %s990 = sphi 0, %s994
                %p991 = scmp.ge.s32.totalorder %s990, 1
                %s995 = sphi %s955, %s955
                %s996 = sphi %s981, %s981
              $region189: #{custom-call.2} parent=185 // loop_header_branch
                %993 = sbr.rel (%p991) target = $region193
              $region190: #{custom-call.2} parent=185 // loop_body
                %v997 = vld [vmem:[%s995] sm:$0x3]
                %998 = vst [vmem:[%s996] sm:$0x3] %v997
              $region191: #{custom-call.2} parent=185 // loop_footer
                %s994 = sadd.s32 1, %s990
              $region192: #{custom-call.2} parent=185 // loop_footer_branch
                %989 = sbr.rel target = $region188
              $region193: #{custom-call.2} parent=185 // loop_exit
                _
            $region186: #{custom-call.2} parent=177 // pred_fallthru
              _
          $region178: #{custom-call.2} parent=173 // pred_fallthru
            _
          %1012 = vnop
        $region174: #{custom-call.2} parent=155 // pred_fallthru
          _
        // Predicated region
        $region205: #{custom-call.2} parent=155 // pred_check
          %p1013 = pneg %p65
        $region206: #{custom-call.2} parent=155 // pred_check_branch
          %1015 = sbr.rel (%p1013) target = $region208
        $region207: #{custom-call.2} parent=155 // pred_region
          %s1016 = sshrl.u32 %s17, 3
          %s1017 = smul.addr %s1016, 2
          %s1018 = scalar_lea.vmem %s5, %s1017
          // Predicated region
          $region209: #{custom-call.2} parent=207 // pred_check
            _
          $region210: #{custom-call.2} parent=207 // pred_check_branch
            %1020 = sbr.rel (0) target = $region212
          $region211: #{custom-call.2} parent=207 // pred_region
            // Predicated region
            $region213: #{custom-call.2} parent=211 // pred_check
              _
            $region214: #{custom-call.2} parent=211 // pred_check_branch
              %1022 = sbr.rel target = $region216
            $region215: #{custom-call.2} parent=211 // pred_region
              // Predicated region
              $region228: #{custom-call.2} parent=215 // pred_check
                _
              $region229: #{custom-call.2} parent=215 // pred_check_branch
                %1037 = sbr.rel (0) target = $region231
              $region230: #{custom-call.2} parent=215 // pred_region
                loop: start=0, step=1, limit=1
                $region232: #{custom-call.2} parent=230 // loop_pre_header
                  _
                $region233: #{custom-call.2} parent=230 // loop_header
                  %s1040 = sphi 0, %s1044
                  %p1041 = scmp.ge.s32.totalorder %s1040, 1
                  %s1045 = sphi %s959, %s959
                  %s1046 = sphi %s1018, %s1018
                $region234: #{custom-call.2} parent=230 // loop_header_branch
                  %1043 = sbr.rel (%p1041) target = $region238
                $region235: #{custom-call.2} parent=230 // loop_body
                  %v1047 = vld [vmem:[%s1045] sm:$0x3]
                  %1048 = vst [vmem:[%s1046] sm:$0x3] %v1047
                $region236: #{custom-call.2} parent=230 // loop_footer
                  %s1044 = sadd.s32 1, %s1040
                $region237: #{custom-call.2} parent=230 // loop_footer_branch
                  %1039 = sbr.rel target = $region233
                $region238: #{custom-call.2} parent=230 // loop_exit
                  _
              $region231: #{custom-call.2} parent=215 // pred_fallthru
                _
            $region216: #{custom-call.2} parent=211 // pred_fallthru
              _
            // Predicated region
            $region217: #{custom-call.2} parent=211 // pred_check
              _
            $region218: #{custom-call.2} parent=211 // pred_check_branch
              %1024 = sbr.rel (0) target = $region220
            $region219: #{custom-call.2} parent=211 // pred_region
              loop: start=0, step=1, limit=1
              $region221: #{custom-call.2} parent=219 // loop_pre_header
                _
              $region222: #{custom-call.2} parent=219 // loop_header
                %s1027 = sphi 0, %s1031
                %p1028 = scmp.ge.s32.totalorder %s1027, 1
                %s1032 = sphi %s959, %s959
                %s1033 = sphi %s1018, %s1018
              $region223: #{custom-call.2} parent=219 // loop_header_branch
                %1030 = sbr.rel (%p1028) target = $region227
              $region224: #{custom-call.2} parent=219 // loop_body
                %v1034 = vld [vmem:[%s1032] sm:$0x3]
                %1035 = vst [vmem:[%s1033] sm:$0x3] %v1034
              $region225: #{custom-call.2} parent=219 // loop_footer
                %s1031 = sadd.s32 1, %s1027
              $region226: #{custom-call.2} parent=219 // loop_footer_branch
                %1026 = sbr.rel target = $region222
              $region227: #{custom-call.2} parent=219 // loop_exit
                _
            $region220: #{custom-call.2} parent=211 // pred_fallthru
              _
          $region212: #{custom-call.2} parent=207 // pred_fallthru
            _
          %1049 = vnop
        $region208: #{custom-call.2} parent=155 // pred_fallthru
          _
        %s1050 = smul.addr %s17, 8
        %s1051 = scalar_lea.vmem %s6, %s1050
        // Predicated region
        $region239: #{custom-call.2} parent=155 // pred_check
          _
        $region240: #{custom-call.2} parent=155 // pred_check_branch
          %1053 = sbr.rel (0) target = $region242
        $region241: #{custom-call.2} parent=155 // pred_region
          // Predicated region
          $region243: #{custom-call.2} parent=241 // pred_check
            _
          $region244: #{custom-call.2} parent=241 // pred_check_branch
            %1055 = sbr.rel (0) target = $region246
          $region245: #{custom-call.2} parent=241 // pred_region
            // Predicated region
            $region258: #{custom-call.2} parent=245 // pred_check
              _
            $region259: #{custom-call.2} parent=245 // pred_check_branch
              %1070 = sbr.rel (0) target = $region261
            $region260: #{custom-call.2} parent=245 // pred_region
              loop: start=0, step=1, limit=1
              $region262: #{custom-call.2} parent=260 // loop_pre_header
                _
              $region263: #{custom-call.2} parent=260 // loop_header
                %s1072 = sphi 0, %s1076
                %p1073 = scmp.ge.s32.totalorder %s1072, 1
                %s1077 = sphi %s963, %s963
                %s1078 = sphi %s1051, %s1051
              $region264: #{custom-call.2} parent=260 // loop_header_branch
                %1075 = sbr.rel (%p1073) target = $region268
              $region265: #{custom-call.2} parent=260 // loop_body
                %v1079 = vld [vmem:[%s1077] sm:$0xff]
                %1080 = vst [vmem:[%s1078] sm:$0xff] %v1079
              $region266: #{custom-call.2} parent=260 // loop_footer
                %s1076 = sadd.s32 1, %s1072
              $region267: #{custom-call.2} parent=260 // loop_footer_branch
                %1071 = sbr.rel target = $region263
              $region268: #{custom-call.2} parent=260 // loop_exit
                _
            $region261: #{custom-call.2} parent=245 // pred_fallthru
              _
            // Predicated region
            $region269: #{custom-call.2} parent=245 // pred_check
              _
            $region270: #{custom-call.2} parent=245 // pred_check_branch
              %1082 = sbr.rel target = $region272
            $region271: #{custom-call.2} parent=245 // pred_region
              _
            $region272: #{custom-call.2} parent=245 // pred_fallthru
              _
          $region246: #{custom-call.2} parent=241 // pred_fallthru
            _
          // Predicated region
          $region247: #{custom-call.2} parent=241 // pred_check
            _
          $region248: #{custom-call.2} parent=241 // pred_check_branch
            %1057 = sbr.rel target = $region250
          $region249: #{custom-call.2} parent=241 // pred_region
            loop: start=0, step=1, limit=1
            $region251: #{custom-call.2} parent=249 // loop_pre_header
              _
            $region252: #{custom-call.2} parent=249 // loop_header
              %s1060 = sphi 0, %s1064
              %p1061 = scmp.ge.s32.totalorder %s1060, 1
              %s1065 = sphi %s963, %s963
              %s1066 = sphi %s1051, %s1051
            $region253: #{custom-call.2} parent=249 // loop_header_branch
              %1063 = sbr.rel (%p1061) target = $region257
            $region254: #{custom-call.2} parent=249 // loop_body
              %v1067 = vld [vmem:[%s1065] sm:$0xff]
              %1068 = vst [vmem:[%s1066] sm:$0xff] %v1067
            $region255: #{custom-call.2} parent=249 // loop_footer
              %s1064 = sadd.s32 1, %s1060
            $region256: #{custom-call.2} parent=249 // loop_footer_branch
              %1059 = sbr.rel target = $region252
            $region257: #{custom-call.2} parent=249 // loop_exit
              _
          $region250: #{custom-call.2} parent=241 // pred_fallthru
            _
        $region242: #{custom-call.2} parent=155 // pred_fallthru
          _
        %1083 = vnop
        %s1084 = smul.addr %s17, 8
        %s1085 = scalar_lea.vmem %s7, %s1084
        // Predicated region
        $region273: #{custom-call.2} parent=155 // pred_check
          _
        $region274: #{custom-call.2} parent=155 // pred_check_branch
          %1087 = sbr.rel (0) target = $region276
        $region275: #{custom-call.2} parent=155 // pred_region
          // Predicated region
          $region277: #{custom-call.2} parent=275 // pred_check
            _
          $region278: #{custom-call.2} parent=275 // pred_check_branch
            %1089 = sbr.rel (0) target = $region280
          $region279: #{custom-call.2} parent=275 // pred_region
            // Predicated region
            $region292: #{custom-call.2} parent=279 // pred_check
              _
            $region293: #{custom-call.2} parent=279 // pred_check_branch
              %1104 = sbr.rel (0) target = $region295
            $region294: #{custom-call.2} parent=279 // pred_region
              loop: start=0, step=1, limit=1
              $region296: #{custom-call.2} parent=294 // loop_pre_header
                _
              $region297: #{custom-call.2} parent=294 // loop_header
                %s1106 = sphi 0, %s1110
                %p1107 = scmp.ge.s32.totalorder %s1106, 1
                %s1111 = sphi %s967, %s967
                %s1112 = sphi %s1085, %s1085
              $region298: #{custom-call.2} parent=294 // loop_header_branch
                %1109 = sbr.rel (%p1107) target = $region302
              $region299: #{custom-call.2} parent=294 // loop_body
                %v1113 = vld [vmem:[%s1111] sm:$0xff]
                %1114 = vst [vmem:[%s1112] sm:$0xff] %v1113
              $region300: #{custom-call.2} parent=294 // loop_footer
                %s1110 = sadd.s32 1, %s1106
              $region301: #{custom-call.2} parent=294 // loop_footer_branch
                %1105 = sbr.rel target = $region297
              $region302: #{custom-call.2} parent=294 // loop_exit
                _
            $region295: #{custom-call.2} parent=279 // pred_fallthru
              _
            // Predicated region
            $region303: #{custom-call.2} parent=279 // pred_check
              _
            $region304: #{custom-call.2} parent=279 // pred_check_branch
              %1116 = sbr.rel target = $region306
            $region305: #{custom-call.2} parent=279 // pred_region
              _
            $region306: #{custom-call.2} parent=279 // pred_fallthru
              _
          $region280: #{custom-call.2} parent=275 // pred_fallthru
            _
          // Predicated region
          $region281: #{custom-call.2} parent=275 // pred_check
            _
          $region282: #{custom-call.2} parent=275 // pred_check_branch
            %1091 = sbr.rel target = $region284
          $region283: #{custom-call.2} parent=275 // pred_region
            loop: start=0, step=1, limit=1
            $region285: #{custom-call.2} parent=283 // loop_pre_header
              _
            $region286: #{custom-call.2} parent=283 // loop_header
              %s1094 = sphi 0, %s1098
              %p1095 = scmp.ge.s32.totalorder %s1094, 1
              %s1099 = sphi %s967, %s967
              %s1100 = sphi %s1085, %s1085
            $region287: #{custom-call.2} parent=283 // loop_header_branch
              %1097 = sbr.rel (%p1095) target = $region291
            $region288: #{custom-call.2} parent=283 // loop_body
              %v1101 = vld [vmem:[%s1099] sm:$0xff]
              %1102 = vst [vmem:[%s1100] sm:$0xff] %v1101
            $region289: #{custom-call.2} parent=283 // loop_footer
              %s1098 = sadd.s32 1, %s1094
            $region290: #{custom-call.2} parent=283 // loop_footer_branch
              %1093 = sbr.rel target = $region286
            $region291: #{custom-call.2} parent=283 // loop_exit
              _
          $region284: #{custom-call.2} parent=275 // pred_fallthru
            _
        $region276: #{custom-call.2} parent=155 // pred_fallthru
          _
        %1117 = vnop
        %s1118 = smul.addr %s17, 8
        %s1119 = scalar_lea.vmem %s8, %s1118
        // Predicated region
        $region307: #{custom-call.2} parent=155 // pred_check
          _
        $region308: #{custom-call.2} parent=155 // pred_check_branch
          %1121 = sbr.rel (0) target = $region310
        $region309: #{custom-call.2} parent=155 // pred_region
          // Predicated region
          $region311: #{custom-call.2} parent=309 // pred_check
            _
          $region312: #{custom-call.2} parent=309 // pred_check_branch
            %1123 = sbr.rel (0) target = $region314
          $region313: #{custom-call.2} parent=309 // pred_region
            // Predicated region
            $region326: #{custom-call.2} parent=313 // pred_check
              _
            $region327: #{custom-call.2} parent=313 // pred_check_branch
              %1138 = sbr.rel (0) target = $region329
            $region328: #{custom-call.2} parent=313 // pred_region
              loop: start=0, step=1, limit=1
              $region330: #{custom-call.2} parent=328 // loop_pre_header
                _
              $region331: #{custom-call.2} parent=328 // loop_header
                %s1140 = sphi 0, %s1144
                %p1141 = scmp.ge.s32.totalorder %s1140, 1
                %s1145 = sphi %s971, %s971
                %s1146 = sphi %s1119, %s1119
              $region332: #{custom-call.2} parent=328 // loop_header_branch
                %1143 = sbr.rel (%p1141) target = $region336
              $region333: #{custom-call.2} parent=328 // loop_body
                %v1147 = vld [vmem:[%s1145] sm:$0xff]
                %1148 = vst [vmem:[%s1146] sm:$0xff] %v1147
              $region334: #{custom-call.2} parent=328 // loop_footer
                %s1144 = sadd.s32 1, %s1140
              $region335: #{custom-call.2} parent=328 // loop_footer_branch
                %1139 = sbr.rel target = $region331
              $region336: #{custom-call.2} parent=328 // loop_exit
                _
            $region329: #{custom-call.2} parent=313 // pred_fallthru
              _
            // Predicated region
            $region337: #{custom-call.2} parent=313 // pred_check
              _
            $region338: #{custom-call.2} parent=313 // pred_check_branch
              %1150 = sbr.rel target = $region340
            $region339: #{custom-call.2} parent=313 // pred_region
              _
            $region340: #{custom-call.2} parent=313 // pred_fallthru
              _
          $region314: #{custom-call.2} parent=309 // pred_fallthru
            _
          // Predicated region
          $region315: #{custom-call.2} parent=309 // pred_check
            _
          $region316: #{custom-call.2} parent=309 // pred_check_branch
            %1125 = sbr.rel target = $region318
          $region317: #{custom-call.2} parent=309 // pred_region
            loop: start=0, step=1, limit=1
            $region319: #{custom-call.2} parent=317 // loop_pre_header
              _
            $region320: #{custom-call.2} parent=317 // loop_header
              %s1128 = sphi 0, %s1132
              %p1129 = scmp.ge.s32.totalorder %s1128, 1
              %s1133 = sphi %s971, %s971
              %s1134 = sphi %s1119, %s1119
            $region321: #{custom-call.2} parent=317 // loop_header_branch
              %1131 = sbr.rel (%p1129) target = $region325
            $region322: #{custom-call.2} parent=317 // loop_body
              %v1135 = vld [vmem:[%s1133] sm:$0xff]
              %1136 = vst [vmem:[%s1134] sm:$0xff] %v1135
            $region323: #{custom-call.2} parent=317 // loop_footer
              %s1132 = sadd.s32 1, %s1128
            $region324: #{custom-call.2} parent=317 // loop_footer_branch
              %1127 = sbr.rel target = $region320
            $region325: #{custom-call.2} parent=317 // loop_exit
              _
          $region318: #{custom-call.2} parent=309 // pred_fallthru
            _
        $region310: #{custom-call.2} parent=155 // pred_fallthru
          _
        %1151 = vnop
        %s1152 = smul.addr %s17, 8
        %s1153 = scalar_lea.vmem %s9, %s1152
        // Predicated region
        $region341: #{custom-call.2} parent=155 // pred_check
          _
        $region342: #{custom-call.2} parent=155 // pred_check_branch
          %1155 = sbr.rel (0) target = $region344
        $region343: #{custom-call.2} parent=155 // pred_region
          // Predicated region
          $region345: #{custom-call.2} parent=343 // pred_check
            _
          $region346: #{custom-call.2} parent=343 // pred_check_branch
            %1157 = sbr.rel (0) target = $region348
          $region347: #{custom-call.2} parent=343 // pred_region
            // Predicated region
            $region360: #{custom-call.2} parent=347 // pred_check
              _
            $region361: #{custom-call.2} parent=347 // pred_check_branch
              %1172 = sbr.rel (0) target = $region363
            $region362: #{custom-call.2} parent=347 // pred_region
              loop: start=0, step=1, limit=1
              $region364: #{custom-call.2} parent=362 // loop_pre_header
                _
              $region365: #{custom-call.2} parent=362 // loop_header
                %s1174 = sphi 0, %s1178
                %p1175 = scmp.ge.s32.totalorder %s1174, 1
                %s1179 = sphi %s975, %s975
                %s1180 = sphi %s1153, %s1153
              $region366: #{custom-call.2} parent=362 // loop_header_branch
                %1177 = sbr.rel (%p1175) target = $region370
              $region367: #{custom-call.2} parent=362 // loop_body
                %v1181 = vld [vmem:[%s1179] sm:$0xff]
                %1182 = vst [vmem:[%s1180] sm:$0xff] %v1181
              $region368: #{custom-call.2} parent=362 // loop_footer
                %s1178 = sadd.s32 1, %s1174
              $region369: #{custom-call.2} parent=362 // loop_footer_branch
                %1173 = sbr.rel target = $region365
              $region370: #{custom-call.2} parent=362 // loop_exit
                _
            $region363: #{custom-call.2} parent=347 // pred_fallthru
              _
            // Predicated region
            $region371: #{custom-call.2} parent=347 // pred_check
              _
            $region372: #{custom-call.2} parent=347 // pred_check_branch
              %1184 = sbr.rel target = $region374
            $region373: #{custom-call.2} parent=347 // pred_region
              _
            $region374: #{custom-call.2} parent=347 // pred_fallthru
              _
          $region348: #{custom-call.2} parent=343 // pred_fallthru
            _
          // Predicated region
          $region349: #{custom-call.2} parent=343 // pred_check
            _
          $region350: #{custom-call.2} parent=343 // pred_check_branch
            %1159 = sbr.rel target = $region352
          $region351: #{custom-call.2} parent=343 // pred_region
            loop: start=0, step=1, limit=1
            $region353: #{custom-call.2} parent=351 // loop_pre_header
              _
            $region354: #{custom-call.2} parent=351 // loop_header
              %s1162 = sphi 0, %s1166
              %p1163 = scmp.ge.s32.totalorder %s1162, 1
              %s1167 = sphi %s975, %s975
              %s1168 = sphi %s1153, %s1153
            $region355: #{custom-call.2} parent=351 // loop_header_branch
              %1165 = sbr.rel (%p1163) target = $region359
            $region356: #{custom-call.2} parent=351 // loop_body
              %v1169 = vld [vmem:[%s1167] sm:$0xff]
              %1170 = vst [vmem:[%s1168] sm:$0xff] %v1169
            $region357: #{custom-call.2} parent=351 // loop_footer
              %s1166 = sadd.s32 1, %s1162
            $region358: #{custom-call.2} parent=351 // loop_footer_branch
              %1161 = sbr.rel target = $region354
            $region359: #{custom-call.2} parent=351 // loop_exit
              _
          $region352: #{custom-call.2} parent=343 // pred_fallthru
            _
        $region344: #{custom-call.2} parent=155 // pred_fallthru
          _
        %1185 = vnop
      $region156: #{custom-call.2} parent=5 // pred_fallthru
        _
      %p1186 = scmp.le.s32.totalorder 2, %s12
      // Predicated region
      $region375: #{custom-call.2} parent=5 // pred_check
        %p1187 = pneg %p1186
      $region376: #{custom-call.2} parent=5 // pred_check_branch
        %1189 = sbr.rel (%p1187) target = $region378
      $region377: #{custom-call.2} parent=5 // pred_region
        %s1190 = ssub.s32 %s12, 2
        // Predicated region
        $region379: #{custom-call.2} parent=377 // pred_check
          %p1191 = pneg %p43
        $region380: #{custom-call.2} parent=377 // pred_check_branch
          %1193 = sbr.rel (%p1191) target = $region382
        $region381: #{custom-call.2} parent=377 // pred_region
          %s1194 = sand.u32 %s28, 1
          %s1195 = sand.u32 %s28, 1
          %s1196 = smul.addr %s1195, 2
          %s1197 = scalar_lea.vmem [#allocation5], %s1196
        $region382: #{custom-call.2} parent=377 // pred_fallthru
          _
        // Predicated region
        $region383: #{custom-call.2} parent=377 // pred_check
          %p1198 = pneg %p71
        $region384: #{custom-call.2} parent=377 // pred_check_branch
          %1200 = sbr.rel (%p1198) target = $region386
        $region385: #{custom-call.2} parent=377 // pred_region
          %s1201 = sand.u32 %s56, 1
          %s1202 = sand.u32 %s56, 1
          %s1203 = smul.addr %s1202, 2
          %s1204 = scalar_lea.vmem [#allocation7], %s1203
        $region386: #{custom-call.2} parent=377 // pred_fallthru
          _
        %s1205 = sand.u32 %s18, 1
        %s1206 = sand.u32 %s18, 1
        %s1207 = smul.addr %s1206, 8
        %s1208 = scalar_lea.vmem [#allocation8], %s1207
        %s1209 = sand.u32 %s18, 1
        %s1210 = sand.u32 %s18, 1
        %s1211 = smul.addr %s1210, 8
        %s1212 = scalar_lea.vmem [#allocation9], %s1211
        %s1213 = sand.u32 %s18, 1
        %s1214 = sand.u32 %s18, 1
        %s1215 = smul.addr %s1214, 8
        %s1216 = scalar_lea.vmem [#allocation10], %s1215
        %s1217 = sand.u32 %s18, 1
        %s1218 = sand.u32 %s18, 1
        %s1219 = smul.addr %s1218, 8
        %s1220 = scalar_lea.vmem [#allocation11], %s1219
      $region378: #{custom-call.2} parent=5 // pred_fallthru
        _
    $region6: #{custom-call.2} parent=1 // loop_footer
      %s16 = sadd.s32 1, %s12
    $region7: #{custom-call.2} parent=1 // loop_footer_branch
      %11 = sbr.rel target = $region3
    $region8: #{custom-call.2} parent=1 // loop_exit
      _

// kernel: net_forward.3
$region0: #{net_forward.3}
  #allocation0 [shape = 'u32[]', space=smem, size = 0x4, offset = 0x4, fixed_abs, tag = 'smem constant byte address 0x4 - core index']
  #allocation1 [shape = 'u32[144,128]{1,0:T(1,128)}', space=vmem, size = 0x12000, scoped, tag = 'internal scratch']
  %s0 = inlined_call_operand.vmem [shape: f32[2,128], index: 0, kind: input, shape index: {}]
  %s1 = inlined_call_operand.vmem [shape: bf16[128,128], index: 1, kind: input, shape index: {}]
  %s2 = inlined_call_operand.vmem [shape: f32[1,128], index: 2, kind: input, shape index: {}]
  %s3 = inlined_call_operand.vmem [shape: bf16[128,5], index: 3, kind: input, shape index: {}]
  %s4 = inlined_call_operand.vmem [shape: f32[1,5], index: 4, kind: input, shape index: {}]
  %s5 = inlined_call_operand.hbm [shape: f32[2,5], index: 5, kind: output, shape index: {}]
  %s6 = sld [smem:[#allocation0]]
  $region30: #{net_forward.3} parent=0
    _
  %s8 = ssub.s32 1, %s6
  %s9 = scalar_select 0, %s8, %s6
  $region1: #{net_forward.3} parent=0
    #allocation2 [shape = 'u8[1024]{0}', space=vmem, size = 0x400, scoped, tag = 'output window, operand 0, single buffered']
    #allocation3 [shape = 's32[1]{0}', space=sflag, size = 0x4, scoped, tag = 'scoped memory for net_forward.3']
    %10 = vsyncpa [#allocation3], 0
    // Predicated region
    $region2: #{net_forward.3} parent=1 // pred_check
      _
    $region3: #{net_forward.3} parent=1 // pred_check_branch
      %12 = sbr.rel (0) target = $region5
    $region4: #{net_forward.3} parent=1 // pred_region
      _
    $region5: #{net_forward.3} parent=1 // pred_fallthru
      _
    // Predicated region
    $region6: #{net_forward.3} parent=1 // pred_check
      _
    $region7: #{net_forward.3} parent=1 // pred_check_branch
      %14 = sbr.rel (0) target = $region9
    $region8: #{net_forward.3} parent=1 // pred_region
      _
    $region9: #{net_forward.3} parent=1 // pred_fallthru
      _
    // Predicated region
    $region10: #{net_forward.3} parent=1 // pred_check
      _
    $region11: #{net_forward.3} parent=1 // pred_check_branch
      %16 = sbr.rel (0) target = $region13
    $region12: #{net_forward.3} parent=1 // pred_region
      _
    $region13: #{net_forward.3} parent=1 // pred_fallthru
      _
    // Predicated region
    $region14: #{net_forward.3} parent=1 // pred_check
      _
    $region15: #{net_forward.3} parent=1 // pred_check_branch
      %18 = sbr.rel (0) target = $region17
    $region16: #{net_forward.3} parent=1 // pred_region
      _
    $region17: #{net_forward.3} parent=1 // pred_fallthru
      _
    // Predicated region
    $region18: #{net_forward.3} parent=1 // pred_check
      _
    $region19: #{net_forward.3} parent=1 // pred_check_branch
      %20 = sbr.rel (0) target = $region21
    $region20: #{net_forward.3} parent=1 // pred_region
      _
    $region21: #{net_forward.3} parent=1 // pred_fallthru
      _
    %v22 = vld [vmem:[%s0] sm:$0x3]
    %v23 = vmul.f32 %v22, %v22
    %vm24 = vcmask 1041408
    %v25 = vsel %vm24, %v23, 0.0
    %26 = vadd.xlane.f32.xlu0 %v25
    %v27 = vpop.xlane.xlu0 %26
    %v28 = vmax.f32 %v27, 1e-24
    %v29 = vrsqrt.pop %v28
    %v30 = vmul.f32 %v22, %v29
    %v31 = vpack.c.bf16 %v30, %v30
    %v32 = vld [vmem:[%s1] sm:$0xf]
    %v33 = vld [vmem:[%s1 + $0x4] sm:$0xf]
    %v34 = vld [vmem:[%s1 + $0x8] sm:$0xf]
    %v35 = vld [vmem:[%s1 + $0xc] sm:$0xf]
    %v36 = vld [vmem:[%s1 + $0x10] sm:$0xf]
    %v37 = vld [vmem:[%s1 + $0x14] sm:$0xf]
    %v38 = vld [vmem:[%s1 + $0x18] sm:$0xf]
    %v39 = vld [vmem:[%s1 + $0x1c] sm:$0xf]
    %v40 = vld [vmem:[%s1 + $0x20] sm:$0xf]
    %v41 = vld [vmem:[%s1 + $0x24] sm:$0xf]
    %v42 = vld [vmem:[%s1 + $0x28] sm:$0xf]
    %v43 = vld [vmem:[%s1 + $0x2c] sm:$0xf]
    %v44 = vld [vmem:[%s1 + $0x30] sm:$0xf]
    %v45 = vld [vmem:[%s1 + $0x34] sm:$0xf]
    %v46 = vld [vmem:[%s1 + $0x38] sm:$0xf]
    %v47 = vld [vmem:[%s1 + $0x3c] sm:$0xf]
    %v48 = vld [vmem:[%s2] sm:$0x1]
    %v50 = vlaneseq
    %v51 = vshrl.u32 %v50, 7
    %v52 = vsub.s32 0, %v51
    %v53 = vrot.slane %v48, %v52
    %v71 = vunpack.c.l.b16 %v32
    %v72 = vunpack.c.l.b16 %v33
    %v73 = vunpack.c.l.b16 %v34
    %v74 = vunpack.c.l.b16 %v35
    %v75 = vunpack.c.l.b16 %v36
    %v76 = vunpack.c.l.b16 %v37
    %v77 = vunpack.c.l.b16 %v38
    %v78 = vunpack.c.l.b16 %v39
    %v79 = vunpack.c.l.b16 %v40
    %v80 = vunpack.c.l.b16 %v41
    %v81 = vunpack.c.l.b16 %v42
    %v82 = vunpack.c.l.b16 %v43
    %v83 = vunpack.c.l.b16 %v44
    %v84 = vunpack.c.l.b16 %v45
    %v85 = vunpack.c.l.b16 %v46
    %v86 = vunpack.c.l.b16 %v47
    %v87 = vpack.c.b16 %v72, %v71
    %v88 = vpack.c.b16 %v74, %v73
    %v89 = vpack.c.b16 %v76, %v75
    %v90 = vpack.c.b16 %v78, %v77
    %v91 = vpack.c.b16 %v80, %v79
    %v92 = vpack.c.b16 %v82, %v81
    %v93 = vpack.c.b16 %v84, %v83
    %v94 = vpack.c.b16 %v86, %v85
    %103 = vmatprep.subr.bf16.mxu0 0
    %104 = vmatpush1.bf16.msra.mxu0 %v87
    %105 = vmatprep.subr.bf16.mxu0 0
    %106 = vmatpush1.bf16.msra.mxu0 %v88
    %107 = vmatprep.subr.bf16.mxu0 0
    %108 = vmatpush1.bf16.msra.mxu0 %v89
    %109 = vmatprep.subr.bf16.mxu0 0
    %110 = vmatpush1.bf16.msra.mxu0 %v90
    %111 = vmatprep.subr.bf16.mxu0 0
    %112 = vmatpush1.bf16.msra.mxu0 %v91
    %113 = vmatprep.subr.bf16.mxu0 0
    %114 = vmatpush1.bf16.msra.mxu0 %v92
    %115 = vmatprep.subr.bf16.mxu0 0
    %116 = vmatpush1.bf16.msra.mxu0 %v93
    %117 = vmatprep.subr.bf16.mxu0 0
    %118 = vmatpush1.bf16.msra.mxu0 %v94
    %119 = vmatprep.subr.bf16.mxu0 0
    %120 = vmatpush1.bf16.msra.mxu0 0
    %121 = vmatprep.subr.bf16.mxu0 0
    %122 = vmatpush1.bf16.msra.mxu0 0
    %123 = vmatprep.subr.bf16.mxu0 0
    %124 = vmatpush1.bf16.msra.mxu0 0
    %125 = vmatprep.subr.bf16.mxu0 0
    %126 = vmatpush1.bf16.msra.mxu0 0
    %127 = vmatprep.subr.bf16.mxu0 0
    %128 = vmatpush1.bf16.msra.mxu0 0
    %129 = vmatprep.subr.bf16.mxu0 0
    %130 = vmatpush1.bf16.msra.mxu0 0
    %131 = vmatprep.subr.bf16.mxu0 0
    %132 = vmatpush1.bf16.msra.mxu0 0
    %133 = vmatprep.subr.bf16.mxu0 0
    %134 = vmatpush1.bf16.msra.mxu0 0
    %135 = vmatprep.mubr.bf16.mxu0 0
    %136 = vmatmul.mubr.bf16.gmra.mrb[0].mxu0 %v31
    %v137 = vpop.f32.mrb[0].mxu0
    %v138 = vadd.f32 %v53, %v137
    %v139 = vpop.f32.mrb[0].mxu0
    %v140 = vpop.f32.mrb[0].mxu0
    %v141 = vpop.f32.mrb[0].mxu0
    %142 = vdwg.mxu0
    %v143 = vpack.c.bf16 %v138, %v138
    %v144 = vld [vmem:[%s3] sm:$0xf]
    %v145 = vld [vmem:[%s3 + $0x4] sm:$0xf]
    %v146 = vld [vmem:[%s3 + $0x8] sm:$0xf]
    %v147 = vld [vmem:[%s3 + $0xc] sm:$0xf]
    %v148 = vld [vmem:[%s3 + $0x10] sm:$0xf]
    %v149 = vld [vmem:[%s3 + $0x14] sm:$0xf]
    %v150 = vld [vmem:[%s3 + $0x18] sm:$0xf]
    %v151 = vld [vmem:[%s3 + $0x1c] sm:$0xf]
    %v152 = vld [vmem:[%s3 + $0x20] sm:$0xf]
    %v153 = vld [vmem:[%s3 + $0x24] sm:$0xf]
    %v154 = vld [vmem:[%s3 + $0x28] sm:$0xf]
    %v155 = vld [vmem:[%s3 + $0x2c] sm:$0xf]
    %v156 = vld [vmem:[%s3 + $0x30] sm:$0xf]
    %v157 = vld [vmem:[%s3 + $0x34] sm:$0xf]
    %v158 = vld [vmem:[%s3 + $0x38] sm:$0xf]
    %v159 = vld [vmem:[%s3 + $0x3c] sm:$0xf]
    %v160 = vld [vmem:[%s4] sm:$0x1]
    %v162 = vlaneseq
    %v163 = vshrl.u32 %v162, 7
    %v164 = vsub.s32 0, %v163
    %v165 = vrot.slane %v160, %v164
    %v183 = vunpack.c.l.b16 %v144
    %v184 = vunpack.c.l.b16 %v145
    %v185 = vunpack.c.l.b16 %v146
    %v186 = vunpack.c.l.b16 %v147
    %v187 = vunpack.c.l.b16 %v148
    %v188 = vunpack.c.l.b16 %v149
    %v189 = vunpack.c.l.b16 %v150
    %v190 = vunpack.c.l.b16 %v151
    %v191 = vunpack.c.l.b16 %v152
    %v192 = vunpack.c.l.b16 %v153
    %v193 = vunpack.c.l.b16 %v154
    %v194 = vunpack.c.l.b16 %v155
    %v195 = vunpack.c.l.b16 %v156
    %v196 = vunpack.c.l.b16 %v157
    %v197 = vunpack.c.l.b16 %v158
    %v198 = vunpack.c.l.b16 %v159
    %v199 = vpack.c.b16 %v184, %v183
    %v200 = vpack.c.b16 %v186, %v185
    %v201 = vpack.c.b16 %v188, %v187
    %v202 = vpack.c.b16 %v190, %v189
    %v203 = vpack.c.b16 %v192, %v191
    %v204 = vpack.c.b16 %v194, %v193
    %v205 = vpack.c.b16 %v196, %v195
    %v206 = vpack.c.b16 %v198, %v197
    %215 = vmatprep.subr.bf16.mxu0 0
    %216 = vmatpush1.bf16.msra.mxu0 %v199
    %217 = vmatprep.subr.bf16.mxu0 0
    %218 = vmatpush1.bf16.msra.mxu0 %v200
    %219 = vmatprep.subr.bf16.mxu0 0
    %220 = vmatpush1.bf16.msra.mxu0 %v201
    %221 = vmatprep.subr.bf16.mxu0 0
    %222 = vmatpush1.bf16.msra.mxu0 %v202
    %223 = vmatprep.subr.bf16.mxu0 0
    %224 = vmatpush1.bf16.msra.mxu0 %v203
    %225 = vmatprep.subr.bf16.mxu0 0
    %226 = vmatpush1.bf16.msra.mxu0 %v204
    %227 = vmatprep.subr.bf16.mxu0 0
    %228 = vmatpush1.bf16.msra.mxu0 %v205
    %229 = vmatprep.subr.bf16.mxu0 0
    %230 = vmatpush1.bf16.msra.mxu0 %v206
    %231 = vmatprep.subr.bf16.mxu0 0
    %232 = vmatpush1.bf16.msra.mxu0 0
    %233 = vmatprep.subr.bf16.mxu0 0
    %234 = vmatpush1.bf16.msra.mxu0 0
    %235 = vmatprep.subr.bf16.mxu0 0
    %236 = vmatpush1.bf16.msra.mxu0 0
    %237 = vmatprep.subr.bf16.mxu0 0
    %238 = vmatpush1.bf16.msra.mxu0 0
    %239 = vmatprep.subr.bf16.mxu0 0
    %240 = vmatpush1.bf16.msra.mxu0 0
    %241 = vmatprep.subr.bf16.mxu0 0
    %242 = vmatpush1.bf16.msra.mxu0 0
    %243 = vmatprep.subr.bf16.mxu0 0
    %244 = vmatpush1.bf16.msra.mxu0 0
    %245 = vmatprep.subr.bf16.mxu0 0
    %246 = vmatpush1.bf16.msra.mxu0 0
    %247 = vmatprep.mubr.bf16.mxu0 0
    %248 = vmatmul.mubr.bf16.gmra.mrb[0].mxu0 %v143
    %v249 = vpop.f32.mrb[0].mxu0
    %v250 = vadd.f32 %v165, %v249
    %v251 = vpop.f32.mrb[0].mxu0
    %v252 = vpop.f32.mrb[0].mxu0
    %v253 = vpop.f32.mrb[0].mxu0
    %254 = vdwg.mxu0
    %vm255 = vcmask 33792
    %v256 = vsel %vm255, %v250, -inf
    %257 = vmax.xlane.f32.xlu0 %v256
    %v258 = vpop.xlane.xlu0 %257
    %v259 = vsub.f32 %v250, %v258
    %v260 = vmul.f32 %v259, 1.442695
    %v261 = vpow.pop %v260
    %v262 = vsel %vm255, %v261, 0.0
    %263 = vadd.xlane.f32.xlu0 %v262
    %v264 = vpop.xlane.xlu0 %263
    %v265 = vrcp.pop %v264
    %v266 = vmul.f32 %v261, %v265
    %267 = vst.msk [vmem:[#allocation2] sm:$0x3] %vm255, %v266
    // Predicated region
    $region22: #{net_forward.3} parent=1 // pred_check
      _
    $region23: #{net_forward.3} parent=1 // pred_check_branch
      %269 = sbr.rel (0) target = $region25
    $region24: #{net_forward.3} parent=1 // pred_region
      %s271 = ssub.s32 32, 32
      %272 = vsyncadd [#allocation3], %s271
      %s274 = sshll.u32 [#allocation2], 4
      %s275 = int_to_ptr.vmem [resolvable:$true] %s274
      %277 = dma.vmem_to_hbm [thread:$0]  %s275, 32, %s5, [#allocation3]
    $region25: #{net_forward.3} parent=1 // pred_fallthru
      _
    // Predicated region
    $region26: #{net_forward.3} parent=1 // pred_check
      _
    $region27: #{net_forward.3} parent=1 // pred_check_branch
      %279 = sbr.rel (0) target = $region29
    $region28: #{net_forward.3} parent=1 // pred_region
      %280 = dma.done [#allocation3], 32
    $region29: #{net_forward.3} parent=1 // pred_fallthru
      _
    %281 = vsyncpa [#allocation3], 1

// kernel: net_forward.2
$region0: #{net_forward.2}
  #allocation0 [shape = 'u32[]', space=smem, size = 0x4, offset = 0x4, fixed_abs, tag = 'smem constant byte address 0x4 - core index']
  #allocation1 [shape = 'u32[144,128]{1,0:T(1,128)}', space=vmem, size = 0x12000, scoped, tag = 'internal scratch']
  #allocation2 [shape = 'f32[8,128]{1,0:T(8,128)}', space=vmem, size = 0x1000, scoped, tag = 'scratch operand']
  %s0 = inlined_call_operand.vmem [shape: f32[48,64], index: 0, kind: input, shape index: {}]
  %s1 = inlined_call_operand.vmem [shape: f32[48,64], index: 1, kind: input, shape index: {}]
  %s2 = inlined_call_operand.hbm [shape: f32[9,32,1], index: 2, kind: input, shape index: {}]
  %s3 = inlined_call_operand.vmem [shape: bf16[576,128], index: 3, kind: input, shape index: {}]
  %s4 = inlined_call_operand.vmem [shape: f32[3,1,128], index: 4, kind: input, shape index: {}]
  %s5 = inlined_call_operand.hbm [shape: bf16[512,128], index: 5, kind: input, shape index: {}]
  %s6 = inlined_call_operand.vmem [shape: f32[3,1,128], index: 6, kind: input, shape index: {}]
  %s7 = inlined_call_operand.hbm [shape: bf16[512,128], index: 7, kind: input, shape index: {}]
  %s8 = inlined_call_operand.vmem [shape: f32[3,1,128], index: 8, kind: input, shape index: {}]
  %s9 = inlined_call_operand.hbm [shape: bf16[576,128], index: 9, kind: input, shape index: {}]
  %s10 = inlined_call_operand.vmem [shape: f32[3,1,128], index: 10, kind: input, shape index: {}]
  %s11 = inlined_call_operand.hbm [shape: f32[32,128], index: 11, kind: output, shape index: {0}]
  %s12 = inlined_call_operand.hbm [shape: f32[2,128], index: 12, kind: output, shape index: {1}]
  %s13 = inlined_call_operand.vmem [shape: f32[2,128,128], index: 13, kind: output, shape index: {2}]
  %s14 = inlined_call_operand.hbm [shape: f32[2,128,128], index: 14, kind: output, shape index: {3}]
  %15 = xla_tuple %s11, %s12, %s13, %s14
  %s16 = sld [smem:[#allocation0]]
  $region94: #{net_forward.2} parent=0
    _
  %s18 = ssub.s32 1, %s16
  %s19 = scalar_select 0, %s18, %s16
  $region1: #{net_forward.2} parent=0
    #allocation3 [shape = 'u8[147456]{0}', space=vmem, size = 0x24000, scoped, tag = 'input window, operand 2, single buffered']
    #allocation4 [shape = 's32[1]{0}', space=sflag, size = 0x4, scoped, tag = 'scoped memory for net_forward.2']
    #allocation5 [shape = 's32[1]{0}', space=sflag, size = 0x4, scoped, tag = 'scoped memory for net_forward.2']
    #allocation6 [shape = 'u8[131072]{0}', space=vmem, size = 0x20000, scoped, tag = 'input window, operand 5, single buffered']
    #allocation7 [shape = 's32[1]{0}', space=sflag, size = 0x4, scoped, tag = 'scoped memory for net_forward.2']
    #allocation8 [shape = 'u8[131072]{0}', space=vmem, size = 0x20000, scoped, tag = 'input window, operand 7, single buffered']
    #allocation9 [shape = 'u8[147456]{0}', space=vmem, size = 0x24000, scoped, tag = 'input window, operand 9, single buffered']
    #allocation10 [shape = 's32[1]{0}', space=sflag, size = 0x4, scoped, tag = 'scoped memory for net_forward.2']
    #allocation11 [shape = 'u8[16384]{0}', space=vmem, size = 0x4000, scoped, tag = 'output window, operand 0, single buffered']
    #allocation12 [shape = 'u8[1024]{0}', space=vmem, size = 0x400, scoped, tag = 'output window, operand 1, single buffered']
    #allocation13 [shape = 's32[1]{0}', space=sflag, size = 0x4, scoped, tag = 'scoped memory for net_forward.2']
    #allocation14 [shape = 'u8[131072]{0}', space=vmem, size = 0x20000, scoped, tag = 'output window, operand 3, single buffered']
    %20 = vsyncpa [#allocation4], 0
    %21 = vsyncpa [#allocation7], 0
    %22 = vsyncpa [#allocation10], 0
    %23 = vsyncpa [#allocation5], 0
    %24 = vsyncpa [#allocation13], 0
    // Predicated region
    $region2: #{net_forward.2} parent=1 // pred_check
      _
    $region3: #{net_forward.2} parent=1 // pred_check_branch
      %26 = sbr.rel (0) target = $region5
    $region4: #{net_forward.2} parent=1 // pred_region
      _
    $region5: #{net_forward.2} parent=1 // pred_fallthru
      _
    // Predicated region
    $region6: #{net_forward.2} parent=1 // pred_check
      _
    $region7: #{net_forward.2} parent=1 // pred_check_branch
      %28 = sbr.rel (0) target = $region9
    $region8: #{net_forward.2} parent=1 // pred_region
      _
    $region9: #{net_forward.2} parent=1 // pred_fallthru
      _
    // Predicated region
    $region10: #{net_forward.2} parent=1 // pred_check
      _
    $region11: #{net_forward.2} parent=1 // pred_check_branch
      %30 = sbr.rel (0) target = $region13
    $region12: #{net_forward.2} parent=1 // pred_region
      %s32 = ssub.s32 4608, 4608
      %33 = vsyncadd [#allocation4], %s32
      %s34 = sshll.u32 [#allocation3], 4
      %s35 = int_to_ptr.vmem [resolvable:$true] %s34
      %40 = dma.hbm_to_vmem [thread:$0]  %s2, 4608, %s35, [#allocation4], 128, 128, 8
    $region13: #{net_forward.2} parent=1 // pred_fallthru
      _
    // Predicated region
    $region14: #{net_forward.2} parent=1 // pred_check
      _
    $region15: #{net_forward.2} parent=1 // pred_check_branch
      %42 = sbr.rel (0) target = $region17
    $region16: #{net_forward.2} parent=1 // pred_region
      _
    $region17: #{net_forward.2} parent=1 // pred_fallthru
      _
    // Predicated region
    $region18: #{net_forward.2} parent=1 // pred_check
      _
    $region19: #{net_forward.2} parent=1 // pred_check_branch
      %44 = sbr.rel (0) target = $region21
    $region20: #{net_forward.2} parent=1 // pred_region
      _
    $region21: #{net_forward.2} parent=1 // pred_fallthru
      _
    // Predicated region
    $region22: #{net_forward.2} parent=1 // pred_check
      _
    $region23: #{net_forward.2} parent=1 // pred_check_branch
      %46 = sbr.rel (0) target = $region25
    $region24: #{net_forward.2} parent=1 // pred_region
      %s48 = ssub.s32 4096, 4096
      %49 = vsyncadd [#allocation7], %s48
      %s50 = sshll.u32 [#allocation6], 4
      %s51 = int_to_ptr.vmem [resolvable:$true] %s50
      %56 = dma.hbm_to_vmem [thread:$0]  %s5, 4096, %s51, [#allocation7], 64, 64, 4
    $region25: #{net_forward.2} parent=1 // pred_fallthru
      _
    // Predicated region
    $region26: #{net_forward.2} parent=1 // pred_check
      _
    $region27: #{net_forward.2} parent=1 // pred_check_branch
      %58 = sbr.rel (0) target = $region29
    $region28: #{net_forward.2} parent=1 // pred_region
      _
    $region29: #{net_forward.2} parent=1 // pred_fallthru
      _
    // Predicated region
    $region30: #{net_forward.2} parent=1 // pred_check
      _
    $region31: #{net_forward.2} parent=1 // pred_check_branch
      %60 = sbr.rel (0) target = $region33
    $region32: #{net_forward.2} parent=1 // pred_region
      %s62 = ssub.s32 4096, 4096
      %63 = vsyncadd [#allocation7], %s62
      %s64 = sshll.u32 [#allocation8], 4
      %s65 = int_to_ptr.vmem [resolvable:$true] %s64
      %70 = dma.hbm_to_vmem [thread:$0]  %s7, 4096, %s65, [#allocation7], 64, 64, 4
    $region33: #{net_forward.2} parent=1 // pred_fallthru
      _
    // Predicated region
    $region34: #{net_forward.2} parent=1 // pred_check
      _
    $region35: #{net_forward.2} parent=1 // pred_check_branch
      %72 = sbr.rel (0) target = $region37
    $region36: #{net_forward.2} parent=1 // pred_region
      _
    $region37: #{net_forward.2} parent=1 // pred_fallthru
      _
    // Predicated region
    $region38: #{net_forward.2} parent=1 // pred_check
      _
    $region39: #{net_forward.2} parent=1 // pred_check_branch
      %74 = sbr.rel (0) target = $region41
    $region40: #{net_forward.2} parent=1 // pred_region
      %s76 = ssub.s32 4608, 4608
      %77 = vsyncadd [#allocation10], %s76
      %s78 = sshll.u32 [#allocation9], 4
      %s79 = int_to_ptr.vmem [resolvable:$true] %s78
      %84 = dma.hbm_to_vmem [thread:$0]  %s9, 4608, %s79, [#allocation10], 64, 64, 4
    $region41: #{net_forward.2} parent=1 // pred_fallthru
      _
    // Predicated region
    $region42: #{net_forward.2} parent=1 // pred_check
      _
    $region43: #{net_forward.2} parent=1 // pred_check_branch
      %86 = sbr.rel (0) target = $region45
    $region44: #{net_forward.2} parent=1 // pred_region
      _
    $region45: #{net_forward.2} parent=1 // pred_fallthru
      _
    // Predicated region
    $region46: #{net_forward.2} parent=1 // pred_check
      _
    $region47: #{net_forward.2} parent=1 // pred_check_branch
      %88 = sbr.rel (0) target = $region49
    $region48: #{net_forward.2} parent=1 // pred_region
      %89 = dma.done [#allocation4], 4608
    $region49: #{net_forward.2} parent=1 // pred_fallthru
      _
    // Predicated region
    $region50: #{net_forward.2} parent=1 // pred_check
      _
    $region51: #{net_forward.2} parent=1 // pred_check_branch
      %91 = sbr.rel (0) target = $region53
    $region52: #{net_forward.2} parent=1 // pred_region
      %92 = dma.done [#allocation7], 4096
    $region53: #{net_forward.2} parent=1 // pred_fallthru
      _
    // Predicated region
    $region54: #{net_forward.2} parent=1 // pred_check
      _
    $region55: #{net_forward.2} parent=1 // pred_check_branch
      %94 = sbr.rel (0) target = $region57
    $region56: #{net_forward.2} parent=1 // pred_region
      %95 = dma.done [#allocation7], 4096
    $region57: #{net_forward.2} parent=1 // pred_fallthru
      _
    // Predicated region
    $region58: #{net_forward.2} parent=1 // pred_check
      _
    $region59: #{net_forward.2} parent=1 // pred_check_branch
      %97 = sbr.rel (0) target = $region61
    $region60: #{net_forward.2} parent=1 // pred_region
      %98 = dma.done [#allocation10], 4608
    $region61: #{net_forward.2} parent=1 // pred_fallthru
      _
    %v100 = vld [vmem:[%s0 + $0x3] sm:$0xff]
    %v101 = vld [vmem:[%s0 + $0xb] sm:$0xff]
    %v102 = vld [vmem:[%s0 + $0x13] sm:$0xff]
    %v103 = vld [vmem:[%s0 + $0x1b] sm:$0xff]
    %v104 = vld [vmem:[#allocation3] sm:$0xff]
    %v105 = vld [vmem:[#allocation3 + $0x8] sm:$0xff]
    %v106 = vld [vmem:[#allocation3 + $0x10] sm:$0xff]
    %v107 = vld [vmem:[#allocation3 + $0x18] sm:$0xff]
    %109 = vset.pattern.permute.xlu0 0
    %110 = vperm.xlu0 %109, %v104
    %v111 = vpop.permute.xlu0 %110
    %114 = vset.pattern.permute.xlu0 0
    %115 = vperm.xlu0 %114, %v105
    %v116 = vpop.permute.xlu0 %115
    %119 = vset.pattern.permute.xlu0 0
    %120 = vperm.xlu0 %119, %v106
    %v121 = vpop.permute.xlu0 %120
    %124 = vset.pattern.permute.xlu0 0
    %125 = vperm.xlu0 %124, %v107
    %v126 = vpop.permute.xlu0 %125
    %v128 = vmul.f32 %v100, %v111
    %v129 = vmul.f32 %v101, %v116
    %v130 = vmul.f32 %v102, %v121
    %v131 = vmul.f32 %v103, %v126
    %v132 = vpack.c.bf16 %v129, %v128
    %v133 = vpack.c.bf16 %v131, %v130
    %v134 = vld [vmem:[%s0 + $0x4] sm:$0xff]
    %v135 = vld [vmem:[%s0 + $0xc] sm:$0xff]
    %v136 = vld [vmem:[%s0 + $0x14] sm:$0xff]
    %v137 = vld [vmem:[%s0 + $0x1c] sm:$0xff]
    %s138 = scalar_lea.vmem [#allocation3], 32
    %v139 = vld [vmem:[%s138] sm:$0xff]
    %v140 = vld [vmem:[%s138 + $0x8] sm:$0xff]
    %v141 = vld [vmem:[%s138 + $0x10] sm:$0xff]
    %v142 = vld [vmem:[%s138 + $0x18] sm:$0xff]
    %144 = vset.pattern.permute.xlu0 0
    %145 = vperm.xlu0 %144, %v139
    %v146 = vpop.permute.xlu0 %145
    %149 = vset.pattern.permute.xlu0 0
    %150 = vperm.xlu0 %149, %v140
    %v151 = vpop.permute.xlu0 %150
    %154 = vset.pattern.permute.xlu0 0
    %155 = vperm.xlu0 %154, %v141
    %v156 = vpop.permute.xlu0 %155
    %159 = vset.pattern.permute.xlu0 0
    %160 = vperm.xlu0 %159, %v142
    %v161 = vpop.permute.xlu0 %160
    %v163 = vmul.f32 %v134, %v146
    %v164 = vmul.f32 %v135, %v151
    %v165 = vmul.f32 %v136, %v156
    %v166 = vmul.f32 %v137, %v161
    %v167 = vpack.c.bf16 %v164, %v163
    %v168 = vpack.c.bf16 %v166, %v165
    %v169 = vld [vmem:[%s0 + $0x5] sm:$0xff]
    %v170 = vld [vmem:[%s0 + $0xd] sm:$0xff]
    %v171 = vld [vmem:[%s0 + $0x15] sm:$0xff]
    %v172 = vld [vmem:[%s0 + $0x1d] sm:$0xff]
    %s173 = scalar_lea.vmem [#allocation3], 64
    %v174 = vld [vmem:[%s173] sm:$0xff]
    %v175 = vld [vmem:[%s173 + $0x8] sm:$0xff]
    %v176 = vld [vmem:[%s173 + $0x10] sm:$0xff]
    %v177 = vld [vmem:[%s173 + $0x18] sm:$0xff]
    %179 = vset.pattern.permute.xlu0 0
    %180 = vperm.xlu0 %179, %v174
    %v181 = vpop.permute.xlu0 %180
    %184 = vset.pattern.permute.xlu0 0
    %185 = vperm.xlu0 %184, %v175
    %v186 = vpop.permute.xlu0 %185
    %189 = vset.pattern.permute.xlu0 0
    %190 = vperm.xlu0 %189, %v176
    %v191 = vpop.permute.xlu0 %190
    %194 = vset.pattern.permute.xlu0 0
    %195 = vperm.xlu0 %194, %v177
    %v196 = vpop.permute.xlu0 %195
    %v198 = vmul.f32 %v169, %v181
    %v199 = vmul.f32 %v170, %v186
    %v200 = vmul.f32 %v171, %v191
    %v201 = vmul.f32 %v172, %v196
    %v202 = vpack.c.bf16 %v199, %v198
    %v203 = vpack.c.bf16 %v201, %v200
    %v204 = vld [vmem:[%s0 + $0x7] sm:$0xff]
    %v205 = vld [vmem:[%s0 + $0xf] sm:$0xff]
    %v206 = vld [vmem:[%s0 + $0x17] sm:$0xff]
    %v207 = vld [vmem:[%s0 + $0x1f] sm:$0xff]
    %s208 = scalar_lea.vmem [#allocation3], 96
    %v209 = vld [vmem:[%s208] sm:$0xff]
    %v210 = vld [vmem:[%s208 + $0x8] sm:$0xff]
    %v211 = vld [vmem:[%s208 + $0x10] sm:$0xff]
    %v212 = vld [vmem:[%s208 + $0x18] sm:$0xff]
    %214 = vset.pattern.permute.xlu0 0
    %215 = vperm.xlu0 %214, %v209
    %v216 = vpop.permute.xlu0 %215
    %219 = vset.pattern.permute.xlu0 0
    %220 = vperm.xlu0 %219, %v210
    %v221 = vpop.permute.xlu0 %220
    %224 = vset.pattern.permute.xlu0 0
    %225 = vperm.xlu0 %224, %v211
    %v226 = vpop.permute.xlu0 %225
    %229 = vset.pattern.permute.xlu0 0
    %230 = vperm.xlu0 %229, %v212
    %v231 = vpop.permute.xlu0 %230
    %v233 = vmul.f32 %v204, %v216
    %v234 = vmul.f32 %v205, %v221
    %v235 = vmul.f32 %v206, %v226
    %v236 = vmul.f32 %v207, %v231
    %v237 = vpack.c.bf16 %v234, %v233
    %v238 = vpack.c.bf16 %v236, %v235
    %v239 = vld [vmem:[%s0 + $0x8] sm:$0xff]
    %v240 = vld [vmem:[%s0 + $0x10] sm:$0xff]
    %v241 = vld [vmem:[%s0 + $0x18] sm:$0xff]
    %v242 = vld [vmem:[%s0 + $0x20] sm:$0xff]
    %s243 = scalar_lea.vmem [#allocation3], 128
    %v244 = vld [vmem:[%s243] sm:$0xff]
    %v245 = vld [vmem:[%s243 + $0x8] sm:$0xff]
    %v246 = vld [vmem:[%s243 + $0x10] sm:$0xff]
    %v247 = vld [vmem:[%s243 + $0x18] sm:$0xff]
    %249 = vset.pattern.permute.xlu0 0
    %250 = vperm.xlu0 %249, %v244
    %v251 = vpop.permute.xlu0 %250
    %254 = vset.pattern.permute.xlu0 0
    %255 = vperm.xlu0 %254, %v245
    %v256 = vpop.permute.xlu0 %255
    %259 = vset.pattern.permute.xlu0 0
    %260 = vperm.xlu0 %259, %v246
    %v261 = vpop.permute.xlu0 %260
    %264 = vset.pattern.permute.xlu0 0
    %265 = vperm.xlu0 %264, %v247
    %v266 = vpop.permute.xlu0 %265
    %v268 = vmul.f32 %v239, %v251
    %v269 = vmul.f32 %v240, %v256
    %v270 = vmul.f32 %v241, %v261
    %v271 = vmul.f32 %v242, %v266
    %v272 = vpack.c.bf16 %v269, %v268
    %v273 = vpack.c.bf16 %v271, %v270
    %v274 = vld [vmem:[%s0 + $0x9] sm:$0xff]
    %v275 = vld [vmem:[%s0 + $0x11] sm:$0xff]
    %v276 = vld [vmem:[%s0 + $0x19] sm:$0xff]
    %v277 = vld [vmem:[%s0 + $0x21] sm:$0xff]
    %s278 = scalar_lea.vmem [#allocation3], 160
    %v279 = vld [vmem:[%s278] sm:$0xff]
    %v280 = vld [vmem:[%s278 + $0x8] sm:$0xff]
    %v281 = vld [vmem:[%s278 + $0x10] sm:$0xff]
    %v282 = vld [vmem:[%s278 + $0x18] sm:$0xff]
    %284 = vset.pattern.permute.xlu0 0
    %285 = vperm.xlu0 %284, %v279
    %v286 = vpop.permute.xlu0 %285
    %289 = vset.pattern.permute.xlu0 0
    %290 = vperm.xlu0 %289, %v280
    %v291 = vpop.permute.xlu0 %290
    %294 = vset.pattern.permute.xlu0 0
    %295 = vperm.xlu0 %294, %v281
    %v296 = vpop.permute.xlu0 %295
    %299 = vset.pattern.permute.xlu0 0
    %300 = vperm.xlu0 %299, %v282
    %v301 = vpop.permute.xlu0 %300
    %v303 = vmul.f32 %v274, %v286
    %v304 = vmul.f32 %v275, %v291
    %v305 = vmul.f32 %v276, %v296
    %v306 = vmul.f32 %v277, %v301
    %v307 = vpack.c.bf16 %v304, %v303
    %v308 = vpack.c.bf16 %v306, %v305
    %v309 = vld [vmem:[%s0 + $0xb] sm:$0xff]
    %v310 = vld [vmem:[%s0 + $0x13] sm:$0xff]
    %v311 = vld [vmem:[%s0 + $0x1b] sm:$0xff]
    %v312 = vld [vmem:[%s0 + $0x23] sm:$0xff]
    %s313 = scalar_lea.vmem [#allocation3], 192
    %v314 = vld [vmem:[%s313] sm:$0xff]
    %v315 = vld [vmem:[%s313 + $0x8] sm:$0xff]
    %v316 = vld [vmem:[%s313 + $0x10] sm:$0xff]
    %v317 = vld [vmem:[%s313 + $0x18] sm:$0xff]
    %319 = vset.pattern.permute.xlu0 0
    %320 = vperm.xlu0 %319, %v314
    %v321 = vpop.permute.xlu0 %320
    %324 = vset.pattern.permute.xlu0 0
    %325 = vperm.xlu0 %324, %v315
    %v326 = vpop.permute.xlu0 %325
    %329 = vset.pattern.permute.xlu0 0
    %330 = vperm.xlu0 %329, %v316
    %v331 = vpop.permute.xlu0 %330
    %334 = vset.pattern.permute.xlu0 0
    %335 = vperm.xlu0 %334, %v317
    %v336 = vpop.permute.xlu0 %335
    %v338 = vmul.f32 %v309, %v321
    %v339 = vmul.f32 %v310, %v326
    %v340 = vmul.f32 %v311, %v331
    %v341 = vmul.f32 %v312, %v336
    %v342 = vpack.c.bf16 %v339, %v338
    %v343 = vpack.c.bf16 %v341, %v340
    %v344 = vld [vmem:[%s0 + $0xc] sm:$0xff]
    %v345 = vld [vmem:[%s0 + $0x14] sm:$0xff]
    %v346 = vld [vmem:[%s0 + $0x1c] sm:$0xff]
    %v347 = vld [vmem:[%s0 + $0x24] sm:$0xff]
    %s348 = scalar_lea.vmem [#allocation3], 224
    %v349 = vld [vmem:[%s348] sm:$0xff]
    %v350 = vld [vmem:[%s348 + $0x8] sm:$0xff]
    %v351 = vld [vmem:[%s348 + $0x10] sm:$0xff]
    %v352 = vld [vmem:[%s348 + $0x18] sm:$0xff]
    %354 = vset.pattern.permute.xlu0 0
    %355 = vperm.xlu0 %354, %v349
    %v356 = vpop.permute.xlu0 %355
    %359 = vset.pattern.permute.xlu0 0
    %360 = vperm.xlu0 %359, %v350
    %v361 = vpop.permute.xlu0 %360
    %364 = vset.pattern.permute.xlu0 0
    %365 = vperm.xlu0 %364, %v351
    %v366 = vpop.permute.xlu0 %365
    %369 = vset.pattern.permute.xlu0 0
    %370 = vperm.xlu0 %369, %v352
    %v371 = vpop.permute.xlu0 %370
    %v373 = vmul.f32 %v344, %v356
    %v374 = vmul.f32 %v345, %v361
    %v375 = vmul.f32 %v346, %v366
    %v376 = vmul.f32 %v347, %v371
    %v377 = vpack.c.bf16 %v374, %v373
    %v378 = vpack.c.bf16 %v376, %v375
    %v379 = vld [vmem:[%s0 + $0xd] sm:$0xff]
    %v380 = vld [vmem:[%s0 + $0x15] sm:$0xff]
    %v381 = vld [vmem:[%s0 + $0x1d] sm:$0xff]
    %v382 = vld [vmem:[%s0 + $0x25] sm:$0xff]
    %s383 = scalar_lea.vmem [#allocation3], 256
    %v384 = vld [vmem:[%s383] sm:$0xff]
    %v385 = vld [vmem:[%s383 + $0x8] sm:$0xff]
    %v386 = vld [vmem:[%s383 + $0x10] sm:$0xff]
    %v387 = vld [vmem:[%s383 + $0x18] sm:$0xff]
    %389 = vset.pattern.permute.xlu0 0
    %390 = vperm.xlu0 %389, %v384
    %v391 = vpop.permute.xlu0 %390
    %394 = vset.pattern.permute.xlu0 0
    %395 = vperm.xlu0 %394, %v385
    %v396 = vpop.permute.xlu0 %395
    %399 = vset.pattern.permute.xlu0 0
    %400 = vperm.xlu0 %399, %v386
    %v401 = vpop.permute.xlu0 %400
    %404 = vset.pattern.permute.xlu0 0
    %405 = vperm.xlu0 %404, %v387
    %v406 = vpop.permute.xlu0 %405
    %v408 = vmul.f32 %v379, %v391
    %v409 = vmul.f32 %v380, %v396
    %v410 = vmul.f32 %v381, %v401
    %v411 = vmul.f32 %v382, %v406
    %v412 = vpack.c.bf16 %v409, %v408
    %v413 = vpack.c.bf16 %v411, %v410
    %416 = vrot.lane.b32.xlu0 %v167, 64
    %v417 = vpop.permute.xlu0 %416
    %418 = vrot.lane.b32.xlu0 %v168, 64
    %v419 = vpop.permute.xlu0 %418
    %422 = vrot.lane.b32.xlu0 %v237, 64
    %v423 = vpop.permute.xlu0 %422
    %424 = vrot.lane.b32.xlu0 %v238, 64
    %v425 = vpop.permute.xlu0 %424
    %428 = vrot.lane.b32.xlu0 %v307, 64
    %v429 = vpop.permute.xlu0 %428
    %430 = vrot.lane.b32.xlu0 %v308, 64
    %v431 = vpop.permute.xlu0 %430
    %434 = vrot.lane.b32.xlu0 %v377, 64
    %v435 = vpop.permute.xlu0 %434
    %436 = vrot.lane.b32.xlu0 %v378, 64
    %v437 = vpop.permute.xlu0 %436
    %vm438 = vcmask 523264
    %v441 = vsel %vm438, %v132, %v417
    %v445 = vsel %vm438, %v133, %v419
    %v449 = vsel %vm438, %v202, %v423
    %v453 = vsel %vm438, %v203, %v425
    %v457 = vsel %vm438, %v272, %v429
    %v461 = vsel %vm438, %v273, %v431
    %v465 = vsel %vm438, %v342, %v435
    %v469 = vsel %vm438, %v343, %v437
    %v471 = vld [vmem:[%s3] sm:$0xf]
    %v472 = vld [vmem:[%s3 + $0x4] sm:$0xf]
    %v473 = vld [vmem:[%s3 + $0x8] sm:$0xf]
    %v474 = vld [vmem:[%s3 + $0xc] sm:$0xf]
    %v475 = vld [vmem:[%s3 + $0x10] sm:$0xf]
    %v476 = vld [vmem:[%s3 + $0x14] sm:$0xf]
    %v477 = vld [vmem:[%s3 + $0x18] sm:$0xf]
    %v478 = vld [vmem:[%s3 + $0x1c] sm:$0xf]
    %v479 = vld [vmem:[%s3 + $0x20] sm:$0xf]
    %v480 = vld [vmem:[%s3 + $0x24] sm:$0xf]
    %v481 = vld [vmem:[%s3 + $0x28] sm:$0xf]
    %v482 = vld [vmem:[%s3 + $0x2c] sm:$0xf]
    %v483 = vld [vmem:[%s3 + $0x30] sm:$0xf]
    %v484 = vld [vmem:[%s3 + $0x34] sm:$0xf]
    %v485 = vld [vmem:[%s3 + $0x38] sm:$0xf]
    %v486 = vld [vmem:[%s3 + $0x3c] sm:$0xf]
    %v487 = vld [vmem:[%s3 + $0x40] sm:$0xf]
    %v488 = vld [vmem:[%s3 + $0x44] sm:$0xf]
    %v489 = vld [vmem:[%s3 + $0x48] sm:$0xf]
    %v490 = vld [vmem:[%s3 + $0x4c] sm:$0xf]
    %v491 = vld [vmem:[%s3 + $0x50] sm:$0xf]
    %v492 = vld [vmem:[%s3 + $0x54] sm:$0xf]
    %v493 = vld [vmem:[%s3 + $0x58] sm:$0xf]
    %v494 = vld [vmem:[%s3 + $0x5c] sm:$0xf]
    %v495 = vld [vmem:[%s3 + $0x60] sm:$0xf]
    %v496 = vld [vmem:[%s3 + $0x64] sm:$0xf]
    %v497 = vld [vmem:[%s3 + $0x68] sm:$0xf]
    %v498 = vld [vmem:[%s3 + $0x6c] sm:$0xf]
    %v499 = vld [vmem:[%s3 + $0x70] sm:$0xf]
    %v500 = vld [vmem:[%s3 + $0x74] sm:$0xf]
    %v501 = vld [vmem:[%s3 + $0x78] sm:$0xf]
    %v502 = vld [vmem:[%s3 + $0x7c] sm:$0xf]
    %v503 = vld [vmem:[%s3 + $0x80] sm:$0xf]
    %v504 = vld [vmem:[%s3 + $0x84] sm:$0xf]
    %v505 = vld [vmem:[%s3 + $0x88] sm:$0xf]
    %v506 = vld [vmem:[%s3 + $0x8c] sm:$0xf]
    %v507 = vld [vmem:[%s3 + $0x90] sm:$0xf]
    %v508 = vld [vmem:[%s3 + $0x94] sm:$0xf]
    %v509 = vld [vmem:[%s3 + $0x98] sm:$0xf]
    %v510 = vld [vmem:[%s3 + $0x9c] sm:$0xf]
    %v511 = vld [vmem:[%s3 + $0xa0] sm:$0xf]
    %v512 = vld [vmem:[%s3 + $0xa4] sm:$0xf]
    %v513 = vld [vmem:[%s3 + $0xa8] sm:$0xf]
    %v514 = vld [vmem:[%s3 + $0xac] sm:$0xf]
    %v515 = vld [vmem:[%s3 + $0xb0] sm:$0xf]
    %v516 = vld [vmem:[%s3 + $0xb4] sm:$0xf]
    %v517 = vld [vmem:[%s3 + $0xb8] sm:$0xf]
    %v518 = vld [vmem:[%s3 + $0xbc] sm:$0xf]
    %v519 = vld [vmem:[%s3 + $0xc0] sm:$0xf]
    %v520 = vld [vmem:[%s3 + $0xc4] sm:$0xf]
    %v521 = vld [vmem:[%s3 + $0xc8] sm:$0xf]
    %v522 = vld [vmem:[%s3 + $0xcc] sm:$0xf]
    %v523 = vld [vmem:[%s3 + $0xd0] sm:$0xf]
    %v524 = vld [vmem:[%s3 + $0xd4] sm:$0xf]
    %v525 = vld [vmem:[%s3 + $0xd8] sm:$0xf]
    %v526 = vld [vmem:[%s3 + $0xdc] sm:$0xf]
    %v527 = vld [vmem:[%s3 + $0xe0] sm:$0xf]
    %v528 = vld [vmem:[%s3 + $0xe4] sm:$0xf]
    %v529 = vld [vmem:[%s3 + $0xe8] sm:$0xf]
    %v530 = vld [vmem:[%s3 + $0xec] sm:$0xf]
    %v531 = vld [vmem:[%s3 + $0xf0] sm:$0xf]
    %v532 = vld [vmem:[%s3 + $0xf4] sm:$0xf]
    %v533 = vld [vmem:[%s3 + $0xf8] sm:$0xf]
    %v534 = vld [vmem:[%s3 + $0xfc] sm:$0xf]
    %v535 = vld [vmem:[%s3 + $0x100] sm:$0xf]
    %v536 = vld [vmem:[%s3 + $0x104] sm:$0xf]
    %v537 = vld [vmem:[%s3 + $0x108] sm:$0xf]
    %v538 = vld [vmem:[%s3 + $0x10c] sm:$0xf]
    %v539 = vld [vmem:[%s3 + $0x110] sm:$0xf]
    %v540 = vld [vmem:[%s3 + $0x114] sm:$0xf]
    %v541 = vld [vmem:[%s3 + $0x118] sm:$0xf]
    %v542 = vld [vmem:[%s3 + $0x11c] sm:$0xf]
    %v543 = vld [vmem:[%s4] sm:$0x1]
    %v545 = vlaneseq
    %v546 = vshrl.u32 %v545, 7
    %v547 = vsub.s32 0, %v546
    %v548 = vrot.slane %v543, %v547
    %v622 = vunpack.c.l.b16 %v471
    %v623 = vunpack.c.l.b16 %v472
    %v624 = vunpack.c.l.b16 %v473
    %v625 = vunpack.c.l.b16 %v474
    %v626 = vunpack.c.l.b16 %v475
    %v627 = vunpack.c.l.b16 %v476
    %v628 = vunpack.c.l.b16 %v477
    %v629 = vunpack.c.l.b16 %v478
    %v630 = vunpack.c.l.b16 %v479
    %v631 = vunpack.c.l.b16 %v480
    %v632 = vunpack.c.l.b16 %v481
    %v633 = vunpack.c.l.b16 %v482
    %v634 = vunpack.c.l.b16 %v483
    %v635 = vunpack.c.l.b16 %v484
    %v636 = vunpack.c.l.b16 %v485
    %v637 = vunpack.c.l.b16 %v486
    %v638 = vunpack.c.l.b16 %v487
    %v639 = vunpack.c.l.b16 %v488
    %v640 = vunpack.c.l.b16 %v489
    %v641 = vunpack.c.l.b16 %v490
    %v642 = vunpack.c.l.b16 %v491
    %v643 = vunpack.c.l.b16 %v492
    %v644 = vunpack.c.l.b16 %v493
    %v645 = vunpack.c.l.b16 %v494
    %v646 = vunpack.c.l.b16 %v495
    %v647 = vunpack.c.l.b16 %v496
    %v648 = vunpack.c.l.b16 %v497
    %v649 = vunpack.c.l.b16 %v498
    %v650 = vunpack.c.l.b16 %v499
    %v651 = vunpack.c.l.b16 %v500
    %v652 = vunpack.c.l.b16 %v501
    %v653 = vunpack.c.l.b16 %v502
    %v654 = vunpack.c.l.b16 %v503
    %v655 = vunpack.c.l.b16 %v504
    %v656 = vunpack.c.l.b16 %v505
    %v657 = vunpack.c.l.b16 %v506
    %v658 = vunpack.c.l.b16 %v507
    %v659 = vunpack.c.l.b16 %v508
    %v660 = vunpack.c.l.b16 %v509
    %v661 = vunpack.c.l.b16 %v510
    %v662 = vunpack.c.l.b16 %v511
    %v663 = vunpack.c.l.b16 %v512
    %v664 = vunpack.c.l.b16 %v513
    %v665 = vunpack.c.l.b16 %v514
    %v666 = vunpack.c.l.b16 %v515
    %v667 = vunpack.c.l.b16 %v516
    %v668 = vunpack.c.l.b16 %v517
    %v669 = vunpack.c.l.b16 %v518
    %v670 = vunpack.c.l.b16 %v519
    %v671 = vunpack.c.l.b16 %v520
    %v672 = vunpack.c.l.b16 %v521
    %v673 = vunpack.c.l.b16 %v522
    %v674 = vunpack.c.l.b16 %v523
    %v675 = vunpack.c.l.b16 %v524
    %v676 = vunpack.c.l.b16 %v525
    %v677 = vunpack.c.l.b16 %v526
    %v678 = vunpack.c.l.b16 %v527
    %v679 = vunpack.c.l.b16 %v528
    %v680 = vunpack.c.l.b16 %v529
    %v681 = vunpack.c.l.b16 %v530
    %v682 = vunpack.c.l.b16 %v531
    %v683 = vunpack.c.l.b16 %v532
    %v684 = vunpack.c.l.b16 %v533
    %v685 = vunpack.c.l.b16 %v534
    %v686 = vunpack.c.l.b16 %v535
    %v687 = vunpack.c.l.b16 %v536
    %v688 = vunpack.c.l.b16 %v537
    %v689 = vunpack.c.l.b16 %v538
    %v690 = vunpack.c.l.b16 %v539
    %v691 = vunpack.c.l.b16 %v540
    %v692 = vunpack.c.l.b16 %v541
    %v693 = vunpack.c.l.b16 %v542
    %v694 = vpack.c.b16 %v623, %v622
    %v695 = vpack.c.b16 %v625, %v624
    %v696 = vpack.c.b16 %v627, %v626
    %v697 = vpack.c.b16 %v629, %v628
    %v698 = vpack.c.b16 %v631, %v630
    %v699 = vpack.c.b16 %v633, %v632
    %v700 = vpack.c.b16 %v635, %v634
    %v701 = vpack.c.b16 %v637, %v636
    %v702 = vpack.c.b16 %v639, %v638
    %v703 = vpack.c.b16 %v641, %v640
    %v704 = vpack.c.b16 %v643, %v642
    %v705 = vpack.c.b16 %v645, %v644
    %v706 = vpack.c.b16 %v647, %v646
    %v707 = vpack.c.b16 %v649, %v648
    %v708 = vpack.c.b16 %v651, %v650
    %v709 = vpack.c.b16 %v653, %v652
    %v710 = vpack.c.b16 %v655, %v654
    %v711 = vpack.c.b16 %v657, %v656
    %v712 = vpack.c.b16 %v659, %v658
    %v713 = vpack.c.b16 %v661, %v660
    %v714 = vpack.c.b16 %v663, %v662
    %v715 = vpack.c.b16 %v665, %v664
    %v716 = vpack.c.b16 %v667, %v666
    %v717 = vpack.c.b16 %v669, %v668
    %v718 = vpack.c.b16 %v671, %v670
    %v719 = vpack.c.b16 %v673, %v672
    %v720 = vpack.c.b16 %v675, %v674
    %v721 = vpack.c.b16 %v677, %v676
    %v722 = vpack.c.b16 %v679, %v678
    %v723 = vpack.c.b16 %v681, %v680
    %v724 = vpack.c.b16 %v683, %v682
    %v725 = vpack.c.b16 %v685, %v684
    %v726 = vpack.c.b16 %v687, %v686
    %v727 = vpack.c.b16 %v689, %v688
    %v728 = vpack.c.b16 %v691, %v690
    %v729 = vpack.c.b16 %v693, %v692
    %v767 = vsel %vm438, %v412, 0
    %v770 = vsel %vm438, %v413, 0
    %772 = vmatprep.subr.bf16.mxu0 0
    %773 = vmatpush1.bf16.msra.mxu0 %v694
    %774 = vmatprep.subr.bf16.mxu0 0
    %775 = vmatpush1.bf16.msra.mxu0 %v695
    %776 = vmatprep.subr.bf16.mxu0 0
    %777 = vmatpush1.bf16.msra.mxu0 %v696
    %778 = vmatprep.subr.bf16.mxu0 0
    %779 = vmatpush1.bf16.msra.mxu0 %v697
    %780 = vmatprep.subr.bf16.mxu0 0
    %781 = vmatpush1.bf16.msra.mxu0 %v698
    %782 = vmatprep.subr.bf16.mxu0 0
    %783 = vmatpush1.bf16.msra.mxu0 %v699
    %784 = vmatprep.subr.bf16.mxu0 0
    %785 = vmatpush1.bf16.msra.mxu0 %v700
    %786 = vmatprep.subr.bf16.mxu0 0
    %787 = vmatpush1.bf16.msra.mxu0 %v701
    %788 = vmatprep.subr.bf16.mxu0 0
    %789 = vmatpush1.bf16.msra.mxu0 %v702
    %790 = vmatprep.subr.bf16.mxu0 0
    %791 = vmatpush1.bf16.msra.mxu0 %v703
    %792 = vmatprep.subr.bf16.mxu0 0
    %793 = vmatpush1.bf16.msra.mxu0 %v704
    %794 = vmatprep.subr.bf16.mxu0 0
    %795 = vmatpush1.bf16.msra.mxu0 %v705
    %796 = vmatprep.subr.bf16.mxu0 0
    %797 = vmatpush1.bf16.msra.mxu0 %v706
    %798 = vmatprep.subr.bf16.mxu0 0
    %799 = vmatpush1.bf16.msra.mxu0 %v707
    %800 = vmatprep.subr.bf16.mxu0 0
    %801 = vmatpush1.bf16.msra.mxu0 %v708
    %802 = vmatprep.subr.bf16.mxu0 0
    %803 = vmatpush1.bf16.msra.mxu0 %v709
    %804 = vmatprep.mubr.bf16.mxu0 %v449
    %805 = vmatmul.mubr.bf16.gmra.mrb[0].mxu0 %v441
    %v806 = vpop.f32.mrb[0].mxu0
    %v807 = vadd.f32 %v548, %v806
    %v808 = vpop.f32.mrb[0].mxu0
    %v809 = vpop.f32.mrb[0].mxu0
    %v810 = vadd.f32 %v548, %v809
    %v811 = vpop.f32.mrb[0].mxu0
    %812 = vmatprep.mubr.bf16.mxu0 %v453
    %813 = vmatmul.mubr.bf16.gmra.mrb[0].mxu0 %v445
    %v814 = vpop.f32.mrb[0].mxu0
    %v815 = vadd.f32 %v548, %v814
    %v816 = vpop.f32.mrb[0].mxu0
    %v817 = vpop.f32.mrb[0].mxu0
    %v818 = vadd.f32 %v548, %v817
    %v819 = vpop.f32.mrb[0].mxu0
    %820 = vdwg.mxu0
    %821 = vmatprep.subr.bf16.mxu0 0
    %822 = vmatpush1.bf16.msra.mxu0 %v710
    %823 = vmatprep.subr.bf16.mxu0 0
    %824 = vmatpush1.bf16.msra.mxu0 %v711
    %825 = vmatprep.subr.bf16.mxu0 0
    %826 = vmatpush1.bf16.msra.mxu0 %v712
    %827 = vmatprep.subr.bf16.mxu0 0
    %828 = vmatpush1.bf16.msra.mxu0 %v713
    %829 = vmatprep.subr.bf16.mxu0 0
    %830 = vmatpush1.bf16.msra.mxu0 %v714
    %831 = vmatprep.subr.bf16.mxu0 0
    %832 = vmatpush1.bf16.msra.mxu0 %v715
    %833 = vmatprep.subr.bf16.mxu0 0
    %834 = vmatpush1.bf16.msra.mxu0 %v716
    %835 = vmatprep.subr.bf16.mxu0 0
    %836 = vmatpush1.bf16.msra.mxu0 %v717
    %837 = vmatprep.subr.bf16.mxu0 0
    %838 = vmatpush1.bf16.msra.mxu0 %v718
    %839 = vmatprep.subr.bf16.mxu0 0
    %840 = vmatpush1.bf16.msra.mxu0 %v719
    %841 = vmatprep.subr.bf16.mxu0 0
    %842 = vmatpush1.bf16.msra.mxu0 %v720
    %843 = vmatprep.subr.bf16.mxu0 0
    %844 = vmatpush1.bf16.msra.mxu0 %v721
    %845 = vmatprep.subr.bf16.mxu0 0
    %846 = vmatpush1.bf16.msra.mxu0 %v722
    %847 = vmatprep.subr.bf16.mxu0 0
    %848 = vmatpush1.bf16.msra.mxu0 %v723
    %849 = vmatprep.subr.bf16.mxu0 0
    %850 = vmatpush1.bf16.msra.mxu0 %v724
    %851 = vmatprep.subr.bf16.mxu0 0
    %852 = vmatpush1.bf16.msra.mxu0 %v725
    %853 = vmatprep.mubr.bf16.mxu0 %v465
    %854 = vmatmul.mubr.bf16.gmra.mrb[0].mxu0 %v457
    %v855 = vpop.f32.mrb[0].mxu0
    %v856 = vadd.f32 %v807, %v855
    %v857 = vpop.f32.mrb[0].mxu0
    %v858 = vpop.f32.mrb[0].mxu0
    %v859 = vadd.f32 %v810, %v858
    %v860 = vpop.f32.mrb[0].mxu0
    %861 = vmatprep.mubr.bf16.mxu0 %v469
    %862 = vmatmul.mubr.bf16.gmra.mrb[0].mxu0 %v461
    %v863 = vpop.f32.mrb[0].mxu0
    %v864 = vadd.f32 %v815, %v863
    %v865 = vpop.f32.mrb[0].mxu0
    %v866 = vpop.f32.mrb[0].mxu0
    %v867 = vadd.f32 %v818, %v866
    %v868 = vpop.f32.mrb[0].mxu0
    %869 = vdwg.mxu0
    %870 = vmatprep.subr.bf16.mxu0 0
    %871 = vmatpush1.bf16.msra.mxu0 %v726
    %872 = vmatprep.subr.bf16.mxu0 0
    %873 = vmatpush1.bf16.msra.mxu0 %v727
    %874 = vmatprep.subr.bf16.mxu0 0
    %875 = vmatpush1.bf16.msra.mxu0 %v728
    %876 = vmatprep.subr.bf16.mxu0 0
    %877 = vmatpush1.bf16.msra.mxu0 %v729
    %878 = vmatprep.subr.bf16.mxu0 0
    %879 = vmatpush1.bf16.msra.mxu0 0
    %880 = vmatprep.subr.bf16.mxu0 0
    %881 = vmatpush1.bf16.msra.mxu0 0
    %882 = vmatprep.subr.bf16.mxu0 0
    %883 = vmatpush1.bf16.msra.mxu0 0
    %884 = vmatprep.subr.bf16.mxu0 0
    %885 = vmatpush1.bf16.msra.mxu0 0
    %886 = vmatprep.subr.bf16.mxu0 0
    %887 = vmatpush1.bf16.msra.mxu0 0
    %888 = vmatprep.subr.bf16.mxu0 0
    %889 = vmatpush1.bf16.msra.mxu0 0
    %890 = vmatprep.subr.bf16.mxu0 0
    %891 = vmatpush1.bf16.msra.mxu0 0
    %892 = vmatprep.subr.bf16.mxu0 0
    %893 = vmatpush1.bf16.msra.mxu0 0
    %894 = vmatprep.subr.bf16.mxu0 0
    %895 = vmatpush1.bf16.msra.mxu0 0
    %896 = vmatprep.subr.bf16.mxu0 0
    %897 = vmatpush1.bf16.msra.mxu0 0
    %898 = vmatprep.subr.bf16.mxu0 0
    %899 = vmatpush1.bf16.msra.mxu0 0
    %900 = vmatprep.subr.bf16.mxu0 0
    %901 = vmatpush1.bf16.msra.mxu0 0
    %902 = vmatprep.mubr.bf16.mxu0 0
    %903 = vmatmul.mubr.bf16.gmra.mrb[0].mxu0 %v767
    %v904 = vpop.f32.mrb[0].mxu0
    %v905 = vadd.f32 %v856, %v904
    %v906 = vpop.f32.mrb[0].mxu0
    %v907 = vpop.f32.mrb[0].mxu0
    %v908 = vadd.f32 %v859, %v907
    %v909 = vpop.f32.mrb[0].mxu0
    %910 = vmatprep.mubr.bf16.mxu0 0
    %911 = vmatmul.mubr.bf16.gmra.mrb[0].mxu0 %v770
    %v912 = vpop.f32.mrb[0].mxu0
    %v913 = vadd.f32 %v864, %v912
    %v914 = vpop.f32.mrb[0].mxu0
    %v915 = vpop.f32.mrb[0].mxu0
    %v916 = vadd.f32 %v867, %v915
    %v917 = vpop.f32.mrb[0].mxu0
    %918 = vdwg.mxu0
    %v919 = vadd.f32 %v905, %v908
    %v920 = vadd.f32 %v919, %v913
    %v921 = vadd.f32 %v920, %v916
    %v922 = vrot.slane %v921, 4
    %v923 = vadd.f32 %v921, %v922
    %v924 = vrot.slane %v923, 2
    %v925 = vadd.f32 %v923, %v924
    %v926 = vrot.slane %v925, 1
    %v927 = vadd.f32 %v925, %v926
    %v928 = vrcp.pop 32.0
    %v929 = vmul.f32 %v927, %v928
    %v930 = vmul.f32 %v905, %v905
    %v931 = vmul.f32 %v908, %v908
    %v932 = vmul.f32 %v913, %v913
    %v933 = vmul.f32 %v916, %v916
    %v934 = vadd.f32 %v930, %v931
    %v935 = vadd.f32 %v934, %v932
    %v936 = vadd.f32 %v935, %v933
    %v937 = vrot.slane %v936, 4
    %v938 = vadd.f32 %v936, %v937
    %v939 = vrot.slane %v938, 2
    %v940 = vadd.f32 %v938, %v939
    %v941 = vrot.slane %v940, 1
    %v942 = vadd.f32 %v940, %v941
    %v943 = vmul.f32 %v942, %v928
    %v944 = vmul.f32 %v929, %v929
    %v945 = vsub.f32 %v943, %v944
    %v946 = vmax.f32 %v945, 0.0
    %v947 = vsub.f32 %v905, %v929
    %v948 = vsub.f32 %v908, %v929
    %v949 = vsub.f32 %v913, %v929
    %v950 = vsub.f32 %v916, %v929
    %v951 = vadd.f32 %v946, 1e-05
    %v952 = vrsqrt.pop %v951
    %v953 = vmul.f32 %v947, %v952
    %v954 = vmul.f32 %v948, %v952
    %v955 = vmul.f32 %v949, %v952
    %v956 = vmul.f32 %v950, %v952
    %s957 = scalar_lea.vmem %s4, 1
    %v958 = vld [vmem:[%s957] sm:$0x1]
    %v960 = vlaneseq
    %v961 = vshrl.u32 %v960, 7
    %v962 = vsub.s32 0, %v961
    %v963 = vrot.slane %v958, %v962
    %v965 = vmul.f32 %v953, %v963
    %v966 = vmul.f32 %v954, %v963
    %v967 = vmul.f32 %v955, %v963
    %v968 = vmul.f32 %v956, %v963
    %s969 = scalar_lea.vmem %s4, 2
    %v970 = vld [vmem:[%s969] sm:$0x1]
    %v972 = vlaneseq
    %v973 = vshrl.u32 %v972, 7
    %v974 = vsub.s32 0, %v973
    %v975 = vrot.slane %v970, %v974
    %v977 = vadd.f32 %v965, %v975
    %v978 = vadd.f32 %v966, %v975
    %v979 = vadd.f32 %v967, %v975
    %v980 = vadd.f32 %v968, %v975
    %981 = vst [vmem:[#allocation11] sm:$0xff] %v977
    %982 = vst [vmem:[#allocation11 + $0x8] sm:$0xff] %v978
    %983 = vst [vmem:[#allocation11 + $0x10] sm:$0xff] %v979
    %984 = vst [vmem:[#allocation11 + $0x18] sm:$0xff] %v980
    %v985 = vld [vmem:[#allocation11] ss:$2 sm:$0x3]
    %s986 = scalar_lea.vmem [#allocation11], 8
    %v987 = vld [vmem:[%s986] ss:$2 sm:$0x3]
    %s988 = scalar_lea.vmem [#allocation11], 16
    %v989 = vld [vmem:[%s988] ss:$2 sm:$0x3]
    %s990 = scalar_lea.vmem [#allocation11], 24
    %v991 = vld [vmem:[%s990] ss:$2 sm:$0x3]
    %v993 = vrot.slane %v987, 6
    %v996 = vrot.slane %v989, 4
    %v999 = vrot.slane %v991, 2
    %vm1001 = vcmask 1041408
    %v1002 = vsel %vm1001, %v985, %v993
    %vm1003 = vcmask 1043456
    %v1004 = vsel %vm1003, %v1002, %v996
    %vm1005 = vcmask 1045504
    %v1006 = vsel %vm1005, %v1004, %v999
    %v1007 = vpack.c.bf16 %v1006, %v1006
    %s1008 = scalar_lea.vmem [#allocation11], 1
    %v1009 = vld [vmem:[%s1008] ss:$2 sm:$0x3]
    %s1010 = scalar_lea.vmem [#allocation11], 9
    %v1011 = vld [vmem:[%s1010] ss:$2 sm:$0x3]
    %s1012 = scalar_lea.vmem [#allocation11], 17
    %v1013 = vld [vmem:[%s1012] ss:$2 sm:$0x3]
    %s1014 = scalar_lea.vmem [#allocation11], 25
    %v1015 = vld [vmem:[%s1014] ss:$2 sm:$0x3]
    %v1017 = vrot.slane %v1011, 6
    %v1020 = vrot.slane %v1013, 4
    %v1023 = vrot.slane %v1015, 2
    %v1025 = vsel %vm1001, %v1009, %v1017
    %v1026 = vsel %vm1003, %v1025, %v1020
    %v1027 = vsel %vm1005, %v1026, %v1023
    %v1028 = vpack.c.bf16 %v1027, %v1027
    %s1029 = scalar_lea.vmem [#allocation11], 4
    %v1030 = vld [vmem:[%s1029] ss:$2 sm:$0x3]
    %s1031 = scalar_lea.vmem [#allocation11], 12
    %v1032 = vld [vmem:[%s1031] ss:$2 sm:$0x3]
    %s1033 = scalar_lea.vmem [#allocation11], 20
    %v1034 = vld [vmem:[%s1033] ss:$2 sm:$0x3]
    %s1035 = scalar_lea.vmem [#allocation11], 28
    %v1036 = vld [vmem:[%s1035] ss:$2 sm:$0x3]
    %v1038 = vrot.slane %v1032, 6
    %v1041 = vrot.slane %v1034, 4
    %v1044 = vrot.slane %v1036, 2
    %v1046 = vsel %vm1001, %v1030, %v1038
    %v1047 = vsel %vm1003, %v1046, %v1041
    %v1048 = vsel %vm1005, %v1047, %v1044
    %v1049 = vpack.c.bf16 %v1048, %v1048
    %s1050 = scalar_lea.vmem [#allocation11], 5
    %v1051 = vld [vmem:[%s1050] ss:$2 sm:$0x3]
    %s1052 = scalar_lea.vmem [#allocation11], 13
    %v1053 = vld [vmem:[%s1052] ss:$2 sm:$0x3]
    %s1054 = scalar_lea.vmem [#allocation11], 21
    %v1055 = vld [vmem:[%s1054] ss:$2 sm:$0x3]
    %s1056 = scalar_lea.vmem [#allocation11], 29
    %v1057 = vld [vmem:[%s1056] ss:$2 sm:$0x3]
    %v1059 = vrot.slane %v1053, 6
    %v1062 = vrot.slane %v1055, 4
    %v1065 = vrot.slane %v1057, 2
    %v1067 = vsel %vm1001, %v1051, %v1059
    %v1068 = vsel %vm1003, %v1067, %v1062
    %v1069 = vsel %vm1005, %v1068, %v1065
    %v1070 = vpack.c.bf16 %v1069, %v1069
    %v1071 = vld [vmem:[#allocation6] sm:$0xf]
    %v1072 = vld [vmem:[#allocation6 + $0x4] sm:$0xf]
    %v1073 = vld [vmem:[#allocation6 + $0x8] sm:$0xf]
    %v1074 = vld [vmem:[#allocation6 + $0xc] sm:$0xf]
    %v1075 = vld [vmem:[#allocation6 + $0x10] sm:$0xf]
    %v1076 = vld [vmem:[#allocation6 + $0x14] sm:$0xf]
    %v1077 = vld [vmem:[#allocation6 + $0x18] sm:$0xf]
    %v1078 = vld [vmem:[#allocation6 + $0x1c] sm:$0xf]
    %v1079 = vld [vmem:[#allocation6 + $0x20] sm:$0xf]
    %v1080 = vld [vmem:[#allocation6 + $0x24] sm:$0xf]
    %v1081 = vld [vmem:[#allocation6 + $0x28] sm:$0xf]
    %v1082 = vld [vmem:[#allocation6 + $0x2c] sm:$0xf]
    %v1083 = vld [vmem:[#allocation6 + $0x30] sm:$0xf]
    %v1084 = vld [vmem:[#allocation6 + $0x34] sm:$0xf]
    %v1085 = vld [vmem:[#allocation6 + $0x38] sm:$0xf]
    %v1086 = vld [vmem:[#allocation6 + $0x3c] sm:$0xf]
    %v1087 = vld [vmem:[#allocation6 + $0x40] sm:$0xf]
    %v1088 = vld [vmem:[#allocation6 + $0x44] sm:$0xf]
    %v1089 = vld [vmem:[#allocation6 + $0x48] sm:$0xf]
    %v1090 = vld [vmem:[#allocation6 + $0x4c] sm:$0xf]
    %v1091 = vld [vmem:[#allocation6 + $0x50] sm:$0xf]
    %v1092 = vld [vmem:[#allocation6 + $0x54] sm:$0xf]
    %v1093 = vld [vmem:[#allocation6 + $0x58] sm:$0xf]
    %v1094 = vld [vmem:[#allocation6 + $0x5c] sm:$0xf]
    %v1095 = vld [vmem:[#allocation6 + $0x60] sm:$0xf]
    %v1096 = vld [vmem:[#allocation6 + $0x64] sm:$0xf]
    %v1097 = vld [vmem:[#allocation6 + $0x68] sm:$0xf]
    %v1098 = vld [vmem:[#allocation6 + $0x6c] sm:$0xf]
    %v1099 = vld [vmem:[#allocation6 + $0x70] sm:$0xf]
    %v1100 = vld [vmem:[#allocation6 + $0x74] sm:$0xf]
    %v1101 = vld [vmem:[#allocation6 + $0x78] sm:$0xf]
    %v1102 = vld [vmem:[#allocation6 + $0x7c] sm:$0xf]
    %v1103 = vld [vmem:[#allocation6 + $0x80] sm:$0xf]
    %v1104 = vld [vmem:[#allocation6 + $0x84] sm:$0xf]
    %v1105 = vld [vmem:[#allocation6 + $0x88] sm:$0xf]
    %v1106 = vld [vmem:[#allocation6 + $0x8c] sm:$0xf]
    %v1107 = vld [vmem:[#allocation6 + $0x90] sm:$0xf]
    %v1108 = vld [vmem:[#allocation6 + $0x94] sm:$0xf]
    %v1109 = vld [vmem:[#allocation6 + $0x98] sm:$0xf]
    %v1110 = vld [vmem:[#allocation6 + $0x9c] sm:$0xf]
    %v1111 = vld [vmem:[#allocation6 + $0xa0] sm:$0xf]
    %v1112 = vld [vmem:[#allocation6 + $0xa4] sm:$0xf]
    %v1113 = vld [vmem:[#allocation6 + $0xa8] sm:$0xf]
    %v1114 = vld [vmem:[#allocation6 + $0xac] sm:$0xf]
    %v1115 = vld [vmem:[#allocation6 + $0xb0] sm:$0xf]
    %v1116 = vld [vmem:[#allocation6 + $0xb4] sm:$0xf]
    %v1117 = vld [vmem:[#allocation6 + $0xb8] sm:$0xf]
    %v1118 = vld [vmem:[#allocation6 + $0xbc] sm:$0xf]
    %v1119 = vld [vmem:[#allocation6 + $0xc0] sm:$0xf]
    %v1120 = vld [vmem:[#allocation6 + $0xc4] sm:$0xf]
    %v1121 = vld [vmem:[#allocation6 + $0xc8] sm:$0xf]
    %v1122 = vld [vmem:[#allocation6 + $0xcc] sm:$0xf]
    %v1123 = vld [vmem:[#allocation6 + $0xd0] sm:$0xf]
    %v1124 = vld [vmem:[#allocation6 + $0xd4] sm:$0xf]
    %v1125 = vld [vmem:[#allocation6 + $0xd8] sm:$0xf]
    %v1126 = vld [vmem:[#allocation6 + $0xdc] sm:$0xf]
    %v1127 = vld [vmem:[#allocation6 + $0xe0] sm:$0xf]
    %v1128 = vld [vmem:[#allocation6 + $0xe4] sm:$0xf]
    %v1129 = vld [vmem:[#allocation6 + $0xe8] sm:$0xf]
    %v1130 = vld [vmem:[#allocation6 + $0xec] sm:$0xf]
    %v1131 = vld [vmem:[#allocation6 + $0xf0] sm:$0xf]
    %v1132 = vld [vmem:[#allocation6 + $0xf4] sm:$0xf]
    %v1133 = vld [vmem:[#allocation6 + $0xf8] sm:$0xf]
    %v1134 = vld [vmem:[#allocation6 + $0xfc] sm:$0xf]
    %v1135 = vld [vmem:[%s6] sm:$0x1]
    %v1137 = vlaneseq
    %v1138 = vshrl.u32 %v1137, 7
    %v1139 = vsub.s32 0, %v1138
    %v1140 = vrot.slane %v1135, %v1139
    %v1206 = vunpack.c.l.b16 %v1071
    %v1207 = vunpack.c.l.b16 %v1072
    %v1208 = vunpack.c.l.b16 %v1073
    %v1209 = vunpack.c.l.b16 %v1074
    %v1210 = vunpack.c.l.b16 %v1075
    %v1211 = vunpack.c.l.b16 %v1076
    %v1212 = vunpack.c.l.b16 %v1077
    %v1213 = vunpack.c.l.b16 %v1078
    %v1214 = vunpack.c.l.b16 %v1079
    %v1215 = vunpack.c.l.b16 %v1080
    %v1216 = vunpack.c.l.b16 %v1081
    %v1217 = vunpack.c.l.b16 %v1082
    %v1218 = vunpack.c.l.b16 %v1083
    %v1219 = vunpack.c.l.b16 %v1084
    %v1220 = vunpack.c.l.b16 %v1085
    %v1221 = vunpack.c.l.b16 %v1086
    %v1222 = vunpack.c.l.b16 %v1087
    %v1223 = vunpack.c.l.b16 %v1088
    %v1224 = vunpack.c.l.b16 %v1089
    %v1225 = vunpack.c.l.b16 %v1090
    %v1226 = vunpack.c.l.b16 %v1091
    %v1227 = vunpack.c.l.b16 %v1092
    %v1228 = vunpack.c.l.b16 %v1093
    %v1229 = vunpack.c.l.b16 %v1094
    %v1230 = vunpack.c.l.b16 %v1095
    %v1231 = vunpack.c.l.b16 %v1096
    %v1232 = vunpack.c.l.b16 %v1097
    %v1233 = vunpack.c.l.b16 %v1098
    %v1234 = vunpack.c.l.b16 %v1099
    %v1235 = vunpack.c.l.b16 %v1100
    %v1236 = vunpack.c.l.b16 %v1101
    %v1237 = vunpack.c.l.b16 %v1102
    %v1238 = vunpack.c.l.b16 %v1103
    %v1239 = vunpack.c.l.b16 %v1104
    %v1240 = vunpack.c.l.b16 %v1105
    %v1241 = vunpack.c.l.b16 %v1106
    %v1242 = vunpack.c.l.b16 %v1107
    %v1243 = vunpack.c.l.b16 %v1108
    %v1244 = vunpack.c.l.b16 %v1109
    %v1245 = vunpack.c.l.b16 %v1110
    %v1246 = vunpack.c.l.b16 %v1111
    %v1247 = vunpack.c.l.b16 %v1112
    %v1248 = vunpack.c.l.b16 %v1113
    %v1249 = vunpack.c.l.b16 %v1114
    %v1250 = vunpack.c.l.b16 %v1115
    %v1251 = vunpack.c.l.b16 %v1116
    %v1252 = vunpack.c.l.b16 %v1117
    %v1253 = vunpack.c.l.b16 %v1118
    %v1254 = vunpack.c.l.b16 %v1119
    %v1255 = vunpack.c.l.b16 %v1120
    %v1256 = vunpack.c.l.b16 %v1121
    %v1257 = vunpack.c.l.b16 %v1122
    %v1258 = vunpack.c.l.b16 %v1123
    %v1259 = vunpack.c.l.b16 %v1124
    %v1260 = vunpack.c.l.b16 %v1125
    %v1261 = vunpack.c.l.b16 %v1126
    %v1262 = vunpack.c.l.b16 %v1127
    %v1263 = vunpack.c.l.b16 %v1128
    %v1264 = vunpack.c.l.b16 %v1129
    %v1265 = vunpack.c.l.b16 %v1130
    %v1266 = vunpack.c.l.b16 %v1131
    %v1267 = vunpack.c.l.b16 %v1132
    %v1268 = vunpack.c.l.b16 %v1133
    %v1269 = vunpack.c.l.b16 %v1134
    %v1270 = vpack.c.b16 %v1207, %v1206
    %v1271 = vpack.c.b16 %v1209, %v1208
    %v1272 = vpack.c.b16 %v1211, %v1210
    %v1273 = vpack.c.b16 %v1213, %v1212
    %v1274 = vpack.c.b16 %v1215, %v1214
    %v1275 = vpack.c.b16 %v1217, %v1216
    %v1276 = vpack.c.b16 %v1219, %v1218
    %v1277 = vpack.c.b16 %v1221, %v1220
    %v1278 = vpack.c.b16 %v1223, %v1222
    %v1279 = vpack.c.b16 %v1225, %v1224
    %v1280 = vpack.c.b16 %v1227, %v1226
    %v1281 = vpack.c.b16 %v1229, %v1228
    %v1282 = vpack.c.b16 %v1231, %v1230
    %v1283 = vpack.c.b16 %v1233, %v1232
    %v1284 = vpack.c.b16 %v1235, %v1234
    %v1285 = vpack.c.b16 %v1237, %v1236
    %v1286 = vpack.c.b16 %v1239, %v1238
    %v1287 = vpack.c.b16 %v1241, %v1240
    %v1288 = vpack.c.b16 %v1243, %v1242
    %v1289 = vpack.c.b16 %v1245, %v1244
    %v1290 = vpack.c.b16 %v1247, %v1246
    %v1291 = vpack.c.b16 %v1249, %v1248
    %v1292 = vpack.c.b16 %v1251, %v1250
    %v1293 = vpack.c.b16 %v1253, %v1252
    %v1294 = vpack.c.b16 %v1255, %v1254
    %v1295 = vpack.c.b16 %v1257, %v1256
    %v1296 = vpack.c.b16 %v1259, %v1258
    %v1297 = vpack.c.b16 %v1261, %v1260
    %v1298 = vpack.c.b16 %v1263, %v1262
    %v1299 = vpack.c.b16 %v1265, %v1264
    %v1300 = vpack.c.b16 %v1267, %v1266
    %v1301 = vpack.c.b16 %v1269, %v1268
    %1334 = vmatprep.subr.bf16.mxu0 0
    %1335 = vmatpush1.bf16.msra.mxu0 %v1270
    %1336 = vmatprep.subr.bf16.mxu0 0
    %1337 = vmatpush1.bf16.msra.mxu0 %v1271
    %1338 = vmatprep.subr.bf16.mxu0 0
    %1339 = vmatpush1.bf16.msra.mxu0 %v1272
    %1340 = vmatprep.subr.bf16.mxu0 0
    %1341 = vmatpush1.bf16.msra.mxu0 %v1273
    %1342 = vmatprep.subr.bf16.mxu0 0
    %1343 = vmatpush1.bf16.msra.mxu0 %v1274
    %1344 = vmatprep.subr.bf16.mxu0 0
    %1345 = vmatpush1.bf16.msra.mxu0 %v1275
    %1346 = vmatprep.subr.bf16.mxu0 0
    %1347 = vmatpush1.bf16.msra.mxu0 %v1276
    %1348 = vmatprep.subr.bf16.mxu0 0
    %1349 = vmatpush1.bf16.msra.mxu0 %v1277
    %1350 = vmatprep.subr.bf16.mxu0 0
    %1351 = vmatpush1.bf16.msra.mxu0 %v1278
    %1352 = vmatprep.subr.bf16.mxu0 0
    %1353 = vmatpush1.bf16.msra.mxu0 %v1279
    %1354 = vmatprep.subr.bf16.mxu0 0
    %1355 = vmatpush1.bf16.msra.mxu0 %v1280
    %1356 = vmatprep.subr.bf16.mxu0 0
    %1357 = vmatpush1.bf16.msra.mxu0 %v1281
    %1358 = vmatprep.subr.bf16.mxu0 0
    %1359 = vmatpush1.bf16.msra.mxu0 %v1282
    %1360 = vmatprep.subr.bf16.mxu0 0
    %1361 = vmatpush1.bf16.msra.mxu0 %v1283
    %1362 = vmatprep.subr.bf16.mxu0 0
    %1363 = vmatpush1.bf16.msra.mxu0 %v1284
    %1364 = vmatprep.subr.bf16.mxu0 0
    %1365 = vmatpush1.bf16.msra.mxu0 %v1285
    %1366 = vmatprep.mubr.bf16.mxu0 %v1028
    %1367 = vmatmul.mubr.bf16.gmra.mrb[0].mxu0 %v1007
    %v1368 = vpop.f32.mrb[0].mxu0
    %v1369 = vadd.f32 %v1140, %v1368
    %v1370 = vpop.f32.mrb[0].mxu0
    %v1371 = vpop.f32.mrb[0].mxu0
    %v1372 = vpop.f32.mrb[0].mxu0
    %1373 = vdwg.mxu0
    %1374 = vmatprep.subr.bf16.mxu0 0
    %1375 = vmatpush1.bf16.msra.mxu0 %v1286
    %1376 = vmatprep.subr.bf16.mxu0 0
    %1377 = vmatpush1.bf16.msra.mxu0 %v1287
    %1378 = vmatprep.subr.bf16.mxu0 0
    %1379 = vmatpush1.bf16.msra.mxu0 %v1288
    %1380 = vmatprep.subr.bf16.mxu0 0
    %1381 = vmatpush1.bf16.msra.mxu0 %v1289
    %1382 = vmatprep.subr.bf16.mxu0 0
    %1383 = vmatpush1.bf16.msra.mxu0 %v1290
    %1384 = vmatprep.subr.bf16.mxu0 0
    %1385 = vmatpush1.bf16.msra.mxu0 %v1291
    %1386 = vmatprep.subr.bf16.mxu0 0
    %1387 = vmatpush1.bf16.msra.mxu0 %v1292
    %1388 = vmatprep.subr.bf16.mxu0 0
    %1389 = vmatpush1.bf16.msra.mxu0 %v1293
    %1390 = vmatprep.subr.bf16.mxu0 0
    %1391 = vmatpush1.bf16.msra.mxu0 %v1294
    %1392 = vmatprep.subr.bf16.mxu0 0
    %1393 = vmatpush1.bf16.msra.mxu0 %v1295
    %1394 = vmatprep.subr.bf16.mxu0 0
    %1395 = vmatpush1.bf16.msra.mxu0 %v1296
    %1396 = vmatprep.subr.bf16.mxu0 0
    %1397 = vmatpush1.bf16.msra.mxu0 %v1297
    %1398 = vmatprep.subr.bf16.mxu0 0
    %1399 = vmatpush1.bf16.msra.mxu0 %v1298
    %1400 = vmatprep.subr.bf16.mxu0 0
    %1401 = vmatpush1.bf16.msra.mxu0 %v1299
    %1402 = vmatprep.subr.bf16.mxu0 0
    %1403 = vmatpush1.bf16.msra.mxu0 %v1300
    %1404 = vmatprep.subr.bf16.mxu0 0
    %1405 = vmatpush1.bf16.msra.mxu0 %v1301
    %1406 = vmatprep.mubr.bf16.mxu0 %v1070
    %1407 = vmatmul.mubr.bf16.gmra.mrb[0].mxu0 %v1049
    %v1408 = vpop.f32.mrb[0].mxu0
    %v1409 = vadd.f32 %v1369, %v1408
    %v1410 = vpop.f32.mrb[0].mxu0
    %v1411 = vpop.f32.mrb[0].mxu0
    %v1412 = vpop.f32.mrb[0].mxu0
    %1413 = vdwg.mxu0
    %v1414 = vrot.slane %v1409, 4
    %v1415 = vadd.f32 %v1409, %v1414
    %v1416 = vrot.slane %v1415, 2
    %v1417 = vadd.f32 %v1415, %v1416
    %v1418 = vrot.slane %v1417, 1
    %v1419 = vadd.f32 %v1417, %v1418
    %v1420 = vrcp.pop 8.0
    %v1421 = vmul.f32 %v1419, %v1420
    %v1422 = vmul.f32 %v1409, %v1409
    %v1423 = vrot.slane %v1422, 4
    %v1424 = vadd.f32 %v1422, %v1423
    %v1425 = vrot.slane %v1424, 2
    %v1426 = vadd.f32 %v1424, %v1425
    %v1427 = vrot.slane %v1426, 1
    %v1428 = vadd.f32 %v1426, %v1427
    %v1429 = vmul.f32 %v1428, %v1420
    %v1430 = vmul.f32 %v1421, %v1421
    %v1431 = vsub.f32 %v1429, %v1430
    %v1432 = vmax.f32 %v1431, 0.0
    %v1433 = vsub.f32 %v1409, %v1421
    %v1434 = vadd.f32 %v1432, 1e-05
    %v1435 = vrsqrt.pop %v1434
    %v1436 = vmul.f32 %v1433, %v1435
    %s1437 = scalar_lea.vmem %s6, 1
    %v1438 = vld [vmem:[%s1437] sm:$0x1]
    %v1440 = vlaneseq
    %v1441 = vshrl.u32 %v1440, 7
    %v1442 = vsub.s32 0, %v1441
    %v1443 = vrot.slane %v1438, %v1442
    %v1445 = vmul.f32 %v1436, %v1443
    %s1446 = scalar_lea.vmem %s6, 2
    %v1447 = vld [vmem:[%s1446] sm:$0x1]
    %v1449 = vlaneseq
    %v1450 = vshrl.u32 %v1449, 7
    %v1451 = vsub.s32 0, %v1450
    %v1452 = vrot.slane %v1447, %v1451
    %v1454 = vadd.f32 %v1445, %v1452
    %1455 = vst [vmem:[#allocation2] sm:$0xff] %v1454
    %v1456 = vld [vmem:[#allocation2] sm:$0x1]
    %v1457 = vld [vmem:[#allocation2 + $0x4] sm:$0x1]
    %v1459 = vrot.slane %v1457, 7
    %vm1461 = vcmask 1040384
    %v1462 = vsel %vm1461, %v1456, %v1459
    %v1463 = vpack.c.bf16 %v1462, %v1462
    %v1464 = vld [vmem:[#allocation2 + $0x1] sm:$0x1]
    %v1465 = vld [vmem:[#allocation2 + $0x5] sm:$0x1]
    %v1467 = vrot.slane %v1465, 7
    %v1469 = vsel %vm1461, %v1464, %v1467
    %v1470 = vpack.c.bf16 %v1469, %v1469
    %v1471 = vld [vmem:[#allocation2 + $0x2] sm:$0x1]
    %v1472 = vld [vmem:[#allocation2 + $0x6] sm:$0x1]
    %v1474 = vrot.slane %v1472, 7
    %v1476 = vsel %vm1461, %v1471, %v1474
    %v1477 = vpack.c.bf16 %v1476, %v1476
    %v1478 = vld [vmem:[#allocation2 + $0x3] sm:$0x1]
    %v1479 = vld [vmem:[#allocation2 + $0x7] sm:$0x1]
    %v1481 = vrot.slane %v1479, 7
    %v1483 = vsel %vm1461, %v1478, %v1481
    %v1484 = vpack.c.bf16 %v1483, %v1483
    %v1485 = vld [vmem:[#allocation8] sm:$0xf]
    %v1486 = vld [vmem:[#allocation8 + $0x4] sm:$0xf]
    %v1487 = vld [vmem:[#allocation8 + $0x8] sm:$0xf]
    %v1488 = vld [vmem:[#allocation8 + $0xc] sm:$0xf]
    %v1489 = vld [vmem:[#allocation8 + $0x10] sm:$0xf]
    %v1490 = vld [vmem:[#allocation8 + $0x14] sm:$0xf]
    %v1491 = vld [vmem:[#allocation8 + $0x18] sm:$0xf]
    %v1492 = vld [vmem:[#allocation8 + $0x1c] sm:$0xf]
    %v1493 = vld [vmem:[#allocation8 + $0x20] sm:$0xf]
    %v1494 = vld [vmem:[#allocation8 + $0x24] sm:$0xf]
    %v1495 = vld [vmem:[#allocation8 + $0x28] sm:$0xf]
    %v1496 = vld [vmem:[#allocation8 + $0x2c] sm:$0xf]
    %v1497 = vld [vmem:[#allocation8 + $0x30] sm:$0xf]
    %v1498 = vld [vmem:[#allocation8 + $0x34] sm:$0xf]
    %v1499 = vld [vmem:[#allocation8 + $0x38] sm:$0xf]
    %v1500 = vld [vmem:[#allocation8 + $0x3c] sm:$0xf]
    %v1501 = vld [vmem:[#allocation8 + $0x40] sm:$0xf]
    %v1502 = vld [vmem:[#allocation8 + $0x44] sm:$0xf]
    %v1503 = vld [vmem:[#allocation8 + $0x48] sm:$0xf]
    %v1504 = vld [vmem:[#allocation8 + $0x4c] sm:$0xf]
    %v1505 = vld [vmem:[#allocation8 + $0x50] sm:$0xf]
    %v1506 = vld [vmem:[#allocation8 + $0x54] sm:$0xf]
    %v1507 = vld [vmem:[#allocation8 + $0x58] sm:$0xf]
    %v1508 = vld [vmem:[#allocation8 + $0x5c] sm:$0xf]
    %v1509 = vld [vmem:[#allocation8 + $0x60] sm:$0xf]
    %v1510 = vld [vmem:[#allocation8 + $0x64] sm:$0xf]
    %v1511 = vld [vmem:[#allocation8 + $0x68] sm:$0xf]
    %v1512 = vld [vmem:[#allocation8 + $0x6c] sm:$0xf]
    %v1513 = vld [vmem:[#allocation8 + $0x70] sm:$0xf]
    %v1514 = vld [vmem:[#allocation8 + $0x74] sm:$0xf]
    %v1515 = vld [vmem:[#allocation8 + $0x78] sm:$0xf]
    %v1516 = vld [vmem:[#allocation8 + $0x7c] sm:$0xf]
    %v1517 = vld [vmem:[#allocation8 + $0x80] sm:$0xf]
    %v1518 = vld [vmem:[#allocation8 + $0x84] sm:$0xf]
    %v1519 = vld [vmem:[#allocation8 + $0x88] sm:$0xf]
    %v1520 = vld [vmem:[#allocation8 + $0x8c] sm:$0xf]
    %v1521 = vld [vmem:[#allocation8 + $0x90] sm:$0xf]
    %v1522 = vld [vmem:[#allocation8 + $0x94] sm:$0xf]
    %v1523 = vld [vmem:[#allocation8 + $0x98] sm:$0xf]
    %v1524 = vld [vmem:[#allocation8 + $0x9c] sm:$0xf]
    %v1525 = vld [vmem:[#allocation8 + $0xa0] sm:$0xf]
    %v1526 = vld [vmem:[#allocation8 + $0xa4] sm:$0xf]
    %v1527 = vld [vmem:[#allocation8 + $0xa8] sm:$0xf]
    %v1528 = vld [vmem:[#allocation8 + $0xac] sm:$0xf]
    %v1529 = vld [vmem:[#allocation8 + $0xb0] sm:$0xf]
    %v1530 = vld [vmem:[#allocation8 + $0xb4] sm:$0xf]
    %v1531 = vld [vmem:[#allocation8 + $0xb8] sm:$0xf]
    %v1532 = vld [vmem:[#allocation8 + $0xbc] sm:$0xf]
    %v1533 = vld [vmem:[#allocation8 + $0xc0] sm:$0xf]
    %v1534 = vld [vmem:[#allocation8 + $0xc4] sm:$0xf]
    %v1535 = vld [vmem:[#allocation8 + $0xc8] sm:$0xf]
    %v1536 = vld [vmem:[#allocation8 + $0xcc] sm:$0xf]
    %v1537 = vld [vmem:[#allocation8 + $0xd0] sm:$0xf]
    %v1538 = vld [vmem:[#allocation8 + $0xd4] sm:$0xf]
    %v1539 = vld [vmem:[#allocation8 + $0xd8] sm:$0xf]
    %v1540 = vld [vmem:[#allocation8 + $0xdc] sm:$0xf]
    %v1541 = vld [vmem:[#allocation8 + $0xe0] sm:$0xf]
    %v1542 = vld [vmem:[#allocation8 + $0xe4] sm:$0xf]
    %v1543 = vld [vmem:[#allocation8 + $0xe8] sm:$0xf]
    %v1544 = vld [vmem:[#allocation8 + $0xec] sm:$0xf]
    %v1545 = vld [vmem:[#allocation8 + $0xf0] sm:$0xf]
    %v1546 = vld [vmem:[#allocation8 + $0xf4] sm:$0xf]
    %v1547 = vld [vmem:[#allocation8 + $0xf8] sm:$0xf]
    %v1548 = vld [vmem:[#allocation8 + $0xfc] sm:$0xf]
    %v1549 = vld [vmem:[%s8] sm:$0x1]
    %v1551 = vlaneseq
    %v1552 = vshrl.u32 %v1551, 7
    %v1553 = vsub.s32 0, %v1552
    %v1554 = vrot.slane %v1549, %v1553
    %v1620 = vunpack.c.l.b16 %v1485
    %v1621 = vunpack.c.l.b16 %v1486
    %v1622 = vunpack.c.l.b16 %v1487
    %v1623 = vunpack.c.l.b16 %v1488
    %v1624 = vunpack.c.l.b16 %v1489
    %v1625 = vunpack.c.l.b16 %v1490
    %v1626 = vunpack.c.l.b16 %v1491
    %v1627 = vunpack.c.l.b16 %v1492
    %v1628 = vunpack.c.l.b16 %v1493
    %v1629 = vunpack.c.l.b16 %v1494
    %v1630 = vunpack.c.l.b16 %v1495
    %v1631 = vunpack.c.l.b16 %v1496
    %v1632 = vunpack.c.l.b16 %v1497
    %v1633 = vunpack.c.l.b16 %v1498
    %v1634 = vunpack.c.l.b16 %v1499
    %v1635 = vunpack.c.l.b16 %v1500
    %v1636 = vunpack.c.l.b16 %v1501
    %v1637 = vunpack.c.l.b16 %v1502
    %v1638 = vunpack.c.l.b16 %v1503
    %v1639 = vunpack.c.l.b16 %v1504
    %v1640 = vunpack.c.l.b16 %v1505
    %v1641 = vunpack.c.l.b16 %v1506
    %v1642 = vunpack.c.l.b16 %v1507
    %v1643 = vunpack.c.l.b16 %v1508
    %v1644 = vunpack.c.l.b16 %v1509
    %v1645 = vunpack.c.l.b16 %v1510
    %v1646 = vunpack.c.l.b16 %v1511
    %v1647 = vunpack.c.l.b16 %v1512
    %v1648 = vunpack.c.l.b16 %v1513
    %v1649 = vunpack.c.l.b16 %v1514
    %v1650 = vunpack.c.l.b16 %v1515
    %v1651 = vunpack.c.l.b16 %v1516
    %v1652 = vunpack.c.l.b16 %v1517
    %v1653 = vunpack.c.l.b16 %v1518
    %v1654 = vunpack.c.l.b16 %v1519
    %v1655 = vunpack.c.l.b16 %v1520
    %v1656 = vunpack.c.l.b16 %v1521
    %v1657 = vunpack.c.l.b16 %v1522
    %v1658 = vunpack.c.l.b16 %v1523
    %v1659 = vunpack.c.l.b16 %v1524
    %v1660 = vunpack.c.l.b16 %v1525
    %v1661 = vunpack.c.l.b16 %v1526
    %v1662 = vunpack.c.l.b16 %v1527
    %v1663 = vunpack.c.l.b16 %v1528
    %v1664 = vunpack.c.l.b16 %v1529
    %v1665 = vunpack.c.l.b16 %v1530
    %v1666 = vunpack.c.l.b16 %v1531
    %v1667 = vunpack.c.l.b16 %v1532
    %v1668 = vunpack.c.l.b16 %v1533
    %v1669 = vunpack.c.l.b16 %v1534
    %v1670 = vunpack.c.l.b16 %v1535
    %v1671 = vunpack.c.l.b16 %v1536
    %v1672 = vunpack.c.l.b16 %v1537
    %v1673 = vunpack.c.l.b16 %v1538
    %v1674 = vunpack.c.l.b16 %v1539
    %v1675 = vunpack.c.l.b16 %v1540
    %v1676 = vunpack.c.l.b16 %v1541
    %v1677 = vunpack.c.l.b16 %v1542
    %v1678 = vunpack.c.l.b16 %v1543
    %v1679 = vunpack.c.l.b16 %v1544
    %v1680 = vunpack.c.l.b16 %v1545
    %v1681 = vunpack.c.l.b16 %v1546
    %v1682 = vunpack.c.l.b16 %v1547
    %v1683 = vunpack.c.l.b16 %v1548
    %v1684 = vpack.c.b16 %v1621, %v1620
    %v1685 = vpack.c.b16 %v1623, %v1622
    %v1686 = vpack.c.b16 %v1625, %v1624
    %v1687 = vpack.c.b16 %v1627, %v1626
    %v1688 = vpack.c.b16 %v1629, %v1628
    %v1689 = vpack.c.b16 %v1631, %v1630
    %v1690 = vpack.c.b16 %v1633, %v1632
    %v1691 = vpack.c.b16 %v1635, %v1634
    %v1692 = vpack.c.b16 %v1637, %v1636
    %v1693 = vpack.c.b16 %v1639, %v1638
    %v1694 = vpack.c.b16 %v1641, %v1640
    %v1695 = vpack.c.b16 %v1643, %v1642
    %v1696 = vpack.c.b16 %v1645, %v1644
    %v1697 = vpack.c.b16 %v1647, %v1646
    %v1698 = vpack.c.b16 %v1649, %v1648
    %v1699 = vpack.c.b16 %v1651, %v1650
    %v1700 = vpack.c.b16 %v1653, %v1652
    %v1701 = vpack.c.b16 %v1655, %v1654
    %v1702 = vpack.c.b16 %v1657, %v1656
    %v1703 = vpack.c.b16 %v1659, %v1658
    %v1704 = vpack.c.b16 %v1661, %v1660
    %v1705 = vpack.c.b16 %v1663, %v1662
    %v1706 = vpack.c.b16 %v1665, %v1664
    %v1707 = vpack.c.b16 %v1667, %v1666
    %v1708 = vpack.c.b16 %v1669, %v1668
    %v1709 = vpack.c.b16 %v1671, %v1670
    %v1710 = vpack.c.b16 %v1673, %v1672
    %v1711 = vpack.c.b16 %v1675, %v1674
    %v1712 = vpack.c.b16 %v1677, %v1676
    %v1713 = vpack.c.b16 %v1679, %v1678
    %v1714 = vpack.c.b16 %v1681, %v1680
    %v1715 = vpack.c.b16 %v1683, %v1682
    %1748 = vmatprep.subr.bf16.mxu0 0
    %1749 = vmatpush1.bf16.msra.mxu0 %v1684
    %1750 = vmatprep.subr.bf16.mxu0 0
    %1751 = vmatpush1.bf16.msra.mxu0 %v1685
    %1752 = vmatprep.subr.bf16.mxu0 0
    %1753 = vmatpush1.bf16.msra.mxu0 %v1686
    %1754 = vmatprep.subr.bf16.mxu0 0
    %1755 = vmatpush1.bf16.msra.mxu0 %v1687
    %1756 = vmatprep.subr.bf16.mxu0 0
    %1757 = vmatpush1.bf16.msra.mxu0 %v1688
    %1758 = vmatprep.subr.bf16.mxu0 0
    %1759 = vmatpush1.bf16.msra.mxu0 %v1689
    %1760 = vmatprep.subr.bf16.mxu0 0
    %1761 = vmatpush1.bf16.msra.mxu0 %v1690
    %1762 = vmatprep.subr.bf16.mxu0 0
    %1763 = vmatpush1.bf16.msra.mxu0 %v1691
    %1764 = vmatprep.subr.bf16.mxu0 0
    %1765 = vmatpush1.bf16.msra.mxu0 %v1692
    %1766 = vmatprep.subr.bf16.mxu0 0
    %1767 = vmatpush1.bf16.msra.mxu0 %v1693
    %1768 = vmatprep.subr.bf16.mxu0 0
    %1769 = vmatpush1.bf16.msra.mxu0 %v1694
    %1770 = vmatprep.subr.bf16.mxu0 0
    %1771 = vmatpush1.bf16.msra.mxu0 %v1695
    %1772 = vmatprep.subr.bf16.mxu0 0
    %1773 = vmatpush1.bf16.msra.mxu0 %v1696
    %1774 = vmatprep.subr.bf16.mxu0 0
    %1775 = vmatpush1.bf16.msra.mxu0 %v1697
    %1776 = vmatprep.subr.bf16.mxu0 0
    %1777 = vmatpush1.bf16.msra.mxu0 %v1698
    %1778 = vmatprep.subr.bf16.mxu0 0
    %1779 = vmatpush1.bf16.msra.mxu0 %v1699
    %1780 = vmatprep.mubr.bf16.mxu0 %v1470
    %1781 = vmatmul.mubr.bf16.gmra.mrb[0].mxu0 %v1463
    %v1782 = vpop.f32.mrb[0].mxu0
    %v1783 = vadd.f32 %v1554, %v1782
    %v1784 = vpop.f32.mrb[0].mxu0
    %v1785 = vpop.f32.mrb[0].mxu0
    %v1786 = vpop.f32.mrb[0].mxu0
    %1787 = vdwg.mxu0
    %1788 = vmatprep.subr.bf16.mxu0 0
    %1789 = vmatpush1.bf16.msra.mxu0 %v1700
    %1790 = vmatprep.subr.bf16.mxu0 0
    %1791 = vmatpush1.bf16.msra.mxu0 %v1701
    %1792 = vmatprep.subr.bf16.mxu0 0
    %1793 = vmatpush1.bf16.msra.mxu0 %v1702
    %1794 = vmatprep.subr.bf16.mxu0 0
    %1795 = vmatpush1.bf16.msra.mxu0 %v1703
    %1796 = vmatprep.subr.bf16.mxu0 0
    %1797 = vmatpush1.bf16.msra.mxu0 %v1704
    %1798 = vmatprep.subr.bf16.mxu0 0
    %1799 = vmatpush1.bf16.msra.mxu0 %v1705
    %1800 = vmatprep.subr.bf16.mxu0 0
    %1801 = vmatpush1.bf16.msra.mxu0 %v1706
    %1802 = vmatprep.subr.bf16.mxu0 0
    %1803 = vmatpush1.bf16.msra.mxu0 %v1707
    %1804 = vmatprep.subr.bf16.mxu0 0
    %1805 = vmatpush1.bf16.msra.mxu0 %v1708
    %1806 = vmatprep.subr.bf16.mxu0 0
    %1807 = vmatpush1.bf16.msra.mxu0 %v1709
    %1808 = vmatprep.subr.bf16.mxu0 0
    %1809 = vmatpush1.bf16.msra.mxu0 %v1710
    %1810 = vmatprep.subr.bf16.mxu0 0
    %1811 = vmatpush1.bf16.msra.mxu0 %v1711
    %1812 = vmatprep.subr.bf16.mxu0 0
    %1813 = vmatpush1.bf16.msra.mxu0 %v1712
    %1814 = vmatprep.subr.bf16.mxu0 0
    %1815 = vmatpush1.bf16.msra.mxu0 %v1713
    %1816 = vmatprep.subr.bf16.mxu0 0
    %1817 = vmatpush1.bf16.msra.mxu0 %v1714
    %1818 = vmatprep.subr.bf16.mxu0 0
    %1819 = vmatpush1.bf16.msra.mxu0 %v1715
    %1820 = vmatprep.mubr.bf16.mxu0 %v1484
    %1821 = vmatmul.mubr.bf16.gmra.mrb[0].mxu0 %v1477
    %v1822 = vpop.f32.mrb[0].mxu0
    %v1823 = vadd.f32 %v1783, %v1822
    %v1824 = vpop.f32.mrb[0].mxu0
    %v1825 = vpop.f32.mrb[0].mxu0
    %v1826 = vpop.f32.mrb[0].mxu0
    %1827 = vdwg.mxu0
    %v1828 = vsel %vm1001, %v1823, 0.0
    %v1829 = vrot.slane %v1828, 4
    %v1830 = vadd.f32 %v1828, %v1829
    %v1831 = vrot.slane %v1830, 2
    %v1832 = vadd.f32 %v1830, %v1831
    %v1833 = vrot.slane %v1832, 1
    %v1834 = vadd.f32 %v1832, %v1833
    %v1835 = vrcp.pop 2.0
    %v1836 = vmul.f32 %v1834, %v1835
    %v1837 = vmul.f32 %v1823, %v1823
    %v1838 = vsel %vm1001, %v1837, 0.0
    %v1839 = vrot.slane %v1838, 4
    %v1840 = vadd.f32 %v1838, %v1839
    %v1841 = vrot.slane %v1840, 2
    %v1842 = vadd.f32 %v1840, %v1841
    %v1843 = vrot.slane %v1842, 1
    %v1844 = vadd.f32 %v1842, %v1843
    %v1845 = vmul.f32 %v1844, %v1835
    %v1846 = vmul.f32 %v1836, %v1836
    %v1847 = vsub.f32 %v1845, %v1846
    %v1848 = vmax.f32 %v1847, 0.0
    %v1849 = vsub.f32 %v1823, %v1836
    %v1850 = vadd.f32 %v1848, 1e-05
    %v1851 = vrsqrt.pop %v1850
    %v1852 = vmul.f32 %v1849, %v1851
    %s1853 = scalar_lea.vmem %s8, 1
    %v1854 = vld [vmem:[%s1853] sm:$0x1]
    %v1856 = vlaneseq
    %v1857 = vshrl.u32 %v1856, 7
    %v1858 = vsub.s32 0, %v1857
    %v1859 = vrot.slane %v1854, %v1858
    %v1861 = vmul.f32 %v1852, %v1859
    %s1862 = scalar_lea.vmem %s8, 2
    %v1863 = vld [vmem:[%s1862] sm:$0x1]
    %v1865 = vlaneseq
    %v1866 = vshrl.u32 %v1865, 7
    %v1867 = vsub.s32 0, %v1866
    %v1868 = vrot.slane %v1863, %v1867
    %v1870 = vadd.f32 %v1861, %v1868
    %1871 = vst [vmem:[#allocation12] sm:$0x3] %v1870
    %v1872 = vld [vmem:[%s1 + $0x3] sm:$0xff]
    %v1873 = vld [vmem:[%s1 + $0xb] sm:$0xff]
    %v1874 = vld [vmem:[%s1 + $0x13] sm:$0xff]
    %v1875 = vld [vmem:[%s1 + $0x1b] sm:$0xff]
    %v1876 = vld [vmem:[#allocation3] sm:$0xff]
    %v1877 = vld [vmem:[#allocation3 + $0x8] sm:$0xff]
    %v1878 = vld [vmem:[#allocation3 + $0x10] sm:$0xff]
    %v1879 = vld [vmem:[#allocation3 + $0x18] sm:$0xff]
    %1881 = vset.pattern.permute.xlu0 0
    %1882 = vperm.xlu0 %1881, %v1876
    %v1883 = vpop.permute.xlu0 %1882
    %1886 = vset.pattern.permute.xlu0 0
    %1887 = vperm.xlu0 %1886, %v1877
    %v1888 = vpop.permute.xlu0 %1887
    %1891 = vset.pattern.permute.xlu0 0
    %1892 = vperm.xlu0 %1891, %v1878
    %v1893 = vpop.permute.xlu0 %1892
    %1896 = vset.pattern.permute.xlu0 0
    %1897 = vperm.xlu0 %1896, %v1879
    %v1898 = vpop.permute.xlu0 %1897
    %v1900 = vmul.f32 %v1872, %v1883
    %v1901 = vmul.f32 %v1873, %v1888
    %v1902 = vmul.f32 %v1874, %v1893
    %v1903 = vmul.f32 %v1875, %v1898
    %v1904 = vpack.c.bf16 %v1901, %v1900
    %v1905 = vpack.c.bf16 %v1903, %v1902
    %v1906 = vld [vmem:[%s1 + $0x4] sm:$0xff]
    %v1907 = vld [vmem:[%s1 + $0xc] sm:$0xff]
    %v1908 = vld [vmem:[%s1 + $0x14] sm:$0xff]
    %v1909 = vld [vmem:[%s1 + $0x1c] sm:$0xff]
    %v1910 = vld [vmem:[%s138] sm:$0xff]
    %v1911 = vld [vmem:[%s138 + $0x8] sm:$0xff]
    %v1912 = vld [vmem:[%s138 + $0x10] sm:$0xff]
    %v1913 = vld [vmem:[%s138 + $0x18] sm:$0xff]
    %1915 = vset.pattern.permute.xlu0 0
    %1916 = vperm.xlu0 %1915, %v1910
    %v1917 = vpop.permute.xlu0 %1916
    %1920 = vset.pattern.permute.xlu0 0
    %1921 = vperm.xlu0 %1920, %v1911
    %v1922 = vpop.permute.xlu0 %1921
    %1925 = vset.pattern.permute.xlu0 0
    %1926 = vperm.xlu0 %1925, %v1912
    %v1927 = vpop.permute.xlu0 %1926
    %1930 = vset.pattern.permute.xlu0 0
    %1931 = vperm.xlu0 %1930, %v1913
    %v1932 = vpop.permute.xlu0 %1931
    %v1934 = vmul.f32 %v1906, %v1917
    %v1935 = vmul.f32 %v1907, %v1922
    %v1936 = vmul.f32 %v1908, %v1927
    %v1937 = vmul.f32 %v1909, %v1932
    %v1938 = vpack.c.bf16 %v1935, %v1934
    %v1939 = vpack.c.bf16 %v1937, %v1936
    %v1940 = vld [vmem:[%s1 + $0x5] sm:$0xff]
    %v1941 = vld [vmem:[%s1 + $0xd] sm:$0xff]
    %v1942 = vld [vmem:[%s1 + $0x15] sm:$0xff]
    %v1943 = vld [vmem:[%s1 + $0x1d] sm:$0xff]
    %v1944 = vld [vmem:[%s173] sm:$0xff]
    %v1945 = vld [vmem:[%s173 + $0x8] sm:$0xff]
    %v1946 = vld [vmem:[%s173 + $0x10] sm:$0xff]
    %v1947 = vld [vmem:[%s173 + $0x18] sm:$0xff]
    %1949 = vset.pattern.permute.xlu0 0
    %1950 = vperm.xlu0 %1949, %v1944
    %v1951 = vpop.permute.xlu0 %1950
    %1954 = vset.pattern.permute.xlu0 0
    %1955 = vperm.xlu0 %1954, %v1945
    %v1956 = vpop.permute.xlu0 %1955
    %1959 = vset.pattern.permute.xlu0 0
    %1960 = vperm.xlu0 %1959, %v1946
    %v1961 = vpop.permute.xlu0 %1960
    %1964 = vset.pattern.permute.xlu0 0
    %1965 = vperm.xlu0 %1964, %v1947
    %v1966 = vpop.permute.xlu0 %1965
    %v1968 = vmul.f32 %v1940, %v1951
    %v1969 = vmul.f32 %v1941, %v1956
    %v1970 = vmul.f32 %v1942, %v1961
    %v1971 = vmul.f32 %v1943, %v1966
    %v1972 = vpack.c.bf16 %v1969, %v1968
    %v1973 = vpack.c.bf16 %v1971, %v1970
    %v1974 = vld [vmem:[%s1 + $0x7] sm:$0xff]
    %v1975 = vld [vmem:[%s1 + $0xf] sm:$0xff]
    %v1976 = vld [vmem:[%s1 + $0x17] sm:$0xff]
    %v1977 = vld [vmem:[%s1 + $0x1f] sm:$0xff]
    %v1978 = vld [vmem:[%s208] sm:$0xff]
    %v1979 = vld [vmem:[%s208 + $0x8] sm:$0xff]
    %v1980 = vld [vmem:[%s208 + $0x10] sm:$0xff]
    %v1981 = vld [vmem:[%s208 + $0x18] sm:$0xff]
    %1983 = vset.pattern.permute.xlu0 0
    %1984 = vperm.xlu0 %1983, %v1978
    %v1985 = vpop.permute.xlu0 %1984
    %1988 = vset.pattern.permute.xlu0 0
    %1989 = vperm.xlu0 %1988, %v1979
    %v1990 = vpop.permute.xlu0 %1989
    %1993 = vset.pattern.permute.xlu0 0
    %1994 = vperm.xlu0 %1993, %v1980
    %v1995 = vpop.permute.xlu0 %1994
    %1998 = vset.pattern.permute.xlu0 0
    %1999 = vperm.xlu0 %1998, %v1981
    %v2000 = vpop.permute.xlu0 %1999
    %v2002 = vmul.f32 %v1974, %v1985
    %v2003 = vmul.f32 %v1975, %v1990
    %v2004 = vmul.f32 %v1976, %v1995
    %v2005 = vmul.f32 %v1977, %v2000
    %v2006 = vpack.c.bf16 %v2003, %v2002
    %v2007 = vpack.c.bf16 %v2005, %v2004
    %v2008 = vld [vmem:[%s1 + $0x8] sm:$0xff]
    %v2009 = vld [vmem:[%s1 + $0x10] sm:$0xff]
    %v2010 = vld [vmem:[%s1 + $0x18] sm:$0xff]
    %v2011 = vld [vmem:[%s1 + $0x20] sm:$0xff]
    %v2012 = vld [vmem:[%s243] sm:$0xff]
    %v2013 = vld [vmem:[%s243 + $0x8] sm:$0xff]
    %v2014 = vld [vmem:[%s243 + $0x10] sm:$0xff]
    %v2015 = vld [vmem:[%s243 + $0x18] sm:$0xff]
    %2017 = vset.pattern.permute.xlu0 0
    %2018 = vperm.xlu0 %2017, %v2012
    %v2019 = vpop.permute.xlu0 %2018
    %2022 = vset.pattern.permute.xlu0 0
    %2023 = vperm.xlu0 %2022, %v2013
    %v2024 = vpop.permute.xlu0 %2023
    %2027 = vset.pattern.permute.xlu0 0
    %2028 = vperm.xlu0 %2027, %v2014
    %v2029 = vpop.permute.xlu0 %2028
    %2032 = vset.pattern.permute.xlu0 0
    %2033 = vperm.xlu0 %2032, %v2015
    %v2034 = vpop.permute.xlu0 %2033
    %v2036 = vmul.f32 %v2008, %v2019
    %v2037 = vmul.f32 %v2009, %v2024
    %v2038 = vmul.f32 %v2010, %v2029
    %v2039 = vmul.f32 %v2011, %v2034
    %v2040 = vpack.c.bf16 %v2037, %v2036
    %v2041 = vpack.c.bf16 %v2039, %v2038
    %v2042 = vld [vmem:[%s1 + $0x9] sm:$0xff]
    %v2043 = vld [vmem:[%s1 + $0x11] sm:$0xff]
    %v2044 = vld [vmem:[%s1 + $0x19] sm:$0xff]
    %v2045 = vld [vmem:[%s1 + $0x21] sm:$0xff]
    %v2046 = vld [vmem:[%s278] sm:$0xff]
    %v2047 = vld [vmem:[%s278 + $0x8] sm:$0xff]
    %v2048 = vld [vmem:[%s278 + $0x10] sm:$0xff]
    %v2049 = vld [vmem:[%s278 + $0x18] sm:$0xff]
    %2051 = vset.pattern.permute.xlu0 0
    %2052 = vperm.xlu0 %2051, %v2046
    %v2053 = vpop.permute.xlu0 %2052
    %2056 = vset.pattern.permute.xlu0 0
    %2057 = vperm.xlu0 %2056, %v2047
    %v2058 = vpop.permute.xlu0 %2057
    %2061 = vset.pattern.permute.xlu0 0
    %2062 = vperm.xlu0 %2061, %v2048
    %v2063 = vpop.permute.xlu0 %2062
    %2066 = vset.pattern.permute.xlu0 0
    %2067 = vperm.xlu0 %2066, %v2049
    %v2068 = vpop.permute.xlu0 %2067
    %v2070 = vmul.f32 %v2042, %v2053
    %v2071 = vmul.f32 %v2043, %v2058
    %v2072 = vmul.f32 %v2044, %v2063
    %v2073 = vmul.f32 %v2045, %v2068
    %v2074 = vpack.c.bf16 %v2071, %v2070
    %v2075 = vpack.c.bf16 %v2073, %v2072
    %v2076 = vld [vmem:[%s1 + $0xb] sm:$0xff]
    %v2077 = vld [vmem:[%s1 + $0x13] sm:$0xff]
    %v2078 = vld [vmem:[%s1 + $0x1b] sm:$0xff]
    %v2079 = vld [vmem:[%s1 + $0x23] sm:$0xff]
    %v2080 = vld [vmem:[%s313] sm:$0xff]
    %v2081 = vld [vmem:[%s313 + $0x8] sm:$0xff]
    %v2082 = vld [vmem:[%s313 + $0x10] sm:$0xff]
    %v2083 = vld [vmem:[%s313 + $0x18] sm:$0xff]
    %2085 = vset.pattern.permute.xlu0 0
    %2086 = vperm.xlu0 %2085, %v2080
    %v2087 = vpop.permute.xlu0 %2086
    %2090 = vset.pattern.permute.xlu0 0
    %2091 = vperm.xlu0 %2090, %v2081
    %v2092 = vpop.permute.xlu0 %2091
    %2095 = vset.pattern.permute.xlu0 0
    %2096 = vperm.xlu0 %2095, %v2082
    %v2097 = vpop.permute.xlu0 %2096
    %2100 = vset.pattern.permute.xlu0 0
    %2101 = vperm.xlu0 %2100, %v2083
    %v2102 = vpop.permute.xlu0 %2101
    %v2104 = vmul.f32 %v2076, %v2087
    %v2105 = vmul.f32 %v2077, %v2092
    %v2106 = vmul.f32 %v2078, %v2097
    %v2107 = vmul.f32 %v2079, %v2102
    %v2108 = vpack.c.bf16 %v2105, %v2104
    %v2109 = vpack.c.bf16 %v2107, %v2106
    %v2110 = vld [vmem:[%s1 + $0xc] sm:$0xff]
    %v2111 = vld [vmem:[%s1 + $0x14] sm:$0xff]
    %v2112 = vld [vmem:[%s1 + $0x1c] sm:$0xff]
    %v2113 = vld [vmem:[%s1 + $0x24] sm:$0xff]
    %v2114 = vld [vmem:[%s348] sm:$0xff]
    %v2115 = vld [vmem:[%s348 + $0x8] sm:$0xff]
    %v2116 = vld [vmem:[%s348 + $0x10] sm:$0xff]
    %v2117 = vld [vmem:[%s348 + $0x18] sm:$0xff]
    %2119 = vset.pattern.permute.xlu0 0
    %2120 = vperm.xlu0 %2119, %v2114
    %v2121 = vpop.permute.xlu0 %2120
    %2124 = vset.pattern.permute.xlu0 0
    %2125 = vperm.xlu0 %2124, %v2115
    %v2126 = vpop.permute.xlu0 %2125
    %2129 = vset.pattern.permute.xlu0 0
    %2130 = vperm.xlu0 %2129, %v2116
    %v2131 = vpop.permute.xlu0 %2130
    %2134 = vset.pattern.permute.xlu0 0
    %2135 = vperm.xlu0 %2134, %v2117
    %v2136 = vpop.permute.xlu0 %2135
    %v2138 = vmul.f32 %v2110, %v2121
    %v2139 = vmul.f32 %v2111, %v2126
    %v2140 = vmul.f32 %v2112, %v2131
    %v2141 = vmul.f32 %v2113, %v2136
    %v2142 = vpack.c.bf16 %v2139, %v2138
    %v2143 = vpack.c.bf16 %v2141, %v2140
    %v2144 = vld [vmem:[%s1 + $0xd] sm:$0xff]
    %v2145 = vld [vmem:[%s1 + $0x15] sm:$0xff]
    %v2146 = vld [vmem:[%s1 + $0x1d] sm:$0xff]
    %v2147 = vld [vmem:[%s1 + $0x25] sm:$0xff]
    %v2148 = vld [vmem:[%s383] sm:$0xff]
    %v2149 = vld [vmem:[%s383 + $0x8] sm:$0xff]
    %v2150 = vld [vmem:[%s383 + $0x10] sm:$0xff]
    %v2151 = vld [vmem:[%s383 + $0x18] sm:$0xff]
    %2153 = vset.pattern.permute.xlu0 0
    %2154 = vperm.xlu0 %2153, %v2148
    %v2155 = vpop.permute.xlu0 %2154
    %2158 = vset.pattern.permute.xlu0 0
    %2159 = vperm.xlu0 %2158, %v2149
    %v2160 = vpop.permute.xlu0 %2159
    %2163 = vset.pattern.permute.xlu0 0
    %2164 = vperm.xlu0 %2163, %v2150
    %v2165 = vpop.permute.xlu0 %2164
    %2168 = vset.pattern.permute.xlu0 0
    %2169 = vperm.xlu0 %2168, %v2151
    %v2170 = vpop.permute.xlu0 %2169
    %v2172 = vmul.f32 %v2144, %v2155
    %v2173 = vmul.f32 %v2145, %v2160
    %v2174 = vmul.f32 %v2146, %v2165
    %v2175 = vmul.f32 %v2147, %v2170
    %v2176 = vpack.c.bf16 %v2173, %v2172
    %v2177 = vpack.c.bf16 %v2175, %v2174
    %2180 = vrot.lane.b32.xlu0 %v1938, 64
    %v2181 = vpop.permute.xlu0 %2180
    %2182 = vrot.lane.b32.xlu0 %v1939, 64
    %v2183 = vpop.permute.xlu0 %2182
    %2186 = vrot.lane.b32.xlu0 %v2006, 64
    %v2187 = vpop.permute.xlu0 %2186
    %2188 = vrot.lane.b32.xlu0 %v2007, 64
    %v2189 = vpop.permute.xlu0 %2188
    %2192 = vrot.lane.b32.xlu0 %v2074, 64
    %v2193 = vpop.permute.xlu0 %2192
    %2194 = vrot.lane.b32.xlu0 %v2075, 64
    %v2195 = vpop.permute.xlu0 %2194
    %2198 = vrot.lane.b32.xlu0 %v2142, 64
    %v2199 = vpop.permute.xlu0 %2198
    %2200 = vrot.lane.b32.xlu0 %v2143, 64
    %v2201 = vpop.permute.xlu0 %2200
    %v2204 = vsel %vm438, %v1904, %v2181
    %v2208 = vsel %vm438, %v1905, %v2183
    %v2212 = vsel %vm438, %v1972, %v2187
    %v2216 = vsel %vm438, %v1973, %v2189
    %v2220 = vsel %vm438, %v2040, %v2193
    %v2224 = vsel %vm438, %v2041, %v2195
    %v2228 = vsel %vm438, %v2108, %v2199
    %v2232 = vsel %vm438, %v2109, %v2201
    %v2234 = vld [vmem:[#allocation9] sm:$0xf]
    %v2235 = vld [vmem:[#allocation9 + $0x4] sm:$0xf]
    %v2236 = vld [vmem:[#allocation9 + $0x8] sm:$0xf]
    %v2237 = vld [vmem:[#allocation9 + $0xc] sm:$0xf]
    %v2238 = vld [vmem:[#allocation9 + $0x10] sm:$0xf]
    %v2239 = vld [vmem:[#allocation9 + $0x14] sm:$0xf]
    %v2240 = vld [vmem:[#allocation9 + $0x18] sm:$0xf]
    %v2241 = vld [vmem:[#allocation9 + $0x1c] sm:$0xf]
    %v2242 = vld [vmem:[#allocation9 + $0x20] sm:$0xf]
    %v2243 = vld [vmem:[#allocation9 + $0x24] sm:$0xf]
    %v2244 = vld [vmem:[#allocation9 + $0x28] sm:$0xf]
    %v2245 = vld [vmem:[#allocation9 + $0x2c] sm:$0xf]
    %v2246 = vld [vmem:[#allocation9 + $0x30] sm:$0xf]
    %v2247 = vld [vmem:[#allocation9 + $0x34] sm:$0xf]
    %v2248 = vld [vmem:[#allocation9 + $0x38] sm:$0xf]
    %v2249 = vld [vmem:[#allocation9 + $0x3c] sm:$0xf]
    %v2250 = vld [vmem:[#allocation9 + $0x40] sm:$0xf]
    %v2251 = vld [vmem:[#allocation9 + $0x44] sm:$0xf]
    %v2252 = vld [vmem:[#allocation9 + $0x48] sm:$0xf]
    %v2253 = vld [vmem:[#allocation9 + $0x4c] sm:$0xf]
    %v2254 = vld [vmem:[#allocation9 + $0x50] sm:$0xf]
    %v2255 = vld [vmem:[#allocation9 + $0x54] sm:$0xf]
    %v2256 = vld [vmem:[#allocation9 + $0x58] sm:$0xf]
    %v2257 = vld [vmem:[#allocation9 + $0x5c] sm:$0xf]
    %v2258 = vld [vmem:[#allocation9 + $0x60] sm:$0xf]
    %v2259 = vld [vmem:[#allocation9 + $0x64] sm:$0xf]
    %v2260 = vld [vmem:[#allocation9 + $0x68] sm:$0xf]
    %v2261 = vld [vmem:[#allocation9 + $0x6c] sm:$0xf]
    %v2262 = vld [vmem:[#allocation9 + $0x70] sm:$0xf]
    %v2263 = vld [vmem:[#allocation9 + $0x74] sm:$0xf]
    %v2264 = vld [vmem:[#allocation9 + $0x78] sm:$0xf]
    %v2265 = vld [vmem:[#allocation9 + $0x7c] sm:$0xf]
    %v2266 = vld [vmem:[#allocation9 + $0x80] sm:$0xf]
    %v2267 = vld [vmem:[#allocation9 + $0x84] sm:$0xf]
    %v2268 = vld [vmem:[#allocation9 + $0x88] sm:$0xf]
    %v2269 = vld [vmem:[#allocation9 + $0x8c] sm:$0xf]
    %v2270 = vld [vmem:[#allocation9 + $0x90] sm:$0xf]
    %v2271 = vld [vmem:[#allocation9 + $0x94] sm:$0xf]
    %v2272 = vld [vmem:[#allocation9 + $0x98] sm:$0xf]
    %v2273 = vld [vmem:[#allocation9 + $0x9c] sm:$0xf]
    %v2274 = vld [vmem:[#allocation9 + $0xa0] sm:$0xf]
    %v2275 = vld [vmem:[#allocation9 + $0xa4] sm:$0xf]
    %v2276 = vld [vmem:[#allocation9 + $0xa8] sm:$0xf]
    %v2277 = vld [vmem:[#allocation9 + $0xac] sm:$0xf]
    %v2278 = vld [vmem:[#allocation9 + $0xb0] sm:$0xf]
    %v2279 = vld [vmem:[#allocation9 + $0xb4] sm:$0xf]
    %v2280 = vld [vmem:[#allocation9 + $0xb8] sm:$0xf]
    %v2281 = vld [vmem:[#allocation9 + $0xbc] sm:$0xf]
    %v2282 = vld [vmem:[#allocation9 + $0xc0] sm:$0xf]
    %v2283 = vld [vmem:[#allocation9 + $0xc4] sm:$0xf]
    %v2284 = vld [vmem:[#allocation9 + $0xc8] sm:$0xf]
    %v2285 = vld [vmem:[#allocation9 + $0xcc] sm:$0xf]
    %v2286 = vld [vmem:[#allocation9 + $0xd0] sm:$0xf]
    %v2287 = vld [vmem:[#allocation9 + $0xd4] sm:$0xf]
    %v2288 = vld [vmem:[#allocation9 + $0xd8] sm:$0xf]
    %v2289 = vld [vmem:[#allocation9 + $0xdc] sm:$0xf]
    %v2290 = vld [vmem:[#allocation9 + $0xe0] sm:$0xf]
    %v2291 = vld [vmem:[#allocation9 + $0xe4] sm:$0xf]
    %v2292 = vld [vmem:[#allocation9 + $0xe8] sm:$0xf]
    %v2293 = vld [vmem:[#allocation9 + $0xec] sm:$0xf]
    %v2294 = vld [vmem:[#allocation9 + $0xf0] sm:$0xf]
    %v2295 = vld [vmem:[#allocation9 + $0xf4] sm:$0xf]
    %v2296 = vld [vmem:[#allocation9 + $0xf8] sm:$0xf]
    %v2297 = vld [vmem:[#allocation9 + $0xfc] sm:$0xf]
    %v2298 = vld [vmem:[#allocation9 + $0x100] sm:$0xf]
    %v2299 = vld [vmem:[#allocation9 + $0x104] sm:$0xf]
    %v2300 = vld [vmem:[#allocation9 + $0x108] sm:$0xf]
    %v2301 = vld [vmem:[#allocation9 + $0x10c] sm:$0xf]
    %v2302 = vld [vmem:[#allocation9 + $0x110] sm:$0xf]
    %v2303 = vld [vmem:[#allocation9 + $0x114] sm:$0xf]
    %v2304 = vld [vmem:[#allocation9 + $0x118] sm:$0xf]
    %v2305 = vld [vmem:[#allocation9 + $0x11c] sm:$0xf]
    %v2306 = vld [vmem:[%s10] sm:$0x1]
    %v2308 = vlaneseq
    %v2309 = vshrl.u32 %v2308, 7
    %v2310 = vsub.s32 0, %v2309
    %v2311 = vrot.slane %v2306, %v2310
    %v2385 = vunpack.c.l.b16 %v2234
    %v2386 = vunpack.c.l.b16 %v2235
    %v2387 = vunpack.c.l.b16 %v2236
    %v2388 = vunpack.c.l.b16 %v2237
    %v2389 = vunpack.c.l.b16 %v2238
    %v2390 = vunpack.c.l.b16 %v2239
    %v2391 = vunpack.c.l.b16 %v2240
    %v2392 = vunpack.c.l.b16 %v2241
    %v2393 = vunpack.c.l.b16 %v2242
    %v2394 = vunpack.c.l.b16 %v2243
    %v2395 = vunpack.c.l.b16 %v2244
    %v2396 = vunpack.c.l.b16 %v2245
    %v2397 = vunpack.c.l.b16 %v2246
    %v2398 = vunpack.c.l.b16 %v2247
    %v2399 = vunpack.c.l.b16 %v2248
    %v2400 = vunpack.c.l.b16 %v2249
    %v2401 = vunpack.c.l.b16 %v2250
    %v2402 = vunpack.c.l.b16 %v2251
    %v2403 = vunpack.c.l.b16 %v2252
    %v2404 = vunpack.c.l.b16 %v2253
    %v2405 = vunpack.c.l.b16 %v2254
    %v2406 = vunpack.c.l.b16 %v2255
    %v2407 = vunpack.c.l.b16 %v2256
    %v2408 = vunpack.c.l.b16 %v2257
    %v2409 = vunpack.c.l.b16 %v2258
    %v2410 = vunpack.c.l.b16 %v2259
    %v2411 = vunpack.c.l.b16 %v2260
    %v2412 = vunpack.c.l.b16 %v2261
    %v2413 = vunpack.c.l.b16 %v2262
    %v2414 = vunpack.c.l.b16 %v2263
    %v2415 = vunpack.c.l.b16 %v2264
    %v2416 = vunpack.c.l.b16 %v2265
    %v2417 = vunpack.c.l.b16 %v2266
    %v2418 = vunpack.c.l.b16 %v2267
    %v2419 = vunpack.c.l.b16 %v2268
    %v2420 = vunpack.c.l.b16 %v2269
    %v2421 = vunpack.c.l.b16 %v2270
    %v2422 = vunpack.c.l.b16 %v2271
    %v2423 = vunpack.c.l.b16 %v2272
    %v2424 = vunpack.c.l.b16 %v2273
    %v2425 = vunpack.c.l.b16 %v2274
    %v2426 = vunpack.c.l.b16 %v2275
    %v2427 = vunpack.c.l.b16 %v2276
    %v2428 = vunpack.c.l.b16 %v2277
    %v2429 = vunpack.c.l.b16 %v2278
    %v2430 = vunpack.c.l.b16 %v2279
    %v2431 = vunpack.c.l.b16 %v2280
    %v2432 = vunpack.c.l.b16 %v2281
    %v2433 = vunpack.c.l.b16 %v2282
    %v2434 = vunpack.c.l.b16 %v2283
    %v2435 = vunpack.c.l.b16 %v2284
    %v2436 = vunpack.c.l.b16 %v2285
    %v2437 = vunpack.c.l.b16 %v2286
    %v2438 = vunpack.c.l.b16 %v2287
    %v2439 = vunpack.c.l.b16 %v2288
    %v2440 = vunpack.c.l.b16 %v2289
    %v2441 = vunpack.c.l.b16 %v2290
    %v2442 = vunpack.c.l.b16 %v2291
    %v2443 = vunpack.c.l.b16 %v2292
    %v2444 = vunpack.c.l.b16 %v2293
    %v2445 = vunpack.c.l.b16 %v2294
    %v2446 = vunpack.c.l.b16 %v2295
    %v2447 = vunpack.c.l.b16 %v2296
    %v2448 = vunpack.c.l.b16 %v2297
    %v2449 = vunpack.c.l.b16 %v2298
    %v2450 = vunpack.c.l.b16 %v2299
    %v2451 = vunpack.c.l.b16 %v2300
    %v2452 = vunpack.c.l.b16 %v2301
    %v2453 = vunpack.c.l.b16 %v2302
    %v2454 = vunpack.c.l.b16 %v2303
    %v2455 = vunpack.c.l.b16 %v2304
    %v2456 = vunpack.c.l.b16 %v2305
    %v2457 = vpack.c.b16 %v2386, %v2385
    %v2458 = vpack.c.b16 %v2388, %v2387
    %v2459 = vpack.c.b16 %v2390, %v2389
    %v2460 = vpack.c.b16 %v2392, %v2391
    %v2461 = vpack.c.b16 %v2394, %v2393
    %v2462 = vpack.c.b16 %v2396, %v2395
    %v2463 = vpack.c.b16 %v2398, %v2397
    %v2464 = vpack.c.b16 %v2400, %v2399
    %v2465 = vpack.c.b16 %v2402, %v2401
    %v2466 = vpack.c.b16 %v2404, %v2403
    %v2467 = vpack.c.b16 %v2406, %v2405
    %v2468 = vpack.c.b16 %v2408, %v2407
    %v2469 = vpack.c.b16 %v2410, %v2409
    %v2470 = vpack.c.b16 %v2412, %v2411
    %v2471 = vpack.c.b16 %v2414, %v2413
    %v2472 = vpack.c.b16 %v2416, %v2415
    %v2473 = vpack.c.b16 %v2418, %v2417
    %v2474 = vpack.c.b16 %v2420, %v2419
    %v2475 = vpack.c.b16 %v2422, %v2421
    %v2476 = vpack.c.b16 %v2424, %v2423
    %v2477 = vpack.c.b16 %v2426, %v2425
    %v2478 = vpack.c.b16 %v2428, %v2427
    %v2479 = vpack.c.b16 %v2430, %v2429
    %v2480 = vpack.c.b16 %v2432, %v2431
    %v2481 = vpack.c.b16 %v2434, %v2433
    %v2482 = vpack.c.b16 %v2436, %v2435
    %v2483 = vpack.c.b16 %v2438, %v2437
    %v2484 = vpack.c.b16 %v2440, %v2439
    %v2485 = vpack.c.b16 %v2442, %v2441
    %v2486 = vpack.c.b16 %v2444, %v2443
    %v2487 = vpack.c.b16 %v2446, %v2445
    %v2488 = vpack.c.b16 %v2448, %v2447
    %v2489 = vpack.c.b16 %v2450, %v2449
    %v2490 = vpack.c.b16 %v2452, %v2451
    %v2491 = vpack.c.b16 %v2454, %v2453
    %v2492 = vpack.c.b16 %v2456, %v2455
    %v2530 = vsel %vm438, %v2176, 0
    %v2533 = vsel %vm438, %v2177, 0
    %2535 = vmatprep.subr.bf16.mxu0 0
    %2536 = vmatpush1.bf16.msra.mxu0 %v2457
    %2537 = vmatprep.subr.bf16.mxu0 0
    %2538 = vmatpush1.bf16.msra.mxu0 %v2458
    %2539 = vmatprep.subr.bf16.mxu0 0
    %2540 = vmatpush1.bf16.msra.mxu0 %v2459
    %2541 = vmatprep.subr.bf16.mxu0 0
    %2542 = vmatpush1.bf16.msra.mxu0 %v2460
    %2543 = vmatprep.subr.bf16.mxu0 0
    %2544 = vmatpush1.bf16.msra.mxu0 %v2461
    %2545 = vmatprep.subr.bf16.mxu0 0
    %2546 = vmatpush1.bf16.msra.mxu0 %v2462
    %2547 = vmatprep.subr.bf16.mxu0 0
    %2548 = vmatpush1.bf16.msra.mxu0 %v2463
    %2549 = vmatprep.subr.bf16.mxu0 0
    %2550 = vmatpush1.bf16.msra.mxu0 %v2464
    %2551 = vmatprep.subr.bf16.mxu0 0
    %2552 = vmatpush1.bf16.msra.mxu0 %v2465
    %2553 = vmatprep.subr.bf16.mxu0 0
    %2554 = vmatpush1.bf16.msra.mxu0 %v2466
    %2555 = vmatprep.subr.bf16.mxu0 0
    %2556 = vmatpush1.bf16.msra.mxu0 %v2467
    %2557 = vmatprep.subr.bf16.mxu0 0
    %2558 = vmatpush1.bf16.msra.mxu0 %v2468
    %2559 = vmatprep.subr.bf16.mxu0 0
    %2560 = vmatpush1.bf16.msra.mxu0 %v2469
    %2561 = vmatprep.subr.bf16.mxu0 0
    %2562 = vmatpush1.bf16.msra.mxu0 %v2470
    %2563 = vmatprep.subr.bf16.mxu0 0
    %2564 = vmatpush1.bf16.msra.mxu0 %v2471
    %2565 = vmatprep.subr.bf16.mxu0 0
    %2566 = vmatpush1.bf16.msra.mxu0 %v2472
    %2567 = vmatprep.mubr.bf16.mxu0 %v2212
    %2568 = vmatmul.mubr.bf16.gmra.mrb[0].mxu0 %v2204
    %v2569 = vpop.f32.mrb[0].mxu0
    %v2570 = vadd.f32 %v2311, %v2569
    %v2571 = vpop.f32.mrb[0].mxu0
    %v2572 = vpop.f32.mrb[0].mxu0
    %v2573 = vadd.f32 %v2311, %v2572
    %v2574 = vpop.f32.mrb[0].mxu0
    %2575 = vmatprep.mubr.bf16.mxu0 %v2216
    %2576 = vmatmul.mubr.bf16.gmra.mrb[0].mxu0 %v2208
    %v2577 = vpop.f32.mrb[0].mxu0
    %v2578 = vadd.f32 %v2311, %v2577
    %v2579 = vpop.f32.mrb[0].mxu0
    %v2580 = vpop.f32.mrb[0].mxu0
    %v2581 = vadd.f32 %v2311, %v2580
    %v2582 = vpop.f32.mrb[0].mxu0
    %2583 = vdwg.mxu0
    %2584 = vmatprep.subr.bf16.mxu0 0
    %2585 = vmatpush1.bf16.msra.mxu0 %v2473
    %2586 = vmatprep.subr.bf16.mxu0 0
    %2587 = vmatpush1.bf16.msra.mxu0 %v2474
    %2588 = vmatprep.subr.bf16.mxu0 0
    %2589 = vmatpush1.bf16.msra.mxu0 %v2475
    %2590 = vmatprep.subr.bf16.mxu0 0
    %2591 = vmatpush1.bf16.msra.mxu0 %v2476
    %2592 = vmatprep.subr.bf16.mxu0 0
    %2593 = vmatpush1.bf16.msra.mxu0 %v2477
    %2594 = vmatprep.subr.bf16.mxu0 0
    %2595 = vmatpush1.bf16.msra.mxu0 %v2478
    %2596 = vmatprep.subr.bf16.mxu0 0
    %2597 = vmatpush1.bf16.msra.mxu0 %v2479
    %2598 = vmatprep.subr.bf16.mxu0 0
    %2599 = vmatpush1.bf16.msra.mxu0 %v2480
    %2600 = vmatprep.subr.bf16.mxu0 0
    %2601 = vmatpush1.bf16.msra.mxu0 %v2481
    %2602 = vmatprep.subr.bf16.mxu0 0
    %2603 = vmatpush1.bf16.msra.mxu0 %v2482
    %2604 = vmatprep.subr.bf16.mxu0 0
    %2605 = vmatpush1.bf16.msra.mxu0 %v2483
    %2606 = vmatprep.subr.bf16.mxu0 0
    %2607 = vmatpush1.bf16.msra.mxu0 %v2484
    %2608 = vmatprep.subr.bf16.mxu0 0
    %2609 = vmatpush1.bf16.msra.mxu0 %v2485
    %2610 = vmatprep.subr.bf16.mxu0 0
    %2611 = vmatpush1.bf16.msra.mxu0 %v2486
    %2612 = vmatprep.subr.bf16.mxu0 0
    %2613 = vmatpush1.bf16.msra.mxu0 %v2487
    %2614 = vmatprep.subr.bf16.mxu0 0
    %2615 = vmatpush1.bf16.msra.mxu0 %v2488
    %2616 = vmatprep.mubr.bf16.mxu0 %v2228
    %2617 = vmatmul.mubr.bf16.gmra.mrb[0].mxu0 %v2220
    %v2618 = vpop.f32.mrb[0].mxu0
    %v2619 = vadd.f32 %v2570, %v2618
    %v2620 = vpop.f32.mrb[0].mxu0
    %v2621 = vpop.f32.mrb[0].mxu0
    %v2622 = vadd.f32 %v2573, %v2621
    %v2623 = vpop.f32.mrb[0].mxu0
    %2624 = vmatprep.mubr.bf16.mxu0 %v2232
    %2625 = vmatmul.mubr.bf16.gmra.mrb[0].mxu0 %v2224
    %v2626 = vpop.f32.mrb[0].mxu0
    %v2627 = vadd.f32 %v2578, %v2626
    %v2628 = vpop.f32.mrb[0].mxu0
    %v2629 = vpop.f32.mrb[0].mxu0
    %v2630 = vadd.f32 %v2581, %v2629
    %v2631 = vpop.f32.mrb[0].mxu0
    %2632 = vdwg.mxu0
    %2633 = vmatprep.subr.bf16.mxu0 0
    %2634 = vmatpush1.bf16.msra.mxu0 %v2489
    %2635 = vmatprep.subr.bf16.mxu0 0
    %2636 = vmatpush1.bf16.msra.mxu0 %v2490
    %2637 = vmatprep.subr.bf16.mxu0 0
    %2638 = vmatpush1.bf16.msra.mxu0 %v2491
    %2639 = vmatprep.subr.bf16.mxu0 0
    %2640 = vmatpush1.bf16.msra.mxu0 %v2492
    %2641 = vmatprep.subr.bf16.mxu0 0
    %2642 = vmatpush1.bf16.msra.mxu0 0
    %2643 = vmatprep.subr.bf16.mxu0 0
    %2644 = vmatpush1.bf16.msra.mxu0 0
    %2645 = vmatprep.subr.bf16.mxu0 0
    %2646 = vmatpush1.bf16.msra.mxu0 0
    %2647 = vmatprep.subr.bf16.mxu0 0
    %2648 = vmatpush1.bf16.msra.mxu0 0
    %2649 = vmatprep.subr.bf16.mxu0 0
    %2650 = vmatpush1.bf16.msra.mxu0 0
    %2651 = vmatprep.subr.bf16.mxu0 0
    %2652 = vmatpush1.bf16.msra.mxu0 0
    %2653 = vmatprep.subr.bf16.mxu0 0
    %2654 = vmatpush1.bf16.msra.mxu0 0
    %2655 = vmatprep.subr.bf16.mxu0 0
    %2656 = vmatpush1.bf16.msra.mxu0 0
    %2657 = vmatprep.subr.bf16.mxu0 0
    %2658 = vmatpush1.bf16.msra.mxu0 0
    %2659 = vmatprep.subr.bf16.mxu0 0
    %2660 = vmatpush1.bf16.msra.mxu0 0
    %2661 = vmatprep.subr.bf16.mxu0 0
    %2662 = vmatpush1.bf16.msra.mxu0 0
    %2663 = vmatprep.subr.bf16.mxu0 0
    %2664 = vmatpush1.bf16.msra.mxu0 0
    %2665 = vmatprep.mubr.bf16.mxu0 0
    %2666 = vmatmul.mubr.bf16.gmra.mrb[0].mxu0 %v2530
    %v2667 = vpop.f32.mrb[0].mxu0
    %v2668 = vadd.f32 %v2619, %v2667
    %v2669 = vpop.f32.mrb[0].mxu0
    %v2670 = vpop.f32.mrb[0].mxu0
    %v2671 = vadd.f32 %v2622, %v2670
    %v2672 = vpop.f32.mrb[0].mxu0
    %2673 = vmatprep.mubr.bf16.mxu0 0
    %2674 = vmatmul.mubr.bf16.gmra.mrb[0].mxu0 %v2533
    %v2675 = vpop.f32.mrb[0].mxu0
    %v2676 = vadd.f32 %v2627, %v2675
    %v2677 = vpop.f32.mrb[0].mxu0
    %v2678 = vpop.f32.mrb[0].mxu0
    %v2679 = vadd.f32 %v2630, %v2678
    %v2680 = vpop.f32.mrb[0].mxu0
    %2681 = vdwg.mxu0
    %v2682 = vadd.f32 %v2668, %v2671
    %v2683 = vadd.f32 %v2682, %v2676
    %v2684 = vadd.f32 %v2683, %v2679
    %v2685 = vrot.slane %v2684, 4
    %v2686 = vadd.f32 %v2684, %v2685
    %v2687 = vrot.slane %v2686, 2
    %v2688 = vadd.f32 %v2686, %v2687
    %v2689 = vrot.slane %v2688, 1
    %v2690 = vadd.f32 %v2688, %v2689
    %v2691 = vmul.f32 %v2690, %v928
    %v2692 = vmul.f32 %v2668, %v2668
    %v2693 = vmul.f32 %v2671, %v2671
    %v2694 = vmul.f32 %v2676, %v2676
    %v2695 = vmul.f32 %v2679, %v2679
    %v2696 = vadd.f32 %v2692, %v2693
    %v2697 = vadd.f32 %v2696, %v2694
    %v2698 = vadd.f32 %v2697, %v2695
    %v2699 = vrot.slane %v2698, 4
    %v2700 = vadd.f32 %v2698, %v2699
    %v2701 = vrot.slane %v2700, 2
    %v2702 = vadd.f32 %v2700, %v2701
    %v2703 = vrot.slane %v2702, 1
    %v2704 = vadd.f32 %v2702, %v2703
    %v2705 = vmul.f32 %v2704, %v928
    %v2706 = vmul.f32 %v2691, %v2691
    %v2707 = vsub.f32 %v2705, %v2706
    %v2708 = vmax.f32 %v2707, 0.0
    %v2709 = vsub.f32 %v2668, %v2691
    %v2710 = vsub.f32 %v2671, %v2691
    %v2711 = vsub.f32 %v2676, %v2691
    %v2712 = vsub.f32 %v2679, %v2691
    %v2713 = vadd.f32 %v2708, 1e-05
    %v2714 = vrsqrt.pop %v2713
    %v2715 = vmul.f32 %v2709, %v2714
    %v2716 = vmul.f32 %v2710, %v2714
    %v2717 = vmul.f32 %v2711, %v2714
    %v2718 = vmul.f32 %v2712, %v2714
    %s2719 = scalar_lea.vmem %s10, 1
    %v2720 = vld [vmem:[%s2719] sm:$0x1]
    %v2722 = vlaneseq
    %v2723 = vshrl.u32 %v2722, 7
    %v2724 = vsub.s32 0, %v2723
    %v2725 = vrot.slane %v2720, %v2724
    %v2727 = vmul.f32 %v2715, %v2725
    %v2728 = vmul.f32 %v2716, %v2725
    %v2729 = vmul.f32 %v2717, %v2725
    %v2730 = vmul.f32 %v2718, %v2725
    %s2731 = scalar_lea.vmem %s10, 2
    %v2732 = vld [vmem:[%s2731] sm:$0x1]
    %v2734 = vlaneseq
    %v2735 = vshrl.u32 %v2734, 7
    %v2736 = vsub.s32 0, %v2735
    %v2737 = vrot.slane %v2732, %v2736
    %v2739 = vadd.f32 %v2727, %v2737
    %v2740 = vadd.f32 %v2728, %v2737
    %v2741 = vadd.f32 %v2729, %v2737
    %v2742 = vadd.f32 %v2730, %v2737
    %v2743 = vmul.f32 %v2739, %v2739
    %v2744 = vmul.f32 %v2740, %v2740
    %v2745 = vadd.f32 %v2743, %v2744
    %v2746 = vrot.slane %v2745, 4
    %v2747 = vadd.f32 %v2745, %v2746
    %v2748 = vrot.slane %v2747, 2
    %v2749 = vadd.f32 %v2747, %v2748
    %v2750 = vrot.slane %v2749, 1
    %v2751 = vadd.f32 %v2749, %v2750
    %v2752 = vmax.f32 %v2751, 1e-24
    %v2753 = vrsqrt.pop %v2752
    %v2754 = vmul.f32 %v2739, %v2753
    %v2755 = vmul.f32 %v2740, %v2753
    %2756 = vxpose.xlu0.b32.start [1/16] %v2754, 128
    %2757 = vxpose.xlu0.b32.cont [2/16] %v2755, 128
    %2758 = vxpose.xlu0.b32.cont [3/16] 0.0, 128
    %2759 = vxpose.xlu0.b32.cont [4/16] 0.0, 128
    %2760 = vxpose.xlu0.b32.cont [5/16] 0.0, 128
    %2761 = vxpose.xlu0.b32.cont [6/16] 0.0, 128
    %2762 = vxpose.xlu0.b32.cont [7/16] 0.0, 128
    %2763 = vxpose.xlu0.b32.cont [8/16] 0.0, 128
    %2764 = vxpose.xlu0.b32.cont [9/16] 0.0, 128
    %2765 = vxpose.xlu0.b32.cont [10/16] 0.0, 128
    %2766 = vxpose.xlu0.b32.cont [11/16] 0.0, 128
    %2767 = vxpose.xlu0.b32.cont [12/16] 0.0, 128
    %2768 = vxpose.xlu0.b32.cont [13/16] 0.0, 128
    %2769 = vxpose.xlu0.b32.cont [14/16] 0.0, 128
    %2770 = vxpose.xlu0.b32.cont [15/16] 0.0, 128
    %2771 = vxpose.xlu0.b32.end [16/16] 0.0, 128
    %v2772 = vpop.trf.xlu0
    %v2773 = vpop.trf.xlu0
    %v2774 = vpop.trf.xlu0
    %v2775 = vpop.trf.xlu0
    %v2776 = vpop.trf.xlu0
    %v2777 = vpop.trf.xlu0
    %v2778 = vpop.trf.xlu0
    %v2779 = vpop.trf.xlu0
    %v2780 = vpop.trf.xlu0
    %v2781 = vpop.trf.xlu0
    %v2782 = vpop.trf.xlu0
    %v2783 = vpop.trf.xlu0
    %v2784 = vpop.trf.xlu0
    %v2785 = vpop.trf.xlu0
    %v2786 = vpop.trf.xlu0
    %v2787 = vpop.trf.xlu0
    %vm2788 = vcmask 130048
    %v2790 = vsel %vm2788, %v2772, 0
    %v2793 = vsel %vm2788, %v2773, 0
    %v2796 = vsel %vm2788, %v2774, 0
    %v2799 = vsel %vm2788, %v2775, 0
    %v2802 = vsel %vm2788, %v2776, 0
    %v2805 = vsel %vm2788, %v2777, 0
    %v2808 = vsel %vm2788, %v2778, 0
    %v2811 = vsel %vm2788, %v2779, 0
    %v2814 = vsel %vm2788, %v2780, 0
    %v2817 = vsel %vm2788, %v2781, 0
    %v2820 = vsel %vm2788, %v2782, 0
    %v2823 = vsel %vm2788, %v2783, 0
    %v2826 = vsel %vm2788, %v2784, 0
    %v2829 = vsel %vm2788, %v2785, 0
    %v2832 = vsel %vm2788, %v2786, 0
    %v2835 = vsel %vm2788, %v2787, 0
    %2837 = vmatprep.subr.mxu0 0.0
    %2838 = vmatpush1.msra.mxu0 %v2754
    %2839 = vmatprep.subr.mxu0 0.0
    %2840 = vmatpush1.msra.mxu0 %v2755
    %2841 = vmatprep.subr.mxu0 0.0
    %2842 = vmatpush1.msra.mxu0 0.0
    %2843 = vmatprep.subr.mxu0 0.0
    %2844 = vmatpush1.msra.mxu0 0.0
    %2845 = vmatprep.subr.mxu0 0.0
    %2846 = vmatpush1.msra.mxu0 0.0
    %2847 = vmatprep.subr.mxu0 0.0
    %2848 = vmatpush1.msra.mxu0 0.0
    %2849 = vmatprep.subr.mxu0 0.0
    %2850 = vmatpush1.msra.mxu0 0.0
    %2851 = vmatprep.subr.mxu0 0.0
    %2852 = vmatpush1.msra.mxu0 0.0
    %2853 = vmatprep.subr.mxu0 0.0
    %2854 = vmatpush1.msra.mxu0 0.0
    %2855 = vmatprep.subr.mxu0 0.0
    %2856 = vmatpush1.msra.mxu0 0.0
    %2857 = vmatprep.subr.mxu0 0.0
    %2858 = vmatpush1.msra.mxu0 0.0
    %2859 = vmatprep.subr.mxu0 0.0
    %2860 = vmatpush1.msra.mxu0 0.0
    %2861 = vmatprep.subr.mxu0 0.0
    %2862 = vmatpush1.msra.mxu0 0.0
    %2863 = vmatprep.subr.mxu0 0.0
    %2864 = vmatpush1.msra.mxu0 0.0
    %2865 = vmatprep.subr.mxu0 0.0
    %2866 = vmatpush1.msra.mxu0 0.0
    %2867 = vmatprep.subr.mxu0 0.0
    %2868 = vmatpush1.msra.mxu0 0.0
    %2869 = vmatprep.subr.mxu0 0.0
    %2870 = vmatpush1.msra.mxu0 0.0
    %2871 = vmatprep.subr.mxu0 0.0
    %2872 = vmatpush1.msra.mxu0 0.0
    %2873 = vmatprep.subr.mxu0 0.0
    %2874 = vmatpush1.msra.mxu0 0.0
    %2875 = vmatprep.subr.mxu0 0.0
    %2876 = vmatpush1.msra.mxu0 0.0
    %2877 = vmatprep.subr.mxu0 0.0
    %2878 = vmatpush1.msra.mxu0 0.0
    %2879 = vmatprep.subr.mxu0 0.0
    %2880 = vmatpush1.msra.mxu0 0.0
    %2881 = vmatprep.subr.mxu0 0.0
    %2882 = vmatpush1.msra.mxu0 0.0
    %2883 = vmatprep.subr.mxu0 0.0
    %2884 = vmatpush1.msra.mxu0 0.0
    %2885 = vmatprep.subr.mxu0 0.0
    %2886 = vmatpush1.msra.mxu0 0.0
    %2887 = vmatprep.subr.mxu0 0.0
    %2888 = vmatpush1.msra.mxu0 0.0
    %2889 = vmatprep.subr.mxu0 0.0
    %2890 = vmatpush1.msra.mxu0 0.0
    %2891 = vmatprep.subr.mxu0 0.0
    %2892 = vmatpush1.msra.mxu0 0.0
    %2893 = vmatprep.subr.mxu0 0.0
    %2894 = vmatpush1.msra.mxu0 0.0
    %2895 = vmatprep.subr.mxu0 0.0
    %2896 = vmatpush1.msra.mxu0 0.0
    %2897 = vmatprep.subr.mxu0 0.0
    %2898 = vmatpush1.msra.mxu0 0.0
    %2899 = vmatprep.subr.mxu0 0.0
    %2900 = vmatpush1.msra.mxu0 0.0
    %2901 = vmatprep.mubr.f32.mxu0 0.0
    %2902 = vmatmul.mubr.f32.gmra.mrb[0].mxu0 %v2790
    %v2903 = vpop.f32.mrb[0].mxu0
    %v2904 = vadd.f32 0.0, %v2903
    %v2905 = vpop.f32.mrb[0].mxu0
    %2906 = vmatprep.mubr.f32.mxu0 0.0
    %2907 = vmatmul.mubr.f32.gmra.mrb[0].mxu0 %v2793
    %v2908 = vpop.f32.mrb[0].mxu0
    %v2909 = vadd.f32 0.0, %v2908
    %v2910 = vpop.f32.mrb[0].mxu0
    %2911 = vmatprep.mubr.f32.mxu0 0.0
    %2912 = vmatmul.mubr.f32.gmra.mrb[0].mxu0 %v2796
    %v2913 = vpop.f32.mrb[0].mxu0
    %v2914 = vadd.f32 0.0, %v2913
    %v2915 = vpop.f32.mrb[0].mxu0
    %2916 = vmatprep.mubr.f32.mxu0 0.0
    %2917 = vmatmul.mubr.f32.gmra.mrb[0].mxu0 %v2799
    %v2918 = vpop.f32.mrb[0].mxu0
    %v2919 = vadd.f32 0.0, %v2918
    %v2920 = vpop.f32.mrb[0].mxu0
    %2921 = vmatprep.mubr.f32.mxu0 0.0
    %2922 = vmatmul.mubr.f32.gmra.mrb[0].mxu0 %v2802
    %v2923 = vpop.f32.mrb[0].mxu0
    %v2924 = vadd.f32 0.0, %v2923
    %v2925 = vpop.f32.mrb[0].mxu0
    %2926 = vmatprep.mubr.f32.mxu0 0.0
    %2927 = vmatmul.mubr.f32.gmra.mrb[0].mxu0 %v2805
    %v2928 = vpop.f32.mrb[0].mxu0
    %v2929 = vadd.f32 0.0, %v2928
    %v2930 = vpop.f32.mrb[0].mxu0
    %2931 = vmatprep.mubr.f32.mxu0 0.0
    %2932 = vmatmul.mubr.f32.gmra.mrb[0].mxu0 %v2808
    %v2933 = vpop.f32.mrb[0].mxu0
    %v2934 = vadd.f32 0.0, %v2933
    %v2935 = vpop.f32.mrb[0].mxu0
    %2936 = vmatprep.mubr.f32.mxu0 0.0
    %2937 = vmatmul.mubr.f32.gmra.mrb[0].mxu0 %v2811
    %v2938 = vpop.f32.mrb[0].mxu0
    %v2939 = vadd.f32 0.0, %v2938
    %v2940 = vpop.f32.mrb[0].mxu0
    %2941 = vmatprep.mubr.f32.mxu0 0.0
    %2942 = vmatmul.mubr.f32.gmra.mrb[0].mxu0 %v2814
    %v2943 = vpop.f32.mrb[0].mxu0
    %v2944 = vadd.f32 0.0, %v2943
    %v2945 = vpop.f32.mrb[0].mxu0
    %2946 = vmatprep.mubr.f32.mxu0 0.0
    %2947 = vmatmul.mubr.f32.gmra.mrb[0].mxu0 %v2817
    %v2948 = vpop.f32.mrb[0].mxu0
    %v2949 = vadd.f32 0.0, %v2948
    %v2950 = vpop.f32.mrb[0].mxu0
    %2951 = vmatprep.mubr.f32.mxu0 0.0
    %2952 = vmatmul.mubr.f32.gmra.mrb[0].mxu0 %v2820
    %v2953 = vpop.f32.mrb[0].mxu0
    %v2954 = vadd.f32 0.0, %v2953
    %v2955 = vpop.f32.mrb[0].mxu0
    %2956 = vmatprep.mubr.f32.mxu0 0.0
    %2957 = vmatmul.mubr.f32.gmra.mrb[0].mxu0 %v2823
    %v2958 = vpop.f32.mrb[0].mxu0
    %v2959 = vadd.f32 0.0, %v2958
    %v2960 = vpop.f32.mrb[0].mxu0
    %2961 = vmatprep.mubr.f32.mxu0 0.0
    %2962 = vmatmul.mubr.f32.gmra.mrb[0].mxu0 %v2826
    %v2963 = vpop.f32.mrb[0].mxu0
    %v2964 = vadd.f32 0.0, %v2963
    %v2965 = vpop.f32.mrb[0].mxu0
    %2966 = vmatprep.mubr.f32.mxu0 0.0
    %2967 = vmatmul.mubr.f32.gmra.mrb[0].mxu0 %v2829
    %v2968 = vpop.f32.mrb[0].mxu0
    %v2969 = vadd.f32 0.0, %v2968
    %v2970 = vpop.f32.mrb[0].mxu0
    %2971 = vmatprep.mubr.f32.mxu0 0.0
    %2972 = vmatmul.mubr.f32.gmra.mrb[0].mxu0 %v2832
    %v2973 = vpop.f32.mrb[0].mxu0
    %v2974 = vadd.f32 0.0, %v2973
    %v2975 = vpop.f32.mrb[0].mxu0
    %2976 = vmatprep.mubr.f32.mxu0 0.0
    %2977 = vmatmul.mubr.f32.gmra.mrb[0].mxu0 %v2835
    %v2978 = vpop.f32.mrb[0].mxu0
    %v2979 = vadd.f32 0.0, %v2978
    %v2980 = vpop.f32.mrb[0].mxu0
    %2981 = vdwg.mxu0
    %v2982 = vsub.f32 1.0, %v2904
    %v2983 = vsub.f32 1.0, %v2909
    %v2984 = vsub.f32 1.0, %v2914
    %v2985 = vsub.f32 1.0, %v2919
    %v2986 = vsub.f32 1.0, %v2924
    %v2987 = vsub.f32 1.0, %v2929
    %v2988 = vsub.f32 1.0, %v2934
    %v2989 = vsub.f32 1.0, %v2939
    %v2990 = vsub.f32 1.0, %v2944
    %v2991 = vsub.f32 1.0, %v2949
    %v2992 = vsub.f32 1.0, %v2954
    %v2993 = vsub.f32 1.0, %v2959
    %v2994 = vsub.f32 1.0, %v2964
    %v2995 = vsub.f32 1.0, %v2969
    %v2996 = vsub.f32 1.0, %v2974
    %v2997 = vsub.f32 1.0, %v2979
    %2998 = vmatprep.subr.mxu0 0.0
    %2999 = vmatpush1.msra.mxu0 %v2982
    %3000 = vmatprep.subr.mxu0 0.0
    %3001 = vmatpush1.msra.mxu0 %v2983
    %3002 = vmatprep.subr.mxu0 0.0
    %3003 = vmatpush1.msra.mxu0 %v2984
    %3004 = vmatprep.subr.mxu0 0.0
    %3005 = vmatpush1.msra.mxu0 %v2985
    %3006 = vmatprep.subr.mxu0 0.0
    %3007 = vmatpush1.msra.mxu0 %v2986
    %3008 = vmatprep.subr.mxu0 0.0
    %3009 = vmatpush1.msra.mxu0 %v2987
    %3010 = vmatprep.subr.mxu0 0.0
    %3011 = vmatpush1.msra.mxu0 %v2988
    %3012 = vmatprep.subr.mxu0 0.0
    %3013 = vmatpush1.msra.mxu0 %v2989
    %3014 = vmatprep.subr.mxu0 0.0
    %3015 = vmatpush1.msra.mxu0 %v2990
    %3016 = vmatprep.subr.mxu0 0.0
    %3017 = vmatpush1.msra.mxu0 %v2991
    %3018 = vmatprep.subr.mxu0 0.0
    %3019 = vmatpush1.msra.mxu0 %v2992
    %3020 = vmatprep.subr.mxu0 0.0
    %3021 = vmatpush1.msra.mxu0 %v2993
    %3022 = vmatprep.subr.mxu0 0.0
    %3023 = vmatpush1.msra.mxu0 %v2994
    %3024 = vmatprep.subr.mxu0 0.0
    %3025 = vmatpush1.msra.mxu0 %v2995
    %3026 = vmatprep.subr.mxu0 0.0
    %3027 = vmatpush1.msra.mxu0 %v2996
    %3028 = vmatprep.subr.mxu0 0.0
    %3029 = vmatpush1.msra.mxu0 %v2997
    %3030 = vmatprep.subr.mxu0 0.0
    %3031 = vmatpush1.msra.mxu0 0.0
    %3032 = vmatprep.subr.mxu0 0.0
    %3033 = vmatpush1.msra.mxu0 0.0
    %3034 = vmatprep.subr.mxu0 0.0
    %3035 = vmatpush1.msra.mxu0 0.0
    %3036 = vmatprep.subr.mxu0 0.0
    %3037 = vmatpush1.msra.mxu0 0.0
    %3038 = vmatprep.subr.mxu0 0.0
    %3039 = vmatpush1.msra.mxu0 0.0
    %3040 = vmatprep.subr.mxu0 0.0
    %3041 = vmatpush1.msra.mxu0 0.0
    %3042 = vmatprep.subr.mxu0 0.0
    %3043 = vmatpush1.msra.mxu0 0.0
    %3044 = vmatprep.subr.mxu0 0.0
    %3045 = vmatpush1.msra.mxu0 0.0
    %3046 = vmatprep.subr.mxu0 0.0
    %3047 = vmatpush1.msra.mxu0 0.0
    %3048 = vmatprep.subr.mxu0 0.0
    %3049 = vmatpush1.msra.mxu0 0.0
    %3050 = vmatprep.subr.mxu0 0.0
    %3051 = vmatpush1.msra.mxu0 0.0
    %3052 = vmatprep.subr.mxu0 0.0
    %3053 = vmatpush1.msra.mxu0 0.0
    %3054 = vmatprep.subr.mxu0 0.0
    %3055 = vmatpush1.msra.mxu0 0.0
    %3056 = vmatprep.subr.mxu0 0.0
    %3057 = vmatpush1.msra.mxu0 0.0
    %3058 = vmatprep.subr.mxu0 0.0
    %3059 = vmatpush1.msra.mxu0 0.0
    %3060 = vmatprep.subr.mxu0 0.0
    %3061 = vmatpush1.msra.mxu0 0.0
    %3062 = vmatprep.mubr.f32.mxu0 0.0
    %3063 = vmatmul.mubr.f32.gmra.mrb[0].mxu0 %v2754
    %v3064 = vpop.f32.mrb[0].mxu0
    %v3065 = vadd.f32 0.0, %v3064
    %v3066 = vpop.f32.mrb[0].mxu0
    %3067 = vmatprep.mubr.f32.mxu0 0.0
    %3068 = vmatmul.mubr.f32.gmra.mrb[0].mxu0 %v2755
    %v3069 = vpop.f32.mrb[0].mxu0
    %v3070 = vadd.f32 0.0, %v3069
    %v3071 = vpop.f32.mrb[0].mxu0
    %3072 = vdwg.mxu0
    %v3073 = vmul.f32 %v3065, %v3065
    %v3074 = vmul.f32 %v3070, %v3070
    %v3075 = vadd.f32 %v3073, %v3074
    %v3076 = vrot.slane %v3075, 4
    %v3077 = vadd.f32 %v3075, %v3076
    %v3078 = vrot.slane %v3077, 2
    %v3079 = vadd.f32 %v3077, %v3078
    %v3080 = vrot.slane %v3079, 1
    %v3081 = vadd.f32 %v3079, %v3080
    %v3082 = vmax.f32 %v3081, 1e-24
    %v3083 = vrsqrt.pop %v3082
    %v3084 = vmul.f32 %v3065, %v3083
    %v3085 = vmul.f32 %v3070, %v3083
    %3086 = vxpose.xlu0.b32.start [1/16] %v3084, 128
    %3087 = vxpose.xlu0.b32.cont [2/16] %v3085, 128
    %3088 = vxpose.xlu0.b32.cont [3/16] 0.0, 128
    %3089 = vxpose.xlu0.b32.cont [4/16] 0.0, 128
    %3090 = vxpose.xlu0.b32.cont [5/16] 0.0, 128
    %3091 = vxpose.xlu0.b32.cont [6/16] 0.0, 128
    %3092 = vxpose.xlu0.b32.cont [7/16] 0.0, 128
    %3093 = vxpose.xlu0.b32.cont [8/16] 0.0, 128
    %3094 = vxpose.xlu0.b32.cont [9/16] 0.0, 128
    %3095 = vxpose.xlu0.b32.cont [10/16] 0.0, 128
    %3096 = vxpose.xlu0.b32.cont [11/16] 0.0, 128
    %3097 = vxpose.xlu0.b32.cont [12/16] 0.0, 128
    %3098 = vxpose.xlu0.b32.cont [13/16] 0.0, 128
    %3099 = vxpose.xlu0.b32.cont [14/16] 0.0, 128
    %3100 = vxpose.xlu0.b32.cont [15/16] 0.0, 128
    %3101 = vxpose.xlu0.b32.end [16/16] 0.0, 128
    %v3102 = vpop.trf.xlu0
    %v3103 = vpop.trf.xlu0
    %v3104 = vpop.trf.xlu0
    %v3105 = vpop.trf.xlu0
    %v3106 = vpop.trf.xlu0
    %v3107 = vpop.trf.xlu0
    %v3108 = vpop.trf.xlu0
    %v3109 = vpop.trf.xlu0
    %v3110 = vpop.trf.xlu0
    %v3111 = vpop.trf.xlu0
    %v3112 = vpop.trf.xlu0
    %v3113 = vpop.trf.xlu0
    %v3114 = vpop.trf.xlu0
    %v3115 = vpop.trf.xlu0
    %v3116 = vpop.trf.xlu0
    %v3117 = vpop.trf.xlu0
    %v3119 = vsel %vm2788, %v3102, 0
    %v3122 = vsel %vm2788, %v3103, 0
    %v3125 = vsel %vm2788, %v3104, 0
    %v3128 = vsel %vm2788, %v3105, 0
    %v3131 = vsel %vm2788, %v3106, 0
    %v3134 = vsel %vm2788, %v3107, 0
    %v3137 = vsel %vm2788, %v3108, 0
    %v3140 = vsel %vm2788, %v3109, 0
    %v3143 = vsel %vm2788, %v3110, 0
    %v3146 = vsel %vm2788, %v3111, 0
    %v3149 = vsel %vm2788, %v3112, 0
    %v3152 = vsel %vm2788, %v3113, 0
    %v3155 = vsel %vm2788, %v3114, 0
    %v3158 = vsel %vm2788, %v3115, 0
    %v3161 = vsel %vm2788, %v3116, 0
    %v3164 = vsel %vm2788, %v3117, 0
    %3166 = vmatprep.subr.mxu0 0.0
    %3167 = vmatpush1.msra.mxu0 %v3084
    %3168 = vmatprep.subr.mxu0 0.0
    %3169 = vmatpush1.msra.mxu0 %v3085
    %3170 = vmatprep.subr.mxu0 0.0
    %3171 = vmatpush1.msra.mxu0 0.0
    %3172 = vmatprep.subr.mxu0 0.0
    %3173 = vmatpush1.msra.mxu0 0.0
    %3174 = vmatprep.subr.mxu0 0.0
    %3175 = vmatpush1.msra.mxu0 0.0
    %3176 = vmatprep.subr.mxu0 0.0
    %3177 = vmatpush1.msra.mxu0 0.0
    %3178 = vmatprep.subr.mxu0 0.0
    %3179 = vmatpush1.msra.mxu0 0.0
    %3180 = vmatprep.subr.mxu0 0.0
    %3181 = vmatpush1.msra.mxu0 0.0
    %3182 = vmatprep.subr.mxu0 0.0
    %3183 = vmatpush1.msra.mxu0 0.0
    %3184 = vmatprep.subr.mxu0 0.0
    %3185 = vmatpush1.msra.mxu0 0.0
    %3186 = vmatprep.subr.mxu0 0.0
    %3187 = vmatpush1.msra.mxu0 0.0
    %3188 = vmatprep.subr.mxu0 0.0
    %3189 = vmatpush1.msra.mxu0 0.0
    %3190 = vmatprep.subr.mxu0 0.0
    %3191 = vmatpush1.msra.mxu0 0.0
    %3192 = vmatprep.subr.mxu0 0.0
    %3193 = vmatpush1.msra.mxu0 0.0
    %3194 = vmatprep.subr.mxu0 0.0
    %3195 = vmatpush1.msra.mxu0 0.0
    %3196 = vmatprep.subr.mxu0 0.0
    %3197 = vmatpush1.msra.mxu0 0.0
    %3198 = vmatprep.subr.mxu0 0.0
    %3199 = vmatpush1.msra.mxu0 0.0
    %3200 = vmatprep.subr.mxu0 0.0
    %3201 = vmatpush1.msra.mxu0 0.0
    %3202 = vmatprep.subr.mxu0 0.0
    %3203 = vmatpush1.msra.mxu0 0.0
    %3204 = vmatprep.subr.mxu0 0.0
    %3205 = vmatpush1.msra.mxu0 0.0
    %3206 = vmatprep.subr.mxu0 0.0
    %3207 = vmatpush1.msra.mxu0 0.0
    %3208 = vmatprep.subr.mxu0 0.0
    %3209 = vmatpush1.msra.mxu0 0.0
    %3210 = vmatprep.subr.mxu0 0.0
    %3211 = vmatpush1.msra.mxu0 0.0
    %3212 = vmatprep.subr.mxu0 0.0
    %3213 = vmatpush1.msra.mxu0 0.0
    %3214 = vmatprep.subr.mxu0 0.0
    %3215 = vmatpush1.msra.mxu0 0.0
    %3216 = vmatprep.subr.mxu0 0.0
    %3217 = vmatpush1.msra.mxu0 0.0
    %3218 = vmatprep.subr.mxu0 0.0
    %3219 = vmatpush1.msra.mxu0 0.0
    %3220 = vmatprep.subr.mxu0 0.0
    %3221 = vmatpush1.msra.mxu0 0.0
    %3222 = vmatprep.subr.mxu0 0.0
    %3223 = vmatpush1.msra.mxu0 0.0
    %3224 = vmatprep.subr.mxu0 0.0
    %3225 = vmatpush1.msra.mxu0 0.0
    %3226 = vmatprep.subr.mxu0 0.0
    %3227 = vmatpush1.msra.mxu0 0.0
    %3228 = vmatprep.subr.mxu0 0.0
    %3229 = vmatpush1.msra.mxu0 0.0
    %3230 = vmatprep.mubr.f32.mxu0 0.0
    %3231 = vmatmul.mubr.f32.gmra.mrb[0].mxu0 %v3119
    %v3232 = vpop.f32.mrb[0].mxu0
    %v3233 = vadd.f32 0.0, %v3232
    %v3234 = vpop.f32.mrb[0].mxu0
    %3235 = vmatprep.mubr.f32.mxu0 0.0
    %3236 = vmatmul.mubr.f32.gmra.mrb[0].mxu0 %v3122
    %v3237 = vpop.f32.mrb[0].mxu0
    %v3238 = vadd.f32 0.0, %v3237
    %v3239 = vpop.f32.mrb[0].mxu0
    %3240 = vmatprep.mubr.f32.mxu0 0.0
    %3241 = vmatmul.mubr.f32.gmra.mrb[0].mxu0 %v3125
    %v3242 = vpop.f32.mrb[0].mxu0
    %v3243 = vadd.f32 0.0, %v3242
    %v3244 = vpop.f32.mrb[0].mxu0
    %3245 = vmatprep.mubr.f32.mxu0 0.0
    %3246 = vmatmul.mubr.f32.gmra.mrb[0].mxu0 %v3128
    %v3247 = vpop.f32.mrb[0].mxu0
    %v3248 = vadd.f32 0.0, %v3247
    %v3249 = vpop.f32.mrb[0].mxu0
    %3250 = vmatprep.mubr.f32.mxu0 0.0
    %3251 = vmatmul.mubr.f32.gmra.mrb[0].mxu0 %v3131
    %v3252 = vpop.f32.mrb[0].mxu0
    %v3253 = vadd.f32 0.0, %v3252
    %v3254 = vpop.f32.mrb[0].mxu0
    %3255 = vmatprep.mubr.f32.mxu0 0.0
    %3256 = vmatmul.mubr.f32.gmra.mrb[0].mxu0 %v3134
    %v3257 = vpop.f32.mrb[0].mxu0
    %v3258 = vadd.f32 0.0, %v3257
    %v3259 = vpop.f32.mrb[0].mxu0
    %3260 = vmatprep.mubr.f32.mxu0 0.0
    %3261 = vmatmul.mubr.f32.gmra.mrb[0].mxu0 %v3137
    %v3262 = vpop.f32.mrb[0].mxu0
    %v3263 = vadd.f32 0.0, %v3262
    %v3264 = vpop.f32.mrb[0].mxu0
    %3265 = vmatprep.mubr.f32.mxu0 0.0
    %3266 = vmatmul.mubr.f32.gmra.mrb[0].mxu0 %v3140
    %v3267 = vpop.f32.mrb[0].mxu0
    %v3268 = vadd.f32 0.0, %v3267
    %v3269 = vpop.f32.mrb[0].mxu0
    %3270 = vmatprep.mubr.f32.mxu0 0.0
    %3271 = vmatmul.mubr.f32.gmra.mrb[0].mxu0 %v3143
    %v3272 = vpop.f32.mrb[0].mxu0
    %v3273 = vadd.f32 0.0, %v3272
    %v3274 = vpop.f32.mrb[0].mxu0
    %3275 = vmatprep.mubr.f32.mxu0 0.0
    %3276 = vmatmul.mubr.f32.gmra.mrb[0].mxu0 %v3146
    %v3277 = vpop.f32.mrb[0].mxu0
    %v3278 = vadd.f32 0.0, %v3277
    %v3279 = vpop.f32.mrb[0].mxu0
    %3280 = vmatprep.mubr.f32.mxu0 0.0
    %3281 = vmatmul.mubr.f32.gmra.mrb[0].mxu0 %v3149
    %v3282 = vpop.f32.mrb[0].mxu0
    %v3283 = vadd.f32 0.0, %v3282
    %v3284 = vpop.f32.mrb[0].mxu0
    %3285 = vmatprep.mubr.f32.mxu0 0.0
    %3286 = vmatmul.mubr.f32.gmra.mrb[0].mxu0 %v3152
    %v3287 = vpop.f32.mrb[0].mxu0
    %v3288 = vadd.f32 0.0, %v3287
    %v3289 = vpop.f32.mrb[0].mxu0
    %3290 = vmatprep.mubr.f32.mxu0 0.0
    %3291 = vmatmul.mubr.f32.gmra.mrb[0].mxu0 %v3155
    %v3292 = vpop.f32.mrb[0].mxu0
    %v3293 = vadd.f32 0.0, %v3292
    %v3294 = vpop.f32.mrb[0].mxu0
    %3295 = vmatprep.mubr.f32.mxu0 0.0
    %3296 = vmatmul.mubr.f32.gmra.mrb[0].mxu0 %v3158
    %v3297 = vpop.f32.mrb[0].mxu0
    %v3298 = vadd.f32 0.0, %v3297
    %v3299 = vpop.f32.mrb[0].mxu0
    %3300 = vmatprep.mubr.f32.mxu0 0.0
    %3301 = vmatmul.mubr.f32.gmra.mrb[0].mxu0 %v3161
    %v3302 = vpop.f32.mrb[0].mxu0
    %v3303 = vadd.f32 0.0, %v3302
    %v3304 = vpop.f32.mrb[0].mxu0
    %3305 = vmatprep.mubr.f32.mxu0 0.0
    %3306 = vmatmul.mubr.f32.gmra.mrb[0].mxu0 %v3164
    %v3307 = vpop.f32.mrb[0].mxu0
    %v3308 = vadd.f32 0.0, %v3307
    %v3309 = vpop.f32.mrb[0].mxu0
    %3310 = vdwg.mxu0
    %3311 = vst [vmem:[%s13] sm:$0xff] %v2904
    %3312 = vst [vmem:[%s13 + $0x8] sm:$0xff] %v2909
    %3313 = vst [vmem:[%s13 + $0x10] sm:$0xff] %v2914
    %3314 = vst [vmem:[%s13 + $0x18] sm:$0xff] %v2919
    %3315 = vst [vmem:[%s13 + $0x20] sm:$0xff] %v2924
    %3316 = vst [vmem:[%s13 + $0x28] sm:$0xff] %v2929
    %3317 = vst [vmem:[%s13 + $0x30] sm:$0xff] %v2934
    %3318 = vst [vmem:[%s13 + $0x38] sm:$0xff] %v2939
    %3319 = vst [vmem:[%s13 + $0x40] sm:$0xff] %v2944
    %3320 = vst [vmem:[%s13 + $0x48] sm:$0xff] %v2949
    %3321 = vst [vmem:[%s13 + $0x50] sm:$0xff] %v2954
    %3322 = vst [vmem:[%s13 + $0x58] sm:$0xff] %v2959
    %3323 = vst [vmem:[%s13 + $0x60] sm:$0xff] %v2964
    %3324 = vst [vmem:[%s13 + $0x68] sm:$0xff] %v2969
    %3325 = vst [vmem:[%s13 + $0x70] sm:$0xff] %v2974
    %3326 = vst [vmem:[%s13 + $0x78] sm:$0xff] %v2979
    %3327 = vst [vmem:[#allocation14] sm:$0xff] %v3233
    %3328 = vst [vmem:[#allocation14 + $0x8] sm:$0xff] %v3238
    %3329 = vst [vmem:[#allocation14 + $0x10] sm:$0xff] %v3243
    %3330 = vst [vmem:[#allocation14 + $0x18] sm:$0xff] %v3248
    %3331 = vst [vmem:[#allocation14 + $0x20] sm:$0xff] %v3253
    %3332 = vst [vmem:[#allocation14 + $0x28] sm:$0xff] %v3258
    %3333 = vst [vmem:[#allocation14 + $0x30] sm:$0xff] %v3263
    %3334 = vst [vmem:[#allocation14 + $0x38] sm:$0xff] %v3268
    %3335 = vst [vmem:[#allocation14 + $0x40] sm:$0xff] %v3273
    %3336 = vst [vmem:[#allocation14 + $0x48] sm:$0xff] %v3278
    %3337 = vst [vmem:[#allocation14 + $0x50] sm:$0xff] %v3283
    %3338 = vst [vmem:[#allocation14 + $0x58] sm:$0xff] %v3288
    %3339 = vst [vmem:[#allocation14 + $0x60] sm:$0xff] %v3293
    %3340 = vst [vmem:[#allocation14 + $0x68] sm:$0xff] %v3298
    %3341 = vst [vmem:[#allocation14 + $0x70] sm:$0xff] %v3303
    %3342 = vst [vmem:[#allocation14 + $0x78] sm:$0xff] %v3308
    %v3343 = vmul.f32 %v2741, %v2741
    %v3344 = vmul.f32 %v2742, %v2742
    %v3345 = vadd.f32 %v3343, %v3344
    %v3346 = vrot.slane %v3345, 4
    %v3347 = vadd.f32 %v3345, %v3346
    %v3348 = vrot.slane %v3347, 2
    %v3349 = vadd.f32 %v3347, %v3348
    %v3350 = vrot.slane %v3349, 1
    %v3351 = vadd.f32 %v3349, %v3350
    %v3352 = vmax.f32 %v3351, 1e-24
    %v3353 = vrsqrt.pop %v3352
    %v3354 = vmul.f32 %v2741, %v3353
    %v3355 = vmul.f32 %v2742, %v3353
    %3356 = vxpose.xlu0.b32.start [1/16] %v3354, 128
    %3357 = vxpose.xlu0.b32.cont [2/16] %v3355, 128
    %3358 = vxpose.xlu0.b32.cont [3/16] 0.0, 128
    %3359 = vxpose.xlu0.b32.cont [4/16] 0.0, 128
    %3360 = vxpose.xlu0.b32.cont [5/16] 0.0, 128
    %3361 = vxpose.xlu0.b32.cont [6/16] 0.0, 128
    %3362 = vxpose.xlu0.b32.cont [7/16] 0.0, 128
    %3363 = vxpose.xlu0.b32.cont [8/16] 0.0, 128
    %3364 = vxpose.xlu0.b32.cont [9/16] 0.0, 128
    %3365 = vxpose.xlu0.b32.cont [10/16] 0.0, 128
    %3366 = vxpose.xlu0.b32.cont [11/16] 0.0, 128
    %3367 = vxpose.xlu0.b32.cont [12/16] 0.0, 128
    %3368 = vxpose.xlu0.b32.cont [13/16] 0.0, 128
    %3369 = vxpose.xlu0.b32.cont [14/16] 0.0, 128
    %3370 = vxpose.xlu0.b32.cont [15/16] 0.0, 128
    %3371 = vxpose.xlu0.b32.end [16/16] 0.0, 128
    %v3372 = vpop.trf.xlu0
    %v3373 = vpop.trf.xlu0
    %v3374 = vpop.trf.xlu0
    %v3375 = vpop.trf.xlu0
    %v3376 = vpop.trf.xlu0
    %v3377 = vpop.trf.xlu0
    %v3378 = vpop.trf.xlu0
    %v3379 = vpop.trf.xlu0
    %v3380 = vpop.trf.xlu0
    %v3381 = vpop.trf.xlu0
    %v3382 = vpop.trf.xlu0
    %v3383 = vpop.trf.xlu0
    %v3384 = vpop.trf.xlu0
    %v3385 = vpop.trf.xlu0
    %v3386 = vpop.trf.xlu0
    %v3387 = vpop.trf.xlu0
    %v3389 = vsel %vm2788, %v3372, 0
    %v3392 = vsel %vm2788, %v3373, 0
    %v3395 = vsel %vm2788, %v3374, 0
    %v3398 = vsel %vm2788, %v3375, 0
    %v3401 = vsel %vm2788, %v3376, 0
    %v3404 = vsel %vm2788, %v3377, 0
    %v3407 = vsel %vm2788, %v3378, 0
    %v3410 = vsel %vm2788, %v3379, 0
    %v3413 = vsel %vm2788, %v3380, 0
    %v3416 = vsel %vm2788, %v3381, 0
    %v3419 = vsel %vm2788, %v3382, 0
    %v3422 = vsel %vm2788, %v3383, 0
    %v3425 = vsel %vm2788, %v3384, 0
    %v3428 = vsel %vm2788, %v3385, 0
    %v3431 = vsel %vm2788, %v3386, 0
    %v3434 = vsel %vm2788, %v3387, 0
    %3436 = vmatprep.subr.mxu0 0.0
    %3437 = vmatpush1.msra.mxu0 %v3354
    %3438 = vmatprep.subr.mxu0 0.0
    %3439 = vmatpush1.msra.mxu0 %v3355
    %3440 = vmatprep.subr.mxu0 0.0
    %3441 = vmatpush1.msra.mxu0 0.0
    %3442 = vmatprep.subr.mxu0 0.0
    %3443 = vmatpush1.msra.mxu0 0.0
    %3444 = vmatprep.subr.mxu0 0.0
    %3445 = vmatpush1.msra.mxu0 0.0
    %3446 = vmatprep.subr.mxu0 0.0
    %3447 = vmatpush1.msra.mxu0 0.0
    %3448 = vmatprep.subr.mxu0 0.0
    %3449 = vmatpush1.msra.mxu0 0.0
    %3450 = vmatprep.subr.mxu0 0.0
    %3451 = vmatpush1.msra.mxu0 0.0
    %3452 = vmatprep.subr.mxu0 0.0
    %3453 = vmatpush1.msra.mxu0 0.0
    %3454 = vmatprep.subr.mxu0 0.0
    %3455 = vmatpush1.msra.mxu0 0.0
    %3456 = vmatprep.subr.mxu0 0.0
    %3457 = vmatpush1.msra.mxu0 0.0
    %3458 = vmatprep.subr.mxu0 0.0
    %3459 = vmatpush1.msra.mxu0 0.0
    %3460 = vmatprep.subr.mxu0 0.0
    %3461 = vmatpush1.msra.mxu0 0.0
    %3462 = vmatprep.subr.mxu0 0.0
    %3463 = vmatpush1.msra.mxu0 0.0
    %3464 = vmatprep.subr.mxu0 0.0
    %3465 = vmatpush1.msra.mxu0 0.0
    %3466 = vmatprep.subr.mxu0 0.0
    %3467 = vmatpush1.msra.mxu0 0.0
    %3468 = vmatprep.subr.mxu0 0.0
    %3469 = vmatpush1.msra.mxu0 0.0
    %3470 = vmatprep.subr.mxu0 0.0
    %3471 = vmatpush1.msra.mxu0 0.0
    %3472 = vmatprep.subr.mxu0 0.0
    %3473 = vmatpush1.msra.mxu0 0.0
    %3474 = vmatprep.subr.mxu0 0.0
    %3475 = vmatpush1.msra.mxu0 0.0
    %3476 = vmatprep.subr.mxu0 0.0
    %3477 = vmatpush1.msra.mxu0 0.0
    %3478 = vmatprep.subr.mxu0 0.0
    %3479 = vmatpush1.msra.mxu0 0.0
    %3480 = vmatprep.subr.mxu0 0.0
    %3481 = vmatpush1.msra.mxu0 0.0
    %3482 = vmatprep.subr.mxu0 0.0
    %3483 = vmatpush1.msra.mxu0 0.0
    %3484 = vmatprep.subr.mxu0 0.0
    %3485 = vmatpush1.msra.mxu0 0.0
    %3486 = vmatprep.subr.mxu0 0.0
    %3487 = vmatpush1.msra.mxu0 0.0
    %3488 = vmatprep.subr.mxu0 0.0
    %3489 = vmatpush1.msra.mxu0 0.0
    %3490 = vmatprep.subr.mxu0 0.0
    %3491 = vmatpush1.msra.mxu0 0.0
    %3492 = vmatprep.subr.mxu0 0.0
    %3493 = vmatpush1.msra.mxu0 0.0
    %3494 = vmatprep.subr.mxu0 0.0
    %3495 = vmatpush1.msra.mxu0 0.0
    %3496 = vmatprep.subr.mxu0 0.0
    %3497 = vmatpush1.msra.mxu0 0.0
    %3498 = vmatprep.subr.mxu0 0.0
    %3499 = vmatpush1.msra.mxu0 0.0
    %3500 = vmatprep.mubr.f32.mxu0 0.0
    %3501 = vmatmul.mubr.f32.gmra.mrb[0].mxu0 %v3389
    %v3502 = vpop.f32.mrb[0].mxu0
    %v3503 = vadd.f32 0.0, %v3502
    %v3504 = vpop.f32.mrb[0].mxu0
    %3505 = vmatprep.mubr.f32.mxu0 0.0
    %3506 = vmatmul.mubr.f32.gmra.mrb[0].mxu0 %v3392
    %v3507 = vpop.f32.mrb[0].mxu0
    %v3508 = vadd.f32 0.0, %v3507
    %v3509 = vpop.f32.mrb[0].mxu0
    %3510 = vmatprep.mubr.f32.mxu0 0.0
    %3511 = vmatmul.mubr.f32.gmra.mrb[0].mxu0 %v3395
    %v3512 = vpop.f32.mrb[0].mxu0
    %v3513 = vadd.f32 0.0, %v3512
    %v3514 = vpop.f32.mrb[0].mxu0
    %3515 = vmatprep.mubr.f32.mxu0 0.0
    %3516 = vmatmul.mubr.f32.gmra.mrb[0].mxu0 %v3398
    %v3517 = vpop.f32.mrb[0].mxu0
    %v3518 = vadd.f32 0.0, %v3517
    %v3519 = vpop.f32.mrb[0].mxu0
    %3520 = vmatprep.mubr.f32.mxu0 0.0
    %3521 = vmatmul.mubr.f32.gmra.mrb[0].mxu0 %v3401
    %v3522 = vpop.f32.mrb[0].mxu0
    %v3523 = vadd.f32 0.0, %v3522
    %v3524 = vpop.f32.mrb[0].mxu0
    %3525 = vmatprep.mubr.f32.mxu0 0.0
    %3526 = vmatmul.mubr.f32.gmra.mrb[0].mxu0 %v3404
    %v3527 = vpop.f32.mrb[0].mxu0
    %v3528 = vadd.f32 0.0, %v3527
    %v3529 = vpop.f32.mrb[0].mxu0
    %3530 = vmatprep.mubr.f32.mxu0 0.0
    %3531 = vmatmul.mubr.f32.gmra.mrb[0].mxu0 %v3407
    %v3532 = vpop.f32.mrb[0].mxu0
    %v3533 = vadd.f32 0.0, %v3532
    %v3534 = vpop.f32.mrb[0].mxu0
    %3535 = vmatprep.mubr.f32.mxu0 0.0
    %3536 = vmatmul.mubr.f32.gmra.mrb[0].mxu0 %v3410
    %v3537 = vpop.f32.mrb[0].mxu0
    %v3538 = vadd.f32 0.0, %v3537
    %v3539 = vpop.f32.mrb[0].mxu0
    %3540 = vmatprep.mubr.f32.mxu0 0.0
    %3541 = vmatmul.mubr.f32.gmra.mrb[0].mxu0 %v3413
    %v3542 = vpop.f32.mrb[0].mxu0
    %v3543 = vadd.f32 0.0, %v3542
    %v3544 = vpop.f32.mrb[0].mxu0
    %3545 = vmatprep.mubr.f32.mxu0 0.0
    %3546 = vmatmul.mubr.f32.gmra.mrb[0].mxu0 %v3416
    %v3547 = vpop.f32.mrb[0].mxu0
    %v3548 = vadd.f32 0.0, %v3547
    %v3549 = vpop.f32.mrb[0].mxu0
    %3550 = vmatprep.mubr.f32.mxu0 0.0
    %3551 = vmatmul.mubr.f32.gmra.mrb[0].mxu0 %v3419
    %v3552 = vpop.f32.mrb[0].mxu0
    %v3553 = vadd.f32 0.0, %v3552
    %v3554 = vpop.f32.mrb[0].mxu0
    %3555 = vmatprep.mubr.f32.mxu0 0.0
    %3556 = vmatmul.mubr.f32.gmra.mrb[0].mxu0 %v3422
    %v3557 = vpop.f32.mrb[0].mxu0
    %v3558 = vadd.f32 0.0, %v3557
    %v3559 = vpop.f32.mrb[0].mxu0
    %3560 = vmatprep.mubr.f32.mxu0 0.0
    %3561 = vmatmul.mubr.f32.gmra.mrb[0].mxu0 %v3425
    %v3562 = vpop.f32.mrb[0].mxu0
    %v3563 = vadd.f32 0.0, %v3562
    %v3564 = vpop.f32.mrb[0].mxu0
    %3565 = vmatprep.mubr.f32.mxu0 0.0
    %3566 = vmatmul.mubr.f32.gmra.mrb[0].mxu0 %v3428
    %v3567 = vpop.f32.mrb[0].mxu0
    %v3568 = vadd.f32 0.0, %v3567
    %v3569 = vpop.f32.mrb[0].mxu0
    %3570 = vmatprep.mubr.f32.mxu0 0.0
    %3571 = vmatmul.mubr.f32.gmra.mrb[0].mxu0 %v3431
    %v3572 = vpop.f32.mrb[0].mxu0
    %v3573 = vadd.f32 0.0, %v3572
    %v3574 = vpop.f32.mrb[0].mxu0
    %3575 = vmatprep.mubr.f32.mxu0 0.0
    %3576 = vmatmul.mubr.f32.gmra.mrb[0].mxu0 %v3434
    %v3577 = vpop.f32.mrb[0].mxu0
    %v3578 = vadd.f32 0.0, %v3577
    %v3579 = vpop.f32.mrb[0].mxu0
    %3580 = vdwg.mxu0
    %v3581 = vsub.f32 1.0, %v3503
    %v3582 = vsub.f32 1.0, %v3508
    %v3583 = vsub.f32 1.0, %v3513
    %v3584 = vsub.f32 1.0, %v3518
    %v3585 = vsub.f32 1.0, %v3523
    %v3586 = vsub.f32 1.0, %v3528
    %v3587 = vsub.f32 1.0, %v3533
    %v3588 = vsub.f32 1.0, %v3538
    %v3589 = vsub.f32 1.0, %v3543
    %v3590 = vsub.f32 1.0, %v3548
    %v3591 = vsub.f32 1.0, %v3553
    %v3592 = vsub.f32 1.0, %v3558
    %v3593 = vsub.f32 1.0, %v3563
    %v3594 = vsub.f32 1.0, %v3568
    %v3595 = vsub.f32 1.0, %v3573
    %v3596 = vsub.f32 1.0, %v3578
    %3597 = vmatprep.subr.mxu0 0.0
    %3598 = vmatpush1.msra.mxu0 %v3581
    %3599 = vmatprep.subr.mxu0 0.0
    %3600 = vmatpush1.msra.mxu0 %v3582
    %3601 = vmatprep.subr.mxu0 0.0
    %3602 = vmatpush1.msra.mxu0 %v3583
    %3603 = vmatprep.subr.mxu0 0.0
    %3604 = vmatpush1.msra.mxu0 %v3584
    %3605 = vmatprep.subr.mxu0 0.0
    %3606 = vmatpush1.msra.mxu0 %v3585
    %3607 = vmatprep.subr.mxu0 0.0
    %3608 = vmatpush1.msra.mxu0 %v3586
    %3609 = vmatprep.subr.mxu0 0.0
    %3610 = vmatpush1.msra.mxu0 %v3587
    %3611 = vmatprep.subr.mxu0 0.0
    %3612 = vmatpush1.msra.mxu0 %v3588
    %3613 = vmatprep.subr.mxu0 0.0
    %3614 = vmatpush1.msra.mxu0 %v3589
    %3615 = vmatprep.subr.mxu0 0.0
    %3616 = vmatpush1.msra.mxu0 %v3590
    %3617 = vmatprep.subr.mxu0 0.0
    %3618 = vmatpush1.msra.mxu0 %v3591
    %3619 = vmatprep.subr.mxu0 0.0
    %3620 = vmatpush1.msra.mxu0 %v3592
    %3621 = vmatprep.subr.mxu0 0.0
    %3622 = vmatpush1.msra.mxu0 %v3593
    %3623 = vmatprep.subr.mxu0 0.0
    %3624 = vmatpush1.msra.mxu0 %v3594
    %3625 = vmatprep.subr.mxu0 0.0
    %3626 = vmatpush1.msra.mxu0 %v3595
    %3627 = vmatprep.subr.mxu0 0.0
    %3628 = vmatpush1.msra.mxu0 %v3596
    %3629 = vmatprep.subr.mxu0 0.0
    %3630 = vmatpush1.msra.mxu0 0.0
    %3631 = vmatprep.subr.mxu0 0.0
    %3632 = vmatpush1.msra.mxu0 0.0
    %3633 = vmatprep.subr.mxu0 0.0
    %3634 = vmatpush1.msra.mxu0 0.0
    %3635 = vmatprep.subr.mxu0 0.0
    %3636 = vmatpush1.msra.mxu0 0.0
    %3637 = vmatprep.subr.mxu0 0.0
    %3638 = vmatpush1.msra.mxu0 0.0
    %3639 = vmatprep.subr.mxu0 0.0
    %3640 = vmatpush1.msra.mxu0 0.0
    %3641 = vmatprep.subr.mxu0 0.0
    %3642 = vmatpush1.msra.mxu0 0.0
    %3643 = vmatprep.subr.mxu0 0.0
    %3644 = vmatpush1.msra.mxu0 0.0
    %3645 = vmatprep.subr.mxu0 0.0
    %3646 = vmatpush1.msra.mxu0 0.0
    %3647 = vmatprep.subr.mxu0 0.0
    %3648 = vmatpush1.msra.mxu0 0.0
    %3649 = vmatprep.subr.mxu0 0.0
    %3650 = vmatpush1.msra.mxu0 0.0
    %3651 = vmatprep.subr.mxu0 0.0
    %3652 = vmatpush1.msra.mxu0 0.0
    %3653 = vmatprep.subr.mxu0 0.0
    %3654 = vmatpush1.msra.mxu0 0.0
    %3655 = vmatprep.subr.mxu0 0.0
    %3656 = vmatpush1.msra.mxu0 0.0
    %3657 = vmatprep.subr.mxu0 0.0
    %3658 = vmatpush1.msra.mxu0 0.0
    %3659 = vmatprep.subr.mxu0 0.0
    %3660 = vmatpush1.msra.mxu0 0.0
    %3661 = vmatprep.mubr.f32.mxu0 0.0
    %3662 = vmatmul.mubr.f32.gmra.mrb[0].mxu0 %v3354
    %v3663 = vpop.f32.mrb[0].mxu0
    %v3664 = vadd.f32 0.0, %v3663
    %v3665 = vpop.f32.mrb[0].mxu0
    %3666 = vmatprep.mubr.f32.mxu0 0.0
    %3667 = vmatmul.mubr.f32.gmra.mrb[0].mxu0 %v3355
    %v3668 = vpop.f32.mrb[0].mxu0
    %v3669 = vadd.f32 0.0, %v3668
    %v3670 = vpop.f32.mrb[0].mxu0
    %3671 = vdwg.mxu0
    %v3672 = vmul.f32 %v3664, %v3664
    %v3673 = vmul.f32 %v3669, %v3669
    %v3674 = vadd.f32 %v3672, %v3673
    %v3675 = vrot.slane %v3674, 4
    %v3676 = vadd.f32 %v3674, %v3675
    %v3677 = vrot.slane %v3676, 2
    %v3678 = vadd.f32 %v3676, %v3677
    %v3679 = vrot.slane %v3678, 1
    %v3680 = vadd.f32 %v3678, %v3679
    %v3681 = vmax.f32 %v3680, 1e-24
    %v3682 = vrsqrt.pop %v3681
    %v3683 = vmul.f32 %v3664, %v3682
    %v3684 = vmul.f32 %v3669, %v3682
    %3685 = vxpose.xlu0.b32.start [1/16] %v3683, 128
    %3686 = vxpose.xlu0.b32.cont [2/16] %v3684, 128
    %3687 = vxpose.xlu0.b32.cont [3/16] 0.0, 128
    %3688 = vxpose.xlu0.b32.cont [4/16] 0.0, 128
    %3689 = vxpose.xlu0.b32.cont [5/16] 0.0, 128
    %3690 = vxpose.xlu0.b32.cont [6/16] 0.0, 128
    %3691 = vxpose.xlu0.b32.cont [7/16] 0.0, 128
    %3692 = vxpose.xlu0.b32.cont [8/16] 0.0, 128
    %3693 = vxpose.xlu0.b32.cont [9/16] 0.0, 128
    %3694 = vxpose.xlu0.b32.cont [10/16] 0.0, 128
    %3695 = vxpose.xlu0.b32.cont [11/16] 0.0, 128
    %3696 = vxpose.xlu0.b32.cont [12/16] 0.0, 128
    %3697 = vxpose.xlu0.b32.cont [13/16] 0.0, 128
    %3698 = vxpose.xlu0.b32.cont [14/16] 0.0, 128
    %3699 = vxpose.xlu0.b32.cont [15/16] 0.0, 128
    %3700 = vxpose.xlu0.b32.end [16/16] 0.0, 128
    %v3701 = vpop.trf.xlu0
    %v3702 = vpop.trf.xlu0
    %v3703 = vpop.trf.xlu0
    %v3704 = vpop.trf.xlu0
    %v3705 = vpop.trf.xlu0
    %v3706 = vpop.trf.xlu0
    %v3707 = vpop.trf.xlu0
    %v3708 = vpop.trf.xlu0
    %v3709 = vpop.trf.xlu0
    %v3710 = vpop.trf.xlu0
    %v3711 = vpop.trf.xlu0
    %v3712 = vpop.trf.xlu0
    %v3713 = vpop.trf.xlu0
    %v3714 = vpop.trf.xlu0
    %v3715 = vpop.trf.xlu0
    %v3716 = vpop.trf.xlu0
    %v3718 = vsel %vm2788, %v3701, 0
    %v3721 = vsel %vm2788, %v3702, 0
    %v3724 = vsel %vm2788, %v3703, 0
    %v3727 = vsel %vm2788, %v3704, 0
    %v3730 = vsel %vm2788, %v3705, 0
    %v3733 = vsel %vm2788, %v3706, 0
    %v3736 = vsel %vm2788, %v3707, 0
    %v3739 = vsel %vm2788, %v3708, 0
    %v3742 = vsel %vm2788, %v3709, 0
    %v3745 = vsel %vm2788, %v3710, 0
    %v3748 = vsel %vm2788, %v3711, 0
    %v3751 = vsel %vm2788, %v3712, 0
    %v3754 = vsel %vm2788, %v3713, 0
    %v3757 = vsel %vm2788, %v3714, 0
    %v3760 = vsel %vm2788, %v3715, 0
    %v3763 = vsel %vm2788, %v3716, 0
    %3765 = vmatprep.subr.mxu0 0.0
    %3766 = vmatpush1.msra.mxu0 %v3683
    %3767 = vmatprep.subr.mxu0 0.0
    %3768 = vmatpush1.msra.mxu0 %v3684
    %3769 = vmatprep.subr.mxu0 0.0
    %3770 = vmatpush1.msra.mxu0 0.0
    %3771 = vmatprep.subr.mxu0 0.0
    %3772 = vmatpush1.msra.mxu0 0.0
    %3773 = vmatprep.subr.mxu0 0.0
    %3774 = vmatpush1.msra.mxu0 0.0
    %3775 = vmatprep.subr.mxu0 0.0
    %3776 = vmatpush1.msra.mxu0 0.0
    %3777 = vmatprep.subr.mxu0 0.0
    %3778 = vmatpush1.msra.mxu0 0.0
    %3779 = vmatprep.subr.mxu0 0.0
    %3780 = vmatpush1.msra.mxu0 0.0
    %3781 = vmatprep.subr.mxu0 0.0
    %3782 = vmatpush1.msra.mxu0 0.0
    %3783 = vmatprep.subr.mxu0 0.0
    %3784 = vmatpush1.msra.mxu0 0.0
    %3785 = vmatprep.subr.mxu0 0.0
    %3786 = vmatpush1.msra.mxu0 0.0
    %3787 = vmatprep.subr.mxu0 0.0
    %3788 = vmatpush1.msra.mxu0 0.0
    %3789 = vmatprep.subr.mxu0 0.0
    %3790 = vmatpush1.msra.mxu0 0.0
    %3791 = vmatprep.subr.mxu0 0.0
    %3792 = vmatpush1.msra.mxu0 0.0
    %3793 = vmatprep.subr.mxu0 0.0
    %3794 = vmatpush1.msra.mxu0 0.0
    %3795 = vmatprep.subr.mxu0 0.0
    %3796 = vmatpush1.msra.mxu0 0.0
    %3797 = vmatprep.subr.mxu0 0.0
    %3798 = vmatpush1.msra.mxu0 0.0
    %3799 = vmatprep.subr.mxu0 0.0
    %3800 = vmatpush1.msra.mxu0 0.0
    %3801 = vmatprep.subr.mxu0 0.0
    %3802 = vmatpush1.msra.mxu0 0.0
    %3803 = vmatprep.subr.mxu0 0.0
    %3804 = vmatpush1.msra.mxu0 0.0
    %3805 = vmatprep.subr.mxu0 0.0
    %3806 = vmatpush1.msra.mxu0 0.0
    %3807 = vmatprep.subr.mxu0 0.0
    %3808 = vmatpush1.msra.mxu0 0.0
    %3809 = vmatprep.subr.mxu0 0.0
    %3810 = vmatpush1.msra.mxu0 0.0
    %3811 = vmatprep.subr.mxu0 0.0
    %3812 = vmatpush1.msra.mxu0 0.0
    %3813 = vmatprep.subr.mxu0 0.0
    %3814 = vmatpush1.msra.mxu0 0.0
    %3815 = vmatprep.subr.mxu0 0.0
    %3816 = vmatpush1.msra.mxu0 0.0
    %3817 = vmatprep.subr.mxu0 0.0
    %3818 = vmatpush1.msra.mxu0 0.0
    %3819 = vmatprep.subr.mxu0 0.0
    %3820 = vmatpush1.msra.mxu0 0.0
    %3821 = vmatprep.subr.mxu0 0.0
    %3822 = vmatpush1.msra.mxu0 0.0
    %3823 = vmatprep.subr.mxu0 0.0
    %3824 = vmatpush1.msra.mxu0 0.0
    %3825 = vmatprep.subr.mxu0 0.0
    %3826 = vmatpush1.msra.mxu0 0.0
    %3827 = vmatprep.subr.mxu0 0.0
    %3828 = vmatpush1.msra.mxu0 0.0
    %3829 = vmatprep.mubr.f32.mxu0 0.0
    %3830 = vmatmul.mubr.f32.gmra.mrb[0].mxu0 %v3718
    %v3831 = vpop.f32.mrb[0].mxu0
    %v3832 = vadd.f32 0.0, %v3831
    %v3833 = vpop.f32.mrb[0].mxu0
    %3834 = vmatprep.mubr.f32.mxu0 0.0
    %3835 = vmatmul.mubr.f32.gmra.mrb[0].mxu0 %v3721
    %v3836 = vpop.f32.mrb[0].mxu0
    %v3837 = vadd.f32 0.0, %v3836
    %v3838 = vpop.f32.mrb[0].mxu0
    %3839 = vmatprep.mubr.f32.mxu0 0.0
    %3840 = vmatmul.mubr.f32.gmra.mrb[0].mxu0 %v3724
    %v3841 = vpop.f32.mrb[0].mxu0
    %v3842 = vadd.f32 0.0, %v3841
    %v3843 = vpop.f32.mrb[0].mxu0
    %3844 = vmatprep.mubr.f32.mxu0 0.0
    %3845 = vmatmul.mubr.f32.gmra.mrb[0].mxu0 %v3727
    %v3846 = vpop.f32.mrb[0].mxu0
    %v3847 = vadd.f32 0.0, %v3846
    %v3848 = vpop.f32.mrb[0].mxu0
    %3849 = vmatprep.mubr.f32.mxu0 0.0
    %3850 = vmatmul.mubr.f32.gmra.mrb[0].mxu0 %v3730
    %v3851 = vpop.f32.mrb[0].mxu0
    %v3852 = vadd.f32 0.0, %v3851
    %v3853 = vpop.f32.mrb[0].mxu0
    %3854 = vmatprep.mubr.f32.mxu0 0.0
    %3855 = vmatmul.mubr.f32.gmra.mrb[0].mxu0 %v3733
    %v3856 = vpop.f32.mrb[0].mxu0
    %v3857 = vadd.f32 0.0, %v3856
    %v3858 = vpop.f32.mrb[0].mxu0
    %3859 = vmatprep.mubr.f32.mxu0 0.0
    %3860 = vmatmul.mubr.f32.gmra.mrb[0].mxu0 %v3736
    %v3861 = vpop.f32.mrb[0].mxu0
    %v3862 = vadd.f32 0.0, %v3861
    %v3863 = vpop.f32.mrb[0].mxu0
    %3864 = vmatprep.mubr.f32.mxu0 0.0
    %3865 = vmatmul.mubr.f32.gmra.mrb[0].mxu0 %v3739
    %v3866 = vpop.f32.mrb[0].mxu0
    %v3867 = vadd.f32 0.0, %v3866
    %v3868 = vpop.f32.mrb[0].mxu0
    %3869 = vmatprep.mubr.f32.mxu0 0.0
    %3870 = vmatmul.mubr.f32.gmra.mrb[0].mxu0 %v3742
    %v3871 = vpop.f32.mrb[0].mxu0
    %v3872 = vadd.f32 0.0, %v3871
    %v3873 = vpop.f32.mrb[0].mxu0
    %3874 = vmatprep.mubr.f32.mxu0 0.0
    %3875 = vmatmul.mubr.f32.gmra.mrb[0].mxu0 %v3745
    %v3876 = vpop.f32.mrb[0].mxu0
    %v3877 = vadd.f32 0.0, %v3876
    %v3878 = vpop.f32.mrb[0].mxu0
    %3879 = vmatprep.mubr.f32.mxu0 0.0
    %3880 = vmatmul.mubr.f32.gmra.mrb[0].mxu0 %v3748
    %v3881 = vpop.f32.mrb[0].mxu0
    %v3882 = vadd.f32 0.0, %v3881
    %v3883 = vpop.f32.mrb[0].mxu0
    %3884 = vmatprep.mubr.f32.mxu0 0.0
    %3885 = vmatmul.mubr.f32.gmra.mrb[0].mxu0 %v3751
    %v3886 = vpop.f32.mrb[0].mxu0
    %v3887 = vadd.f32 0.0, %v3886
    %v3888 = vpop.f32.mrb[0].mxu0
    %3889 = vmatprep.mubr.f32.mxu0 0.0
    %3890 = vmatmul.mubr.f32.gmra.mrb[0].mxu0 %v3754
    %v3891 = vpop.f32.mrb[0].mxu0
    %v3892 = vadd.f32 0.0, %v3891
    %v3893 = vpop.f32.mrb[0].mxu0
    %3894 = vmatprep.mubr.f32.mxu0 0.0
    %3895 = vmatmul.mubr.f32.gmra.mrb[0].mxu0 %v3757
    %v3896 = vpop.f32.mrb[0].mxu0
    %v3897 = vadd.f32 0.0, %v3896
    %v3898 = vpop.f32.mrb[0].mxu0
    %3899 = vmatprep.mubr.f32.mxu0 0.0
    %3900 = vmatmul.mubr.f32.gmra.mrb[0].mxu0 %v3760
    %v3901 = vpop.f32.mrb[0].mxu0
    %v3902 = vadd.f32 0.0, %v3901
    %v3903 = vpop.f32.mrb[0].mxu0
    %3904 = vmatprep.mubr.f32.mxu0 0.0
    %3905 = vmatmul.mubr.f32.gmra.mrb[0].mxu0 %v3763
    %v3906 = vpop.f32.mrb[0].mxu0
    %v3907 = vadd.f32 0.0, %v3906
    %v3908 = vpop.f32.mrb[0].mxu0
    %3909 = vdwg.mxu0
    %s3910 = scalar_lea.vmem %s13, 128
    %3911 = vst [vmem:[%s3910] sm:$0xff] %v3503
    %3912 = vst [vmem:[%s3910 + $0x8] sm:$0xff] %v3508
    %3913 = vst [vmem:[%s3910 + $0x10] sm:$0xff] %v3513
    %3914 = vst [vmem:[%s3910 + $0x18] sm:$0xff] %v3518
    %3915 = vst [vmem:[%s3910 + $0x20] sm:$0xff] %v3523
    %3916 = vst [vmem:[%s3910 + $0x28] sm:$0xff] %v3528
    %3917 = vst [vmem:[%s3910 + $0x30] sm:$0xff] %v3533
    %3918 = vst [vmem:[%s3910 + $0x38] sm:$0xff] %v3538
    %3919 = vst [vmem:[%s3910 + $0x40] sm:$0xff] %v3543
    %3920 = vst [vmem:[%s3910 + $0x48] sm:$0xff] %v3548
    %3921 = vst [vmem:[%s3910 + $0x50] sm:$0xff] %v3553
    %3922 = vst [vmem:[%s3910 + $0x58] sm:$0xff] %v3558
    %3923 = vst [vmem:[%s3910 + $0x60] sm:$0xff] %v3563
    %3924 = vst [vmem:[%s3910 + $0x68] sm:$0xff] %v3568
    %3925 = vst [vmem:[%s3910 + $0x70] sm:$0xff] %v3573
    %3926 = vst [vmem:[%s3910 + $0x78] sm:$0xff] %v3578
    %s3927 = scalar_lea.vmem [#allocation14], 128
    %3928 = vst [vmem:[%s3927] sm:$0xff] %v3832
    %3929 = vst [vmem:[%s3927 + $0x8] sm:$0xff] %v3837
    %3930 = vst [vmem:[%s3927 + $0x10] sm:$0xff] %v3842
    %3931 = vst [vmem:[%s3927 + $0x18] sm:$0xff] %v3847
    %3932 = vst [vmem:[%s3927 + $0x20] sm:$0xff] %v3852
    %3933 = vst [vmem:[%s3927 + $0x28] sm:$0xff] %v3857
    %3934 = vst [vmem:[%s3927 + $0x30] sm:$0xff] %v3862
    %3935 = vst [vmem:[%s3927 + $0x38] sm:$0xff] %v3867
    %3936 = vst [vmem:[%s3927 + $0x40] sm:$0xff] %v3872
    %3937 = vst [vmem:[%s3927 + $0x48] sm:$0xff] %v3877
    %3938 = vst [vmem:[%s3927 + $0x50] sm:$0xff] %v3882
    %3939 = vst [vmem:[%s3927 + $0x58] sm:$0xff] %v3887
    %3940 = vst [vmem:[%s3927 + $0x60] sm:$0xff] %v3892
    %3941 = vst [vmem:[%s3927 + $0x68] sm:$0xff] %v3897
    %3942 = vst [vmem:[%s3927 + $0x70] sm:$0xff] %v3902
    %3943 = vst [vmem:[%s3927 + $0x78] sm:$0xff] %v3907
    // Predicated region
    $region62: #{net_forward.2} parent=1 // pred_check
      _
    $region63: #{net_forward.2} parent=1 // pred_check_branch
      %3945 = sbr.rel (0) target = $region65
    $region64: #{net_forward.2} parent=1 // pred_region
      %s3947 = ssub.s32 512, 512
      %3948 = vsyncadd [#allocation5], %s3947
      %s3949 = sshll.u32 [#allocation11], 4
      %s3950 = int_to_ptr.vmem [resolvable:$true] %s3949
      %3955 = dma.vmem_to_hbm [thread:$0]  %s3950, 512, %s11, [#allocation5], 128, 128, 8
    $region65: #{net_forward.2} parent=1 // pred_fallthru
      _
    // Predicated region
    $region66: #{net_forward.2} parent=1 // pred_check
      _
    $region67: #{net_forward.2} parent=1 // pred_check_branch
      %3957 = sbr.rel (0) target = $region69
    $region68: #{net_forward.2} parent=1 // pred_region
      %s3959 = ssub.s32 32, 32
      %3960 = vsyncadd [#allocation13], %s3959
      %s3962 = sshll.u32 [#allocation12], 4
      %s3963 = int_to_ptr.vmem [resolvable:$true] %s3962
      %3965 = dma.vmem_to_hbm [thread:$0]  %s3963, 32, %s12, [#allocation13]
    $region69: #{net_forward.2} parent=1 // pred_fallthru
      _
    // Predicated region
    $region70: #{net_forward.2} parent=1 // pred_check
      _
    $region71: #{net_forward.2} parent=1 // pred_check_branch
      %3967 = sbr.rel (0) target = $region73
    $region72: #{net_forward.2} parent=1 // pred_region
      _
    $region73: #{net_forward.2} parent=1 // pred_fallthru
      _
    // Predicated region
    $region74: #{net_forward.2} parent=1 // pred_check
      _
    $region75: #{net_forward.2} parent=1 // pred_check_branch
      %3969 = sbr.rel (0) target = $region77
    $region76: #{net_forward.2} parent=1 // pred_region
      %s3971 = ssub.s32 4096, 4096
      %3972 = vsyncadd [#allocation13], %s3971
      %s3973 = sshll.u32 [#allocation14], 4
      %s3974 = int_to_ptr.vmem [resolvable:$true] %s3973
      %3979 = dma.vmem_to_hbm [thread:$0]  %s3974, 4096, %s14, [#allocation13], 128, 128, 8
    $region77: #{net_forward.2} parent=1 // pred_fallthru
      _
    // Predicated region
    $region78: #{net_forward.2} parent=1 // pred_check
      _
    $region79: #{net_forward.2} parent=1 // pred_check_branch
      %3981 = sbr.rel (0) target = $region81
    $region80: #{net_forward.2} parent=1 // pred_region
      %3982 = dma.done [#allocation5], 512
    $region81: #{net_forward.2} parent=1 // pred_fallthru
      _
    // Predicated region
    $region82: #{net_forward.2} parent=1 // pred_check
      _
    $region83: #{net_forward.2} parent=1 // pred_check_branch
      %3984 = sbr.rel (0) target = $region85
    $region84: #{net_forward.2} parent=1 // pred_region
      %3985 = dma.done [#allocation13], 32
    $region85: #{net_forward.2} parent=1 // pred_fallthru
      _
    // Predicated region
    $region86: #{net_forward.2} parent=1 // pred_check
      _
    $region87: #{net_forward.2} parent=1 // pred_check_branch
      %3987 = sbr.rel (0) target = $region89
    $region88: #{net_forward.2} parent=1 // pred_region
      _
    $region89: #{net_forward.2} parent=1 // pred_fallthru
      _
    // Predicated region
    $region90: #{net_forward.2} parent=1 // pred_check
      _
    $region91: #{net_forward.2} parent=1 // pred_check_branch
      %3989 = sbr.rel (0) target = $region93
    $region92: #{net_forward.2} parent=1 // pred_region
      %3990 = dma.done [#allocation13], 4096
    $region93: #{net_forward.2} parent=1 // pred_fallthru
      _
    %3991 = vsyncpa [#allocation4], 1
    %3992 = vsyncpa [#allocation7], 1
    %3993 = vsyncpa [#allocation10], 1
    %3994 = vsyncpa [#allocation5], 1
    %3995 = vsyncpa [#allocation13], 1

</llo_original>
